<compile_context>
chip_gen: v7x
topology: tpu7x:2x2x1
jax: 0.10.0
libtpu: 0.0.40
codegen_flags: <defaults>
</compile_context>

<pallas_src>
import functools

import jax
import jax.numpy as jnp
import numpy as np
from jax.experimental import pallas as pl
from jax.experimental.pallas import tpu as pltpu

# ---------------- small synthetic configuration ----------------
IN_HIDDEN = 16        # in_hidden_channels (divisible by 8)
MID = 32              # mid_hidden_channels
OUT_HIDDEN = 32       # out_hidden_channels
OUT_PAD = 128         # lane-dense padded output width
EMB = 8               # embedding_size
LAT = 4               # sphere_size_lat
LONG = 8              # sphere_size_long
MAX_ELEM = 10         # max_num_elements
NUM_BASIS = 8         # num_embedding_basis (hardcoded in MessageBlock)
GROUPS = IN_HIDDEN // 8
N_EDGE = 32           # number of edges (len(x))
M_SPLAT = 128         # number of projection splat points
EPS = 1e-5


def _silu(v):
    return v * jax.nn.sigmoid(v)


def _round_up(a, b):
    return -(-a // b) * b


# ---------------- packed-bias layout (static, lane-aligned slots) ----------------
_BIAS_SEGS = [
    ('conv_b', MID * LONG),
    ('gn_gamma', MID),
    ('gn_beta', MID),
    ('e1_eb', NUM_BASIS),
    ('e1_b1', MID),
    ('e1_b2', NUM_BASIS * MID),
    ('e1_b3', MID),
    ('d_b1', MID),
    ('d_b2', MID),
    ('e2_eb', NUM_BASIS),
    ('e2_b1', MID),
    ('e2_b2', NUM_BASIS * MID),
    ('e2_b3', OUT_PAD),
]


def _build_bias_layout():
    layout, off = {}, 0
    for name, width in _BIAS_SEGS:
        layout[name] = (off, width)
        off += _round_up(width, 128)        # 128-lane aligned slots -> aligned static slices
    return layout, off


_BIAS_LAYOUT, _BIAS_TOTAL = _build_bias_layout()


# ---------------- fused Pallas kernel ----------------

def _message_block_kernel(x_ll_ref, emb1_ref, emb2_ref, xd_ref,
                          conv_w_ref, pool_ref, gn_m_ref, bexp_ref, bred_ref,
                          e1_ew_ref, e1_w1_ref, e1_w2_ref, e1_w3_ref,
                          d_w1_ref, d_w2_ref,
                          e2_ew_ref, e2_w1_ref, e2_w2_ref, e2_w3_ref,
                          bias_ref, o_ref, *, approx_recip):

    def bias(name):
        off, w = _BIAS_LAYOUT[name]
        return bias_ref[:, off:off + w]                 # static slice of the packed bias ref

    def mm(a, w_ref):
        w = w_ref[...]
        # Operands cast to the weight dtype (bf16 on the fast path); f32 accumulation.
        return jnp.dot(a.astype(w.dtype), w, preferred_element_type=jnp.float32)

    # ---- SpinConvBlock: merged circular grouped conv (one matmul) + SiLU + AvgPool + GroupNorm ----
    conv = _silu(mm(x_ll_ref[...], conv_w_ref) + bias('conv_b'))   # (T, MID*LONG), lane-dense
    pooled = mm(conv, pool_ref)                                    # AvgPool over LONG via MXU -> (T, MID)
    mean = mm(pooled, gn_m_ref)                                    # per-group mean broadcast (f32)
    diff = pooled - mean
    var = mm(diff * diff, gn_m_ref)                                # two-pass variance (stable)
    h = diff * jax.lax.rsqrt(var + EPS)
    h = h * bias('gn_gamma') + bias('gn_beta')

    # ---- EmbeddingBlock (shared structure for block 1 and 2) ----
    def emb_block(hin, emb, ew_ref, w1_ref, w2_ref, w3_ref, eb, b1, b2, b3):
        logits = mm(emb, ew_ref) + eb
        logits = logits - jnp.max(logits, axis=1, keepdims=True)
        e = jnp.exp(logits)
        denom = jnp.sum(e, axis=1, keepdims=True)
        if approx_recip:
            e = e * pl.reciprocal(denom, approx=True)   # EUP slot, ~free
        else:
            e = e / denom                               # exact divide on the strict f32 path
        hh = _silu(mm(hin, w1_ref) + b1)
        hh = _silu(mm(hh, w2_ref) + b2)                 # (T, NUM_BASIS*MID)
        e_wide = mm(e, bexp_ref)                        # basis weights expanded to NB*MID lanes
        acc = mm(hh * e_wide, bred_ref)                 # basis-weighted sum via MXU -> (T, MID)
        return mm(acc, w3_ref) + b3

    h = emb_block(h, emb1_ref[...], e1_ew_ref, e1_w1_ref, e1_w2_ref, e1_w3_ref,
                  bias('e1_eb'), bias('e1_b1'), bias('e1_b2'), bias('e1_b3'))

    # ---- dist MLP + residual + activation ----
    d = _silu(mm(xd_ref[...], d_w1_ref) + bias('d_b1'))
    d = mm(d, d_w2_ref) + bias('d_b2')
    h = _silu(h + d)

    # ---- EmbeddingBlock 2 -> lane-dense (T, 128) output (extra columns are zero) ----
    o_ref[...] = emb_block(h, emb2_ref[...], e2_ew_ref, e2_w1_ref, e2_w2_ref, e2_w3_ref,
                           bias('e2_eb'), bias('e2_b1'), bias('e2_b2'), bias('e2_b3'))


# ---------------- projection (plain JAX scatter, restructured) ----------------

def project_lat_long_sphere_flat(x, length, proj_index, proj_delta, proj_src_index):
    """Single scatter-add, directly in the (n, LAT*LONG*hidden) layout the kernel consumes.

    The hidden/position transpose of the reference implementation is folded into the conv
    weight's row permutation in prepare_params, so no materialized transpose is needed here.
    """
    # TODO(synk): index_add_ scatter has no clean Pallas TPU equivalent; kept in plain JAX.
    #             (Could move in-kernel via scalar-prefetched indices + DMA gather later.)
    hidden = x.shape[1]
    splat = x[proj_src_index]                                          # one gather (M, hidden)
    splat_all = (splat[None, :, :] * proj_delta[:, :, None]).reshape(-1, hidden)
    x_proj = jnp.zeros((length * LAT * LONG, hidden), jnp.float32)
    x_proj = x_proj.at[proj_index.reshape(-1)].add(splat_all)          # one scatter
    return x_proj.reshape(length, LAT * LONG * hidden)


def project_lat_long_sphere_ref(x, length, index, delta, src_index):
    """Original-layout projection (4 scatters + transpose) used only by the pure-JAX reference."""
    hidden = x.shape[1]
    splat = x[src_index]
    x_proj = jnp.zeros((length * LAT * LONG, hidden), jnp.float32)
    for k in range(4):
        x_proj = x_proj.at[index[k]].add(splat * delta[k][:, None])
    x_proj = x_proj.reshape(length, LAT * LONG, hidden)
    x_proj = jnp.transpose(x_proj, (0, 2, 1)).reshape(length, hidden, LAT, LONG)
    return x_proj


# ---------------- one-time weight preprocessing ----------------

def prepare_params(params, matmul_dtype=jnp.bfloat16):
    """Hoisted weight preprocessing: rolled+merged conv weight, pooling/group/basis matrices,
    output-lane padding, packed bias vector, bf16 casts."""
    sp = params['spinconv']
    c_in = IN_HIDDEN * LAT
    in_pg, out_pg = c_in // GROUPS, MID // GROUPS
    pad = LONG // 2
    t = np.arange(LONG)[:, None]          # input long position
    j = np.arange(LONG)[None, :]          # output long position
    kidx = (t - j + pad) % LONG           # (t, j) -> conv tap k

    # Merged (block-diagonal) rolled conv weight, rows permuted to the scatter layout (lat, t, h).
    w = np.asarray(sp['conv_w'])                                        # (MID, in_pg, LONG)
    w_full = np.zeros((IN_HIDDEN, LAT, LONG, MID, LONG), np.float32)    # [h, lat, t, o, j]
    for o in range(MID):
        g = o // out_pg
        for i in range(in_pg):
            c = g * in_pg + i                                           # conv channel = h*LAT + lat
            h_idx, lat_idx = divmod(c, LAT)
            w_full[h_idx, lat_idx, :, o, :] = w[o, i, kidx]
    conv_w = jnp.asarray(
        w_full.transpose(1, 2, 0, 3, 4).reshape(LAT * LONG * IN_HIDDEN, MID * LONG))
    conv_w = conv_w.astype(matmul_dtype)

    eye_mid = jnp.eye(MID, dtype=jnp.float32)
    cg = MID // GROUPS
    # AvgPool over LONG positions and per-group mean broadcast: kept f32 (tiny, stats stability).
    pool_mat = jnp.kron(eye_mid, jnp.ones((LONG, 1), jnp.float32)) / LONG             # (MID*LONG, MID)
    gn_m = jnp.kron(jnp.eye(GROUPS, dtype=jnp.float32),
                    jnp.ones((cg, cg), jnp.float32)) / cg                              # (MID, MID)
    basis_expand = jnp.kron(jnp.eye(NUM_BASIS, dtype=jnp.float32),
                            jnp.ones((1, MID), jnp.float32)).astype(matmul_dtype)      # (NB, NB*MID)
    basis_reduce = jnp.kron(jnp.ones((NUM_BASIS, 1), jnp.float32),
                            eye_mid).astype(matmul_dtype)                              # (NB*MID, MID)

    e1, e2, dist = params['emb1'], params['emb2'], params['dist']

    # Lane-dense output: pad emb2.fc3 to 128 output columns with zeros.
    e2_fc3_w = jnp.pad(e2['fc3_w'], ((0, 0), (0, OUT_PAD - OUT_HIDDEN)))
    e2_fc3_b = jnp.pad(e2['fc3_b'], (0, OUT_PAD - OUT_HIDDEN))

    def cast(a):
        return a.astype(matmul_dtype)

    weights = (
        conv_w, pool_mat, gn_m, basis_expand, basis_reduce,
        cast(e1['embfc1_w']), cast(e1['fc1_w']), cast(e1['fc2_w']), cast(e1['fc3_w']),
        cast(dist['distfc1_w']), cast(dist['distfc2_w']),
        cast(e2['embfc1_w']), cast(e2['fc1_w']), cast(e2['fc2_w']), cast(e2_fc3_w),
    )

    # Packed bias / gamma / beta vector (f32, lane-aligned slots).
    bias_vals = {
        'conv_b': jnp.repeat(sp['conv_b'], LONG),
        'gn_gamma': sp['gn_gamma'],
        'gn_beta': sp['gn_beta'],
        'e1_eb': e1['embfc1_b'], 'e1_b1': e1['fc1_b'], 'e1_b2': e1['fc2_b'], 'e1_b3': e1['fc3_b'],
        'd_b1': dist['distfc1_b'], 'd_b2': dist['distfc2_b'],
        'e2_eb': e2['embfc1_b'], 'e2_b1': e2['fc1_b'], 'e2_b2': e2['fc2_b'], 'e2_b3': e2_fc3_b,
    }
    bias_pack = jnp.zeros((1, _BIAS_TOTAL), jnp.float32)
    for name, (off, width) in _BIAS_LAYOUT.items():
        bias_pack = bias_pack.at[0, off:off + width].set(bias_vals[name].astype(jnp.float32))

    kernel_weights = weights + (bias_pack,)
    return dict(
        kernel_weights=kernel_weights,
        e1_src=e1['src_table'], e1_tgt=e1['tgt_table'],
        e2_src=e2['src_table'], e2_tgt=e2['tgt_table'],
    )


# ---------------- forward ----------------

@functools.partial(jax.jit, static_argnames=('edge_tile',))
def message_block_forward(x, x_dist, source_element, target_element,
                          proj_index, proj_delta, proj_src_index,
                          prepared, edge_tile=512):
    """Fused MessageBlock forward. `edge_tile` must be a multiple of 16 (bf16 sublane packing)."""
    n = x.shape[0]
    weights = prepared['kernel_weights']
    matmul_dtype = weights[0].dtype
    approx_recip = (matmul_dtype == jnp.bfloat16)   # exact divide on the strict f32 path

    # Projection splat (single scatter, no transpose); everything downstream is one Pallas kernel.
    x_ll = project_lat_long_sphere_flat(x, n, proj_index, proj_delta,
                                        proj_src_index).astype(matmul_dtype)

    emb1 = jnp.concatenate([prepared['e1_src'][source_element],
                            prepared['e1_tgt'][target_element]], axis=1)
    emb2 = jnp.concatenate([prepared['e2_src'][source_element],
                            prepared['e2_tgt'][target_element]], axis=1)

    # Edge tiling: cap the tile at ceil(n/2) so there are >= 2 grid steps whenever n > 16,
    # letting the "parallel" axis split across the two v7x TensorCores.
    tile = min(edge_tile, _round_up(max(-(-n // 2), 16), 16))
    n_pad = _round_up(n, tile)

    def pad(a):
        return a if n_pad == n else jnp.pad(a, ((0, n_pad - n), (0, 0)))

    edge_inputs = tuple(pad(a) for a in (x_ll, emb1, emb2, x_dist))
    grid = (n_pad // tile,)

    in_specs = ([pl.BlockSpec((tile, a.shape[1]), lambda i: (i, 0)) for a in edge_inputs]
                + [pl.BlockSpec(w.shape, lambda i: (0, 0)) for w in weights])
    out_spec = pl.BlockSpec((tile, OUT_PAD), lambda i: (i, 0))

    kernel = functools.partial(_message_block_kernel, approx_recip=approx_recip)
    out = pl.pallas_call(
        kernel,
        out_shape=jax.ShapeDtypeStruct((n_pad, OUT_PAD), jnp.float32),
        grid=grid,
        in_specs=in_specs,
        out_specs=out_spec,
        compiler_params=pltpu.CompilerParams(
            dimension_semantics=("parallel",),        # edge tiles are independent (v7x megacore)
            vmem_limit_bytes=32 * 1024 * 1024),
    )(*edge_inputs, *weights)
    return out[:n, :OUT_HIDDEN]


# ---------------- deterministic params ----------------

def init_params(key):
    keys = iter(jax.random.split(key, 32))

    def dense(shape, scale=0.1):
        return scale * jax.random.normal(next(keys), shape, jnp.float32)

    spin = dict(
        conv_w=dense((MID, (IN_HIDDEN * LAT) // GROUPS, LONG)),
        conv_b=dense((MID,)),
        gn_gamma=1.0 + dense((MID,), 0.05),
        gn_beta=dense((MID,), 0.05),
    )

    def emb_block_params(out_c):
        return dict(
            src_table=dense((MAX_ELEM, EMB)),
            tgt_table=dense((MAX_ELEM, EMB)),
            embfc1_w=dense((2 * EMB, NUM_BASIS)),
            embfc1_b=dense((NUM_BASIS,)),
            fc1_w=dense((MID, MID)),
            fc1_b=dense((MID,)),
            fc2_w=dense((MID, NUM_BASIS * MID)),
            fc2_b=dense((NUM_BASIS * MID,)),
            fc3_w=dense((MID, out_c)),
            fc3_b=dense((out_c,)),
        )

    emb1 = emb_block_params(MID)
    emb2 = emb_block_params(OUT_HIDDEN)
    dist = dict(
        distfc1_w=dense((MID, MID)), distfc1_b=dense((MID,)),
        distfc2_w=dense((MID, MID)), distfc2_b=dense((MID,)),
    )
    return dict(spinconv=spin, emb1=emb1, emb2=emb2, dist=dist)


# ---------------- pure-JAX reference (independent check, f32) ----------------

def reference_forward(x, x_dist, source_element, target_element,
                      proj_index, proj_delta, proj_src_index, params):
    n = x.shape[0]
    x_proj = project_lat_long_sphere_ref(x, n, proj_index, proj_delta, proj_src_index)
    sp = params['spinconv']
    xc = x_proj.reshape(n, IN_HIDDEN * LAT, LONG)
    pad = LONG // 2
    xpad = jnp.concatenate([xc[:, :, -pad:], xc, xc[:, :, :pad]], axis=2)
    conv = jax.lax.conv_general_dilated(
        xpad, sp['conv_w'], window_strides=(1,), padding='VALID',
        dimension_numbers=('NCH', 'OIH', 'NCH'), feature_group_count=GROUPS)
    conv = conv + sp['conv_b'][None, :, None]
    conv = _silu(conv)
    pooled = jnp.mean(conv[:, :, :LONG], axis=2)
    hg = pooled.reshape(n, GROUPS, MID // GROUPS)
    m = jnp.mean(hg, axis=-1, keepdims=True)
    v = jnp.mean((hg - m) ** 2, axis=-1, keepdims=True)
    h = ((hg - m) / jnp.sqrt(v + EPS)).reshape(n, MID)
    h = h * sp['gn_gamma'] + sp['gn_beta']

    def emb_block(xin, p):
        e = jnp.concatenate([p['src_table'][source_element],
                             p['tgt_table'][target_element]], axis=1)
        e = jax.nn.softmax(e @ p['embfc1_w'] + p['embfc1_b'], axis=1)
        hh = _silu(xin @ p['fc1_w'] + p['fc1_b'])
        hh = _silu(hh @ p['fc2_w'] + p['fc2_b'])
        hh = (hh.reshape(-1, NUM_BASIS, MID) * e[:, :, None]).sum(axis=1)
        return hh @ p['fc3_w'] + p['fc3_b']

    h = emb_block(h, params['emb1'])
    d = _silu(x_dist @ params['dist']['distfc1_w'] + params['dist']['distfc1_b'])
    d = d @ params['dist']['distfc2_w'] + params['dist']['distfc2_b']
    h = _silu(h + d)
    return emb_block(h, params['emb2'])


# ---------------- main ----------------

if __name__ == "__main__":
    key = jax.random.PRNGKey(0)
    k_param, kx, kd, ks, kt, kpi, kpd, kps = jax.random.split(key, 8)
    params = init_params(k_param)

    x = jax.random.normal(kx, (N_EDGE, IN_HIDDEN), jnp.float32)
    x_dist = jax.random.normal(kd, (N_EDGE, MID), jnp.float32)
    source_element = jax.random.randint(ks, (N_EDGE,), 0, MAX_ELEM)
    target_element = jax.random.randint(kt, (N_EDGE,), 0, MAX_ELEM)
    proj_index = jax.random.randint(kpi, (4, M_SPLAT), 0, N_EDGE * LAT * LONG)
    proj_delta = jax.random.uniform(kpd, (4, M_SPLAT), jnp.float32)
    proj_src_index = jax.random.randint(kps, (M_SPLAT,), 0, N_EDGE)

    ref = reference_forward(x, x_dist, source_element, target_element,
                            proj_index, proj_delta, proj_src_index, params)

    # Strict check: f32 matmul operands, exact softmax divide; 2-step edge grid (tile=16 for n=32).
    prepared_f32 = prepare_params(params, jnp.float32)
    out_f32 = jax.block_until_ready(
        message_block_forward(x, x_dist, source_element, target_element,
                              proj_index, proj_delta, proj_src_index, prepared_f32))
    np.testing.assert_allclose(np.asarray(out_f32), np.asarray(ref), rtol=1e-3, atol=1e-4)

    # Fast path: bf16 matmul operands everywhere (f32 accumulation) + approx EUP reciprocal.
    prepared_bf16 = prepare_params(params, jnp.bfloat16)
    out_bf16 = jax.block_until_ready(
        message_block_forward(x, x_dist, source_element, target_element,
                              proj_index, proj_delta, proj_src_index, prepared_bf16))
    np.testing.assert_allclose(np.asarray(out_bf16), np.asarray(ref), rtol=1e-1, atol=2e-2)

    print("KERNEL_OK")
</pallas_src>

<mosaic_0001>
module attributes {stable_mosaic.version = 11 : i64} {
  func.func @_message_block_kernel(%arg0: i32, %arg1: memref<16x512xf32, #tpu.memory_space<vmem>>, %arg2: memref<16x16xf32, #tpu.memory_space<vmem>>, %arg3: memref<16x16xf32, #tpu.memory_space<vmem>>, %arg4: memref<16x32xf32, #tpu.memory_space<vmem>>, %arg5: memref<512x256xf32, #tpu.memory_space<vmem>>, %arg6: memref<256x32xf32, #tpu.memory_space<vmem>>, %arg7: memref<32x32xf32, #tpu.memory_space<vmem>>, %arg8: memref<8x256xf32, #tpu.memory_space<vmem>>, %arg9: memref<256x32xf32, #tpu.memory_space<vmem>>, %arg10: memref<16x8xf32, #tpu.memory_space<vmem>>, %arg11: memref<32x32xf32, #tpu.memory_space<vmem>>, %arg12: memref<32x256xf32, #tpu.memory_space<vmem>>, %arg13: memref<32x32xf32, #tpu.memory_space<vmem>>, %arg14: memref<32x32xf32, #tpu.memory_space<vmem>>, %arg15: memref<32x32xf32, #tpu.memory_space<vmem>>, %arg16: memref<16x8xf32, #tpu.memory_space<vmem>>, %arg17: memref<32x32xf32, #tpu.memory_space<vmem>>, %arg18: memref<32x256xf32, #tpu.memory_space<vmem>>, %arg19: memref<32x128xf32, #tpu.memory_space<vmem>>, %arg20: memref<1x2048xf32, #tpu.memory_space<vmem>>, %arg21: memref<16x128xf32, #tpu.memory_space<vmem>>) attributes {dimension_semantics = [#tpu.dimension_semantics<parallel>], iteration_bounds = array<i64: 2>, scalar_prefetch = 0 : i64, scratch_operands = 0 : i64, tpu.core_type = #tpu.core_type<tc>, window_params = [{transform_indices = @transform_0, window_bounds = array<i64: 16, 512>}, {transform_indices = @transform_1, window_bounds = array<i64: 16, 16>}, {transform_indices = @transform_2, window_bounds = array<i64: 16, 16>}, {transform_indices = @transform_3, window_bounds = array<i64: 16, 32>}, {pipeline_mode = #tpu.pipeline_mode<synchronous>, transform_indices = @transform_4, window_bounds = array<i64: 512, 256>}, {pipeline_mode = #tpu.pipeline_mode<synchronous>, transform_indices = @transform_5, window_bounds = array<i64: 256, 32>}, {pipeline_mode = #tpu.pipeline_mode<synchronous>, transform_indices = @transform_6, window_bounds = array<i64: 32, 32>}, {pipeline_mode = #tpu.pipeline_mode<synchronous>, transform_indices = @transform_7, window_bounds = array<i64: 8, 256>}, {pipeline_mode = #tpu.pipeline_mode<synchronous>, transform_indices = @transform_8, window_bounds = array<i64: 256, 32>}, {pipeline_mode = #tpu.pipeline_mode<synchronous>, transform_indices = @transform_9, window_bounds = array<i64: 16, 8>}, {pipeline_mode = #tpu.pipeline_mode<synchronous>, transform_indices = @transform_10, window_bounds = array<i64: 32, 32>}, {pipeline_mode = #tpu.pipeline_mode<synchronous>, transform_indices = @transform_11, window_bounds = array<i64: 32, 256>}, {pipeline_mode = #tpu.pipeline_mode<synchronous>, transform_indices = @transform_12, window_bounds = array<i64: 32, 32>}, {pipeline_mode = #tpu.pipeline_mode<synchronous>, transform_indices = @transform_13, window_bounds = array<i64: 32, 32>}, {pipeline_mode = #tpu.pipeline_mode<synchronous>, transform_indices = @transform_14, window_bounds = array<i64: 32, 32>}, {pipeline_mode = #tpu.pipeline_mode<synchronous>, transform_indices = @transform_15, window_bounds = array<i64: 16, 8>}, {pipeline_mode = #tpu.pipeline_mode<synchronous>, transform_indices = @transform_16, window_bounds = array<i64: 32, 32>}, {pipeline_mode = #tpu.pipeline_mode<synchronous>, transform_indices = @transform_17, window_bounds = array<i64: 32, 256>}, {pipeline_mode = #tpu.pipeline_mode<synchronous>, transform_indices = @transform_18, window_bounds = array<i64: 32, 128>}, {pipeline_mode = #tpu.pipeline_mode<synchronous>, transform_indices = @transform_19, window_bounds = array<i64: 1, 2048>}, {transform_indices = @transform_20, window_bounds = array<i64: 16, 128>}]} {
    %c0 = arith.constant 0 : index
    %c0_0 = arith.constant 0 : index
    %0 = vector.load %arg1[%c0, %c0_0] : memref<16x512xf32, #tpu.memory_space<vmem>>, vector<16x512xf32>
    %c0_1 = arith.constant 0 : index
    %c0_2 = arith.constant 0 : index
    %1 = vector.load %arg5[%c0_1, %c0_2] : memref<512x256xf32, #tpu.memory_space<vmem>>, vector<512x256xf32>
    %cst = arith.constant dense<0.000000e+00> : vector<16x256xf32>
    %2 = tpu.matmul %0, %1, %cst {dimension_numbers = #tpu.dot_dimension_numbers<[1], [0], [0], [1], [0, 0, 1, 1], [], []>} : vector<16x512xf32>, vector<512x256xf32>, vector<16x256xf32> -> vector<16x256xf32>
    %c0_3 = arith.constant 0 : index
    %c0_4 = arith.constant 0 : index
    %3 = vector.load %arg20[%c0_3, %c0_4] : memref<1x2048xf32, #tpu.memory_space<vmem>>, vector<1x256xf32>
    %4 = vector.broadcast %3 : vector<1x256xf32> to vector<16x256xf32>
    %5 = arith.addf %2, %4 : vector<16x256xf32>
    %6 = arith.negf %5 : vector<16x256xf32>
    %7 = math.exp %6 : vector<16x256xf32>
    %cst_5 = arith.constant 1.000000e+00 : f32
    %8 = vector.broadcast %cst_5 : f32 to vector<16x256xf32>
    %9 = arith.addf %8, %7 : vector<16x256xf32>
    %10 = arith.divf %8, %9 : vector<16x256xf32>
    %11 = arith.mulf %5, %10 : vector<16x256xf32>
    %c0_6 = arith.constant 0 : index
    %c0_7 = arith.constant 0 : index
    %12 = vector.load %arg6[%c0_6, %c0_7] : memref<256x32xf32, #tpu.memory_space<vmem>>, vector<256x32xf32>
    %cst_8 = arith.constant dense<0.000000e+00> : vector<16x32xf32>
    %13 = tpu.matmul %11, %12, %cst_8 {dimension_numbers = #tpu.dot_dimension_numbers<[1], [0], [0], [1], [0, 0, 1, 1], [], []>} : vector<16x256xf32>, vector<256x32xf32>, vector<16x32xf32> -> vector<16x32xf32>
    %c0_9 = arith.constant 0 : index
    %c0_10 = arith.constant 0 : index
    %14 = vector.load %arg7[%c0_9, %c0_10] : memref<32x32xf32, #tpu.memory_space<vmem>>, vector<32x32xf32>
    %cst_11 = arith.constant dense<0.000000e+00> : vector<16x32xf32>
    %15 = tpu.matmul %13, %14, %cst_11 {dimension_numbers = #tpu.dot_dimension_numbers<[1], [0], [0], [1], [0, 0, 1, 1], [], []>} : vector<16x32xf32>, vector<32x32xf32>, vector<16x32xf32> -> vector<16x32xf32>
    %16 = arith.subf %13, %15 : vector<16x32xf32>
    %17 = arith.mulf %16, %16 : vector<16x32xf32>
    %c0_12 = arith.constant 0 : index
    %c0_13 = arith.constant 0 : index
    %18 = vector.load %arg7[%c0_12, %c0_13] : memref<32x32xf32, #tpu.memory_space<vmem>>, vector<32x32xf32>
    %cst_14 = arith.constant dense<0.000000e+00> : vector<16x32xf32>
    %19 = tpu.matmul %17, %18, %cst_14 {dimension_numbers = #tpu.dot_dimension_numbers<[1], [0], [0], [1], [0, 0, 1, 1], [], []>} : vector<16x32xf32>, vector<32x32xf32>, vector<16x32xf32> -> vector<16x32xf32>
    %cst_15 = arith.constant 9.99999974E-6 : f32
    %20 = vector.broadcast %cst_15 : f32 to vector<16x32xf32>
    %21 = arith.addf %19, %20 : vector<16x32xf32>
    %22 = math.rsqrt %21 : vector<16x32xf32>
    %23 = arith.mulf %16, %22 : vector<16x32xf32>
    %c0_16 = arith.constant 0 : index
    %c256 = arith.constant 256 : index
    %24 = vector.load %arg20[%c0_16, %c256] : memref<1x2048xf32, #tpu.memory_space<vmem>>, vector<1x32xf32>
    %25 = vector.broadcast %24 : vector<1x32xf32> to vector<16x32xf32>
    %26 = arith.mulf %23, %25 : vector<16x32xf32>
    %c0_17 = arith.constant 0 : index
    %c384 = arith.constant 384 : index
    %27 = vector.load %arg20[%c0_17, %c384] : memref<1x2048xf32, #tpu.memory_space<vmem>>, vector<1x32xf32>
    %28 = vector.broadcast %27 : vector<1x32xf32> to vector<16x32xf32>
    %29 = arith.addf %26, %28 : vector<16x32xf32>
    %c0_18 = arith.constant 0 : index
    %c0_19 = arith.constant 0 : index
    %30 = vector.load %arg2[%c0_18, %c0_19] : memref<16x16xf32, #tpu.memory_space<vmem>>, vector<16x16xf32>
    %c0_20 = arith.constant 0 : index
    %c512 = arith.constant 512 : index
    %31 = vector.load %arg20[%c0_20, %c512] : memref<1x2048xf32, #tpu.memory_space<vmem>>, vector<1x8xf32>
    %c0_21 = arith.constant 0 : index
    %c640 = arith.constant 640 : index
    %32 = vector.load %arg20[%c0_21, %c640] : memref<1x2048xf32, #tpu.memory_space<vmem>>, vector<1x32xf32>
    %c0_22 = arith.constant 0 : index
    %c768 = arith.constant 768 : index
    %33 = vector.load %arg20[%c0_22, %c768] : memref<1x2048xf32, #tpu.memory_space<vmem>>, vector<1x256xf32>
    %c0_23 = arith.constant 0 : index
    %c1024 = arith.constant 1024 : index
    %34 = vector.load %arg20[%c0_23, %c1024] : memref<1x2048xf32, #tpu.memory_space<vmem>>, vector<1x32xf32>
    %c0_24 = arith.constant 0 : index
    %c0_25 = arith.constant 0 : index
    %35 = vector.load %arg10[%c0_24, %c0_25] : memref<16x8xf32, #tpu.memory_space<vmem>>, vector<16x8xf32>
    %cst_26 = arith.constant dense<0.000000e+00> : vector<16x8xf32>
    %36 = tpu.matmul %30, %35, %cst_26 {dimension_numbers = #tpu.dot_dimension_numbers<[1], [0], [0], [1], [0, 0, 1, 1], [], []>} : vector<16x16xf32>, vector<16x8xf32>, vector<16x8xf32> -> vector<16x8xf32>
    %37 = vector.broadcast %31 : vector<1x8xf32> to vector<16x8xf32>
    %38 = arith.addf %36, %37 : vector<16x8xf32>
    %cst_27 = arith.constant dense<0xFF800000> : vector<16xf32>
    %39 = vector.multi_reduction <maximumf>, %38, %cst_27 [1] : vector<16x8xf32> to vector<16xf32>
    %40 = vector.shape_cast %39 : vector<16xf32> to vector<16x1xf32>
    %41 = vector.broadcast %40 : vector<16x1xf32> to vector<16x8xf32>
    %42 = arith.subf %38, %41 : vector<16x8xf32>
    %43 = math.exp %42 : vector<16x8xf32>
    %cst_28 = arith.constant dense<0.000000e+00> : vector<16xf32>
    %44 = vector.multi_reduction <add>, %43, %cst_28 [1] : vector<16x8xf32> to vector<16xf32>
    %45 = vector.shape_cast %44 : vector<16xf32> to vector<16x1xf32>
    %46 = vector.broadcast %45 : vector<16x1xf32> to vector<16x8xf32>
    %47 = arith.divf %43, %46 : vector<16x8xf32>
    %c0_29 = arith.constant 0 : index
    %c0_30 = arith.constant 0 : index
    %48 = vector.load %arg11[%c0_29, %c0_30] : memref<32x32xf32, #tpu.memory_space<vmem>>, vector<32x32xf32>
    %cst_31 = arith.constant dense<0.000000e+00> : vector<16x32xf32>
    %49 = tpu.matmul %29, %48, %cst_31 {dimension_numbers = #tpu.dot_dimension_numbers<[1], [0], [0], [1], [0, 0, 1, 1], [], []>} : vector<16x32xf32>, vector<32x32xf32>, vector<16x32xf32> -> vector<16x32xf32>
    %50 = vector.broadcast %32 : vector<1x32xf32> to vector<16x32xf32>
    %51 = arith.addf %49, %50 : vector<16x32xf32>
    %52 = arith.negf %51 : vector<16x32xf32>
    %53 = math.exp %52 : vector<16x32xf32>
    %cst_32 = arith.constant 1.000000e+00 : f32
    %54 = vector.broadcast %cst_32 : f32 to vector<16x32xf32>
    %55 = arith.addf %54, %53 : vector<16x32xf32>
    %56 = arith.divf %54, %55 : vector<16x32xf32>
    %57 = arith.mulf %51, %56 : vector<16x32xf32>
    %c0_33 = arith.constant 0 : index
    %c0_34 = arith.constant 0 : index
    %58 = vector.load %arg12[%c0_33, %c0_34] : memref<32x256xf32, #tpu.memory_space<vmem>>, vector<32x256xf32>
    %cst_35 = arith.constant dense<0.000000e+00> : vector<16x256xf32>
    %59 = tpu.matmul %57, %58, %cst_35 {dimension_numbers = #tpu.dot_dimension_numbers<[1], [0], [0], [1], [0, 0, 1, 1], [], []>} : vector<16x32xf32>, vector<32x256xf32>, vector<16x256xf32> -> vector<16x256xf32>
    %60 = vector.broadcast %33 : vector<1x256xf32> to vector<16x256xf32>
    %61 = arith.addf %59, %60 : vector<16x256xf32>
    %62 = arith.negf %61 : vector<16x256xf32>
    %63 = math.exp %62 : vector<16x256xf32>
    %cst_36 = arith.constant 1.000000e+00 : f32
    %64 = vector.broadcast %cst_36 : f32 to vector<16x256xf32>
    %65 = arith.addf %64, %63 : vector<16x256xf32>
    %66 = arith.divf %64, %65 : vector<16x256xf32>
    %67 = arith.mulf %61, %66 : vector<16x256xf32>
    %c0_37 = arith.constant 0 : index
    %c0_38 = arith.constant 0 : index
    %68 = vector.load %arg8[%c0_37, %c0_38] : memref<8x256xf32, #tpu.memory_space<vmem>>, vector<8x256xf32>
    %cst_39 = arith.constant dense<0.000000e+00> : vector<16x256xf32>
    %69 = tpu.matmul %47, %68, %cst_39 {dimension_numbers = #tpu.dot_dimension_numbers<[1], [0], [0], [1], [0, 0, 1, 1], [], []>} : vector<16x8xf32>, vector<8x256xf32>, vector<16x256xf32> -> vector<16x256xf32>
    %70 = arith.mulf %67, %69 : vector<16x256xf32>
    %c0_40 = arith.constant 0 : index
    %c0_41 = arith.constant 0 : index
    %71 = vector.load %arg9[%c0_40, %c0_41] : memref<256x32xf32, #tpu.memory_space<vmem>>, vector<256x32xf32>
    %cst_42 = arith.constant dense<0.000000e+00> : vector<16x32xf32>
    %72 = tpu.matmul %70, %71, %cst_42 {dimension_numbers = #tpu.dot_dimension_numbers<[1], [0], [0], [1], [0, 0, 1, 1], [], []>} : vector<16x256xf32>, vector<256x32xf32>, vector<16x32xf32> -> vector<16x32xf32>
    %c0_43 = arith.constant 0 : index
    %c0_44 = arith.constant 0 : index
    %73 = vector.load %arg13[%c0_43, %c0_44] : memref<32x32xf32, #tpu.memory_space<vmem>>, vector<32x32xf32>
    %cst_45 = arith.constant dense<0.000000e+00> : vector<16x32xf32>
    %74 = tpu.matmul %72, %73, %cst_45 {dimension_numbers = #tpu.dot_dimension_numbers<[1], [0], [0], [1], [0, 0, 1, 1], [], []>} : vector<16x32xf32>, vector<32x32xf32>, vector<16x32xf32> -> vector<16x32xf32>
    %75 = vector.broadcast %34 : vector<1x32xf32> to vector<16x32xf32>
    %76 = arith.addf %74, %75 : vector<16x32xf32>
    %c0_46 = arith.constant 0 : index
    %c0_47 = arith.constant 0 : index
    %77 = vector.load %arg4[%c0_46, %c0_47] : memref<16x32xf32, #tpu.memory_space<vmem>>, vector<16x32xf32>
    %c0_48 = arith.constant 0 : index
    %c0_49 = arith.constant 0 : index
    %78 = vector.load %arg14[%c0_48, %c0_49] : memref<32x32xf32, #tpu.memory_space<vmem>>, vector<32x32xf32>
    %cst_50 = arith.constant dense<0.000000e+00> : vector<16x32xf32>
    %79 = tpu.matmul %77, %78, %cst_50 {dimension_numbers = #tpu.dot_dimension_numbers<[1], [0], [0], [1], [0, 0, 1, 1], [], []>} : vector<16x32xf32>, vector<32x32xf32>, vector<16x32xf32> -> vector<16x32xf32>
    %c0_51 = arith.constant 0 : index
    %c1152 = arith.constant 1152 : index
    %80 = vector.load %arg20[%c0_51, %c1152] : memref<1x2048xf32, #tpu.memory_space<vmem>>, vector<1x32xf32>
    %81 = vector.broadcast %80 : vector<1x32xf32> to vector<16x32xf32>
    %82 = arith.addf %79, %81 : vector<16x32xf32>
    %83 = arith.negf %82 : vector<16x32xf32>
    %84 = math.exp %83 : vector<16x32xf32>
    %cst_52 = arith.constant 1.000000e+00 : f32
    %85 = vector.broadcast %cst_52 : f32 to vector<16x32xf32>
    %86 = arith.addf %85, %84 : vector<16x32xf32>
    %87 = arith.divf %85, %86 : vector<16x32xf32>
    %88 = arith.mulf %82, %87 : vector<16x32xf32>
    %c0_53 = arith.constant 0 : index
    %c0_54 = arith.constant 0 : index
    %89 = vector.load %arg15[%c0_53, %c0_54] : memref<32x32xf32, #tpu.memory_space<vmem>>, vector<32x32xf32>
    %cst_55 = arith.constant dense<0.000000e+00> : vector<16x32xf32>
    %90 = tpu.matmul %88, %89, %cst_55 {dimension_numbers = #tpu.dot_dimension_numbers<[1], [0], [0], [1], [0, 0, 1, 1], [], []>} : vector<16x32xf32>, vector<32x32xf32>, vector<16x32xf32> -> vector<16x32xf32>
    %c0_56 = arith.constant 0 : index
    %c1280 = arith.constant 1280 : index
    %91 = vector.load %arg20[%c0_56, %c1280] : memref<1x2048xf32, #tpu.memory_space<vmem>>, vector<1x32xf32>
    %92 = vector.broadcast %91 : vector<1x32xf32> to vector<16x32xf32>
    %93 = arith.addf %90, %92 : vector<16x32xf32>
    %94 = arith.addf %76, %93 : vector<16x32xf32>
    %95 = arith.negf %94 : vector<16x32xf32>
    %96 = math.exp %95 : vector<16x32xf32>
    %cst_57 = arith.constant 1.000000e+00 : f32
    %97 = vector.broadcast %cst_57 : f32 to vector<16x32xf32>
    %98 = arith.addf %97, %96 : vector<16x32xf32>
    %99 = arith.divf %97, %98 : vector<16x32xf32>
    %100 = arith.mulf %94, %99 : vector<16x32xf32>
    %c0_58 = arith.constant 0 : index
    %c0_59 = arith.constant 0 : index
    %101 = vector.load %arg3[%c0_58, %c0_59] : memref<16x16xf32, #tpu.memory_space<vmem>>, vector<16x16xf32>
    %c0_60 = arith.constant 0 : index
    %c1408 = arith.constant 1408 : index
    %102 = vector.load %arg20[%c0_60, %c1408] : memref<1x2048xf32, #tpu.memory_space<vmem>>, vector<1x8xf32>
    %c0_61 = arith.constant 0 : index
    %c1536 = arith.constant 1536 : index
    %103 = vector.load %arg20[%c0_61, %c1536] : memref<1x2048xf32, #tpu.memory_space<vmem>>, vector<1x32xf32>
    %c0_62 = arith.constant 0 : index
    %c1664 = arith.constant 1664 : index
    %104 = vector.load %arg20[%c0_62, %c1664] : memref<1x2048xf32, #tpu.memory_space<vmem>>, vector<1x256xf32>
    %c0_63 = arith.constant 0 : index
    %c1920 = arith.constant 1920 : index
    %105 = vector.load %arg20[%c0_63, %c1920] : memref<1x2048xf32, #tpu.memory_space<vmem>>, vector<1x128xf32>
    %c0_64 = arith.constant 0 : index
    %c0_65 = arith.constant 0 : index
    %106 = vector.load %arg16[%c0_64, %c0_65] : memref<16x8xf32, #tpu.memory_space<vmem>>, vector<16x8xf32>
    %cst_66 = arith.constant dense<0.000000e+00> : vector<16x8xf32>
    %107 = tpu.matmul %101, %106, %cst_66 {dimension_numbers = #tpu.dot_dimension_numbers<[1], [0], [0], [1], [0, 0, 1, 1], [], []>} : vector<16x16xf32>, vector<16x8xf32>, vector<16x8xf32> -> vector<16x8xf32>
    %108 = vector.broadcast %102 : vector<1x8xf32> to vector<16x8xf32>
    %109 = arith.addf %107, %108 : vector<16x8xf32>
    %cst_67 = arith.constant dense<0xFF800000> : vector<16xf32>
    %110 = vector.multi_reduction <maximumf>, %109, %cst_67 [1] : vector<16x8xf32> to vector<16xf32>
    %111 = vector.shape_cast %110 : vector<16xf32> to vector<16x1xf32>
    %112 = vector.broadcast %111 : vector<16x1xf32> to vector<16x8xf32>
    %113 = arith.subf %109, %112 : vector<16x8xf32>
    %114 = math.exp %113 : vector<16x8xf32>
    %cst_68 = arith.constant dense<0.000000e+00> : vector<16xf32>
    %115 = vector.multi_reduction <add>, %114, %cst_68 [1] : vector<16x8xf32> to vector<16xf32>
    %116 = vector.shape_cast %115 : vector<16xf32> to vector<16x1xf32>
    %117 = vector.broadcast %116 : vector<16x1xf32> to vector<16x8xf32>
    %118 = arith.divf %114, %117 : vector<16x8xf32>
    %c0_69 = arith.constant 0 : index
    %c0_70 = arith.constant 0 : index
    %119 = vector.load %arg17[%c0_69, %c0_70] : memref<32x32xf32, #tpu.memory_space<vmem>>, vector<32x32xf32>
    %cst_71 = arith.constant dense<0.000000e+00> : vector<16x32xf32>
    %120 = tpu.matmul %100, %119, %cst_71 {dimension_numbers = #tpu.dot_dimension_numbers<[1], [0], [0], [1], [0, 0, 1, 1], [], []>} : vector<16x32xf32>, vector<32x32xf32>, vector<16x32xf32> -> vector<16x32xf32>
    %121 = vector.broadcast %103 : vector<1x32xf32> to vector<16x32xf32>
    %122 = arith.addf %120, %121 : vector<16x32xf32>
    %123 = arith.negf %122 : vector<16x32xf32>
    %124 = math.exp %123 : vector<16x32xf32>
    %cst_72 = arith.constant 1.000000e+00 : f32
    %125 = vector.broadcast %cst_72 : f32 to vector<16x32xf32>
    %126 = arith.addf %125, %124 : vector<16x32xf32>
    %127 = arith.divf %125, %126 : vector<16x32xf32>
    %128 = arith.mulf %122, %127 : vector<16x32xf32>
    %c0_73 = arith.constant 0 : index
    %c0_74 = arith.constant 0 : index
    %129 = vector.load %arg18[%c0_73, %c0_74] : memref<32x256xf32, #tpu.memory_space<vmem>>, vector<32x256xf32>
    %cst_75 = arith.constant dense<0.000000e+00> : vector<16x256xf32>
    %130 = tpu.matmul %128, %129, %cst_75 {dimension_numbers = #tpu.dot_dimension_numbers<[1], [0], [0], [1], [0, 0, 1, 1], [], []>} : vector<16x32xf32>, vector<32x256xf32>, vector<16x256xf32> -> vector<16x256xf32>
    %131 = vector.broadcast %104 : vector<1x256xf32> to vector<16x256xf32>
    %132 = arith.addf %130, %131 : vector<16x256xf32>
    %133 = arith.negf %132 : vector<16x256xf32>
    %134 = math.exp %133 : vector<16x256xf32>
    %cst_76 = arith.constant 1.000000e+00 : f32
    %135 = vector.broadcast %cst_76 : f32 to vector<16x256xf32>
    %136 = arith.addf %135, %134 : vector<16x256xf32>
    %137 = arith.divf %135, %136 : vector<16x256xf32>
    %138 = arith.mulf %132, %137 : vector<16x256xf32>
    %c0_77 = arith.constant 0 : index
    %c0_78 = arith.constant 0 : index
    %139 = vector.load %arg8[%c0_77, %c0_78] : memref<8x256xf32, #tpu.memory_space<vmem>>, vector<8x256xf32>
    %cst_79 = arith.constant dense<0.000000e+00> : vector<16x256xf32>
    %140 = tpu.matmul %118, %139, %cst_79 {dimension_numbers = #tpu.dot_dimension_numbers<[1], [0], [0], [1], [0, 0, 1, 1], [], []>} : vector<16x8xf32>, vector<8x256xf32>, vector<16x256xf32> -> vector<16x256xf32>
    %141 = arith.mulf %138, %140 : vector<16x256xf32>
    %c0_80 = arith.constant 0 : index
    %c0_81 = arith.constant 0 : index
    %142 = vector.load %arg9[%c0_80, %c0_81] : memref<256x32xf32, #tpu.memory_space<vmem>>, vector<256x32xf32>
    %cst_82 = arith.constant dense<0.000000e+00> : vector<16x32xf32>
    %143 = tpu.matmul %141, %142, %cst_82 {dimension_numbers = #tpu.dot_dimension_numbers<[1], [0], [0], [1], [0, 0, 1, 1], [], []>} : vector<16x256xf32>, vector<256x32xf32>, vector<16x32xf32> -> vector<16x32xf32>
    %c0_83 = arith.constant 0 : index
    %c0_84 = arith.constant 0 : index
    %144 = vector.load %arg19[%c0_83, %c0_84] : memref<32x128xf32, #tpu.memory_space<vmem>>, vector<32x128xf32>
    %cst_85 = arith.constant dense<0.000000e+00> : vector<16x128xf32>
    %145 = tpu.matmul %143, %144, %cst_85 {dimension_numbers = #tpu.dot_dimension_numbers<[1], [0], [0], [1], [0, 0, 1, 1], [], []>} : vector<16x32xf32>, vector<32x128xf32>, vector<16x128xf32> -> vector<16x128xf32>
    %146 = vector.broadcast %105 : vector<1x128xf32> to vector<16x128xf32>
    %147 = arith.addf %145, %146 : vector<16x128xf32>
    %c0_86 = arith.constant 0 : index
    %c0_87 = arith.constant 0 : index
    %148 = vector.load %arg21[%c0_86, %c0_87] : memref<16x128xf32, #tpu.memory_space<vmem>>, vector<16x128xf32>
    tpu.vector_store %arg21[%c0_86, %c0_87], %147 {strides = array<i32>} : memref<16x128xf32, #tpu.memory_space<vmem>>, vector<16x128xf32>,
    return
  }
  func.func @transform_0(%arg0: i32) -> (i32, i32) {
    %c0_i32 = arith.constant 0 : i32
    %c0_i32_0 = arith.constant 0 : i32
    return %arg0, %c0_i32 : i32, i32
  }
  func.func @transform_1(%arg0: i32) -> (i32, i32) {
    %c0_i32 = arith.constant 0 : i32
    %c0_i32_0 = arith.constant 0 : i32
    return %arg0, %c0_i32 : i32, i32
  }
  func.func @transform_2(%arg0: i32) -> (i32, i32) {
    %c0_i32 = arith.constant 0 : i32
    %c0_i32_0 = arith.constant 0 : i32
    return %arg0, %c0_i32 : i32, i32
  }
  func.func @transform_3(%arg0: i32) -> (i32, i32) {
    %c0_i32 = arith.constant 0 : i32
    %c0_i32_0 = arith.constant 0 : i32
    return %arg0, %c0_i32 : i32, i32
  }
  func.func @transform_4(%arg0: i32) -> (i32, i32) {
    %c0_i32 = arith.constant 0 : i32
    %c0_i32_0 = arith.constant 0 : i32
    %c0_i32_1 = arith.constant 0 : i32
    return %c0_i32, %c0_i32_0 : i32, i32
  }
  func.func @transform_5(%arg0: i32) -> (i32, i32) {
    %c0_i32 = arith.constant 0 : i32
    %c0_i32_0 = arith.constant 0 : i32
    %c0_i32_1 = arith.constant 0 : i32
    return %c0_i32, %c0_i32_0 : i32, i32
  }
  func.func @transform_6(%arg0: i32) -> (i32, i32) {
    %c0_i32 = arith.constant 0 : i32
    %c0_i32_0 = arith.constant 0 : i32
    %c0_i32_1 = arith.constant 0 : i32
    return %c0_i32, %c0_i32_0 : i32, i32
  }
  func.func @transform_7(%arg0: i32) -> (i32, i32) {
    %c0_i32 = arith.constant 0 : i32
    %c0_i32_0 = arith.constant 0 : i32
    %c0_i32_1 = arith.constant 0 : i32
    return %c0_i32, %c0_i32_0 : i32, i32
  }
  func.func @transform_8(%arg0: i32) -> (i32, i32) {
    %c0_i32 = arith.constant 0 : i32
    %c0_i32_0 = arith.constant 0 : i32
    %c0_i32_1 = arith.constant 0 : i32
    return %c0_i32, %c0_i32_0 : i32, i32
  }
  func.func @transform_9(%arg0: i32) -> (i32, i32) {
    %c0_i32 = arith.constant 0 : i32
    %c0_i32_0 = arith.constant 0 : i32
    %c0_i32_1 = arith.constant 0 : i32
    return %c0_i32, %c0_i32_0 : i32, i32
  }
  func.func @transform_10(%arg0: i32) -> (i32, i32) {
    %c0_i32 = arith.constant 0 : i32
    %c0_i32_0 = arith.constant 0 : i32
    %c0_i32_1 = arith.constant 0 : i32
    return %c0_i32, %c0_i32_0 : i32, i32
  }
  func.func @transform_11(%arg0: i32) -> (i32, i32) {
    %c0_i32 = arith.constant 0 : i32
    %c0_i32_0 = arith.constant 0 : i32
    %c0_i32_1 = arith.constant 0 : i32
    return %c0_i32, %c0_i32_0 : i32, i32
  }
  func.func @transform_12(%arg0: i32) -> (i32, i32) {
    %c0_i32 = arith.constant 0 : i32
    %c0_i32_0 = arith.constant 0 : i32
    %c0_i32_1 = arith.constant 0 : i32
    return %c0_i32, %c0_i32_0 : i32, i32
  }
  func.func @transform_13(%arg0: i32) -> (i32, i32) {
    %c0_i32 = arith.constant 0 : i32
    %c0_i32_0 = arith.constant 0 : i32
    %c0_i32_1 = arith.constant 0 : i32
    return %c0_i32, %c0_i32_0 : i32, i32
  }
  func.func @transform_14(%arg0: i32) -> (i32, i32) {
    %c0_i32 = arith.constant 0 : i32
    %c0_i32_0 = arith.constant 0 : i32
    %c0_i32_1 = arith.constant 0 : i32
    return %c0_i32, %c0_i32_0 : i32, i32
  }
  func.func @transform_15(%arg0: i32) -> (i32, i32) {
    %c0_i32 = arith.constant 0 : i32
    %c0_i32_0 = arith.constant 0 : i32
    %c0_i32_1 = arith.constant 0 : i32
    return %c0_i32, %c0_i32_0 : i32, i32
  }
  func.func @transform_16(%arg0: i32) -> (i32, i32) {
    %c0_i32 = arith.constant 0 : i32
    %c0_i32_0 = arith.constant 0 : i32
    %c0_i32_1 = arith.constant 0 : i32
    return %c0_i32, %c0_i32_0 : i32, i32
  }
  func.func @transform_17(%arg0: i32) -> (i32, i32) {
    %c0_i32 = arith.constant 0 : i32
    %c0_i32_0 = arith.constant 0 : i32
    %c0_i32_1 = arith.constant 0 : i32
    return %c0_i32, %c0_i32_0 : i32, i32
  }
  func.func @transform_18(%arg0: i32) -> (i32, i32) {
    %c0_i32 = arith.constant 0 : i32
    %c0_i32_0 = arith.constant 0 : i32
    %c0_i32_1 = arith.constant 0 : i32
    return %c0_i32, %c0_i32_0 : i32, i32
  }
  func.func @transform_19(%arg0: i32) -> (i32, i32) {
    %c0_i32 = arith.constant 0 : i32
    %c0_i32_0 = arith.constant 0 : i32
    %c0_i32_1 = arith.constant 0 : i32
    return %c0_i32, %c0_i32_0 : i32, i32
  }
  func.func @transform_20(%arg0: i32) -> (i32, i32) {
    %c0_i32 = arith.constant 0 : i32
    %c0_i32_0 = arith.constant 0 : i32
    return %arg0, %c0_i32 : i32, i32
  }
}

</mosaic_0001>

<llo_original>
// kernel: message_block_forward.1
$region0: #{message_block_forward.1}
  #allocation0 [shape = 'u32[]', space=smem, size = 0x4, offset = 0x4, fixed_abs, tag = 'smem constant byte address 0x4 - core index']
  #allocation1 [shape = 'u32[144,128]{1,0:T(1,128)}', space=vmem, size = 0x12000, scoped, tag = 'internal scratch']
  %s0 = inlined_call_operand.vmem [shape: f32[32,512], index: 0, kind: input, shape index: {}]
  %s1 = inlined_call_operand.vmem [shape: f32[32,16], index: 1, kind: input, shape index: {}]
  %s2 = inlined_call_operand.vmem [shape: f32[32,16], index: 2, kind: input, shape index: {}]
  %s3 = inlined_call_operand.vmem [shape: f32[32,32], index: 3, kind: input, shape index: {}]
  %s4 = inlined_call_operand.vmem [shape: f32[512,256], index: 4, kind: input, shape index: {}]
  %s5 = inlined_call_operand.vmem [shape: f32[256,32], index: 5, kind: input, shape index: {}]
  %s6 = inlined_call_operand.vmem [shape: f32[32,32], index: 6, kind: input, shape index: {}]
  %s7 = inlined_call_operand.vmem [shape: f32[8,256], index: 7, kind: input, shape index: {}]
  %s8 = inlined_call_operand.vmem [shape: f32[256,32], index: 8, kind: input, shape index: {}]
  %s9 = inlined_call_operand.vmem [shape: f32[16,8], index: 9, kind: input, shape index: {}]
  %s10 = inlined_call_operand.vmem [shape: f32[32,32], index: 10, kind: input, shape index: {}]
  %s11 = inlined_call_operand.vmem [shape: f32[32,256], index: 11, kind: input, shape index: {}]
  %s12 = inlined_call_operand.vmem [shape: f32[32,32], index: 12, kind: input, shape index: {}]
  %s13 = inlined_call_operand.vmem [shape: f32[32,32], index: 13, kind: input, shape index: {}]
  %s14 = inlined_call_operand.vmem [shape: f32[32,32], index: 14, kind: input, shape index: {}]
  %s15 = inlined_call_operand.vmem [shape: f32[16,8], index: 15, kind: input, shape index: {}]
  %s16 = inlined_call_operand.vmem [shape: f32[32,32], index: 16, kind: input, shape index: {}]
  %s17 = inlined_call_operand.vmem [shape: f32[32,256], index: 17, kind: input, shape index: {}]
  %s18 = inlined_call_operand.vmem [shape: f32[32,128], index: 18, kind: input, shape index: {}]
  %s19 = inlined_call_operand.vmem [shape: f32[1,2048], index: 19, kind: input, shape index: {}]
  %s20 = inlined_call_operand.hbm [shape: f32[32,128], index: 20, kind: output, shape index: {}]
  %s21 = sld [smem:[#allocation0]]
  $region113: #{message_block_forward.1} parent=0
    _
  %s23 = ssub.s32 1, %s21
  %s24 = scalar_select 0, %s23, %s21
  $region1: #{message_block_forward.1} parent=0
    #allocation2 [shape = 'u8[16384]{0}', space=vmem, size = 0x4000, scoped, tag = 'output window, operand 0']
    #allocation3 [shape = 's32[2]{0}', space=sflag, size = 0x8, scoped, tag = 'scoped memory for message_block_forward.1']
    %25 = vsyncpa [#allocation3], 0
    %s26 = scalar_lea.sflag [#allocation3], 1
    %27 = vsyncpa %s26, 0
    loop: start=0, step=1, limit=4
    $region2: #{message_block_forward.1} parent=1 // loop_pre_header
      _
    $region3: #{message_block_forward.1} parent=1 // loop_header
      %s29 = sphi 0, %s33
      %p30 = scmp.ge.s32.totalorder %s29, 4
      %s39 = sphi 0, %s41
      %s42 = sphi 0, %s39
      %s43 = sphi 0, %s42
      %s59 = sphi 0, %s43
      %s65 = sphi 0, %s67
      %s68 = sphi 0, %s65
      %s69 = sphi 0, %s68
      %s85 = sphi 0, %s69
      %s91 = sphi 0, %s93
      %s94 = sphi 0, %s91
      %s95 = sphi 0, %s94
      %s111 = sphi 0, %s95
      %s117 = sphi 0, %s119
      %s120 = sphi 0, %s117
      %s121 = sphi 0, %s120
      %s137 = sphi 0, %s121
      %s141 = sphi 0, %s141
      %s143 = sphi 0, %s141
      %s144 = sphi 0, %s143
      %s158 = sphi 0, %s144
      %s162 = sphi 0, %s162
      %s164 = sphi 0, %s162
      %s165 = sphi 0, %s164
      %s179 = sphi 0, %s165
      %s183 = sphi 0, %s183
      %s185 = sphi 0, %s183
      %s186 = sphi 0, %s185
      %s200 = sphi 0, %s186
      %s204 = sphi 0, %s204
      %s206 = sphi 0, %s204
      %s207 = sphi 0, %s206
      %s221 = sphi 0, %s207
      %s225 = sphi 0, %s225
      %s227 = sphi 0, %s225
      %s228 = sphi 0, %s227
      %s242 = sphi 0, %s228
      %s246 = sphi 0, %s246
      %s248 = sphi 0, %s246
      %s249 = sphi 0, %s248
      %s263 = sphi 0, %s249
      %s267 = sphi 0, %s267
      %s269 = sphi 0, %s267
      %s270 = sphi 0, %s269
      %s284 = sphi 0, %s270
      %s288 = sphi 0, %s288
      %s290 = sphi 0, %s288
      %s291 = sphi 0, %s290
      %s305 = sphi 0, %s291
      %s309 = sphi 0, %s309
      %s311 = sphi 0, %s309
      %s312 = sphi 0, %s311
      %s326 = sphi 0, %s312
      %s330 = sphi 0, %s330
      %s332 = sphi 0, %s330
      %s333 = sphi 0, %s332
      %s347 = sphi 0, %s333
      %s351 = sphi 0, %s351
      %s353 = sphi 0, %s351
      %s354 = sphi 0, %s353
      %s368 = sphi 0, %s354
      %s372 = sphi 0, %s372
      %s374 = sphi 0, %s372
      %s375 = sphi 0, %s374
      %s389 = sphi 0, %s375
      %s393 = sphi 0, %s393
      %s395 = sphi 0, %s393
      %s396 = sphi 0, %s395
      %s410 = sphi 0, %s396
      %s414 = sphi 0, %s414
      %s416 = sphi 0, %s414
      %s417 = sphi 0, %s416
      %s431 = sphi 0, %s417
      %s435 = sphi 0, %s435
      %s437 = sphi 0, %s435
      %s438 = sphi 0, %s437
      %s452 = sphi 0, %s438
      %s456 = sphi 0, %s456
      %s458 = sphi 0, %s456
      %s459 = sphi 0, %s458
      %s473 = sphi 0, %s459
      %s479 = sphi 0, %s481
      %s482 = sphi 0, %s479
      %s483 = sphi 0, %s482
      %s499 = sphi 0, %s483
    $region4: #{message_block_forward.1} parent=1 // loop_header_branch
      %32 = sbr.rel (%p30) target = $region8
    $region5: #{message_block_forward.1} parent=1 // loop_body
      %s34 = ssub.s32 %s29, 1
      %s35 = ssub.s32 %s29, 2
      %s36 = sadd.s32 %s29, 1
      %s37 = ssub.s32 %s29, %s36
      %p38 = scmp.eq.s32.totalorder %s37, 0
      %s40 = sadd.s32 %s39, 1
      %s41 = scalar_select %p38, %s39, %s40
      %p44 = pneg %p38
      %p45 = scmp.eq.s32.totalorder %s29, 1
      %p46 = por %p44, %p45
      %p47 = scmp.ne.s32.totalorder %s39, %s42
      %p48 = scmp.eq.s32.totalorder %s29, 0
      %p49 = por %p47, %p48
      %p50 = scmp.ne.s32.totalorder %s39, %s42
      %p51 = scmp.eq.s32.totalorder %s34, 1
      %p52 = por %p50, %p51
      %p53 = scmp.ne.s32.totalorder %s42, %s43
      %p54 = scmp.eq.s32.totalorder %s34, 0
      %p55 = por %p53, %p54
      %p56 = scmp.ne.s32.totalorder %s42, %s43
      %p57 = scmp.eq.s32.totalorder %s35, 1
      %p58 = por %p56, %p57
      %p60 = scmp.ne.s32.totalorder %s43, %s59
      %p61 = scmp.eq.s32.totalorder %s35, 0
      %p62 = por %p60, %p61
      %s63 = ssub.s32 %s29, %s36
      %p64 = scmp.eq.s32.totalorder %s63, 0
      %s66 = sadd.s32 %s65, 1
      %s67 = scalar_select %p64, %s65, %s66
      %p70 = pneg %p64
      %p71 = scmp.eq.s32.totalorder %s29, 1
      %p72 = por %p70, %p71
      %p73 = scmp.ne.s32.totalorder %s65, %s68
      %p74 = scmp.eq.s32.totalorder %s29, 0
      %p75 = por %p73, %p74
      %p76 = scmp.ne.s32.totalorder %s65, %s68
      %p77 = scmp.eq.s32.totalorder %s34, 1
      %p78 = por %p76, %p77
      %p79 = scmp.ne.s32.totalorder %s68, %s69
      %p80 = scmp.eq.s32.totalorder %s34, 0
      %p81 = por %p79, %p80
      %p82 = scmp.ne.s32.totalorder %s68, %s69
      %p83 = scmp.eq.s32.totalorder %s35, 1
      %p84 = por %p82, %p83
      %p86 = scmp.ne.s32.totalorder %s69, %s85
      %p87 = scmp.eq.s32.totalorder %s35, 0
      %p88 = por %p86, %p87
      %s89 = ssub.s32 %s29, %s36
      %p90 = scmp.eq.s32.totalorder %s89, 0
      %s92 = sadd.s32 %s91, 1
      %s93 = scalar_select %p90, %s91, %s92
      %p96 = pneg %p90
      %p97 = scmp.eq.s32.totalorder %s29, 1
      %p98 = por %p96, %p97
      %p99 = scmp.ne.s32.totalorder %s91, %s94
      %p100 = scmp.eq.s32.totalorder %s29, 0
      %p101 = por %p99, %p100
      %p102 = scmp.ne.s32.totalorder %s91, %s94
      %p103 = scmp.eq.s32.totalorder %s34, 1
      %p104 = por %p102, %p103
      %p105 = scmp.ne.s32.totalorder %s94, %s95
      %p106 = scmp.eq.s32.totalorder %s34, 0
      %p107 = por %p105, %p106
      %p108 = scmp.ne.s32.totalorder %s94, %s95
      %p109 = scmp.eq.s32.totalorder %s35, 1
      %p110 = por %p108, %p109
      %p112 = scmp.ne.s32.totalorder %s95, %s111
      %p113 = scmp.eq.s32.totalorder %s35, 0
      %p114 = por %p112, %p113
      %s115 = ssub.s32 %s29, %s36
      %p116 = scmp.eq.s32.totalorder %s115, 0
      %s118 = sadd.s32 %s117, 1
      %s119 = scalar_select %p116, %s117, %s118
      %p122 = pneg %p116
      %p123 = scmp.eq.s32.totalorder %s29, 1
      %p124 = por %p122, %p123
      %p125 = scmp.ne.s32.totalorder %s117, %s120
      %p126 = scmp.eq.s32.totalorder %s29, 0
      %p127 = por %p125, %p126
      %p128 = scmp.ne.s32.totalorder %s117, %s120
      %p129 = scmp.eq.s32.totalorder %s34, 1
      %p130 = por %p128, %p129
      %p131 = scmp.ne.s32.totalorder %s120, %s121
      %p132 = scmp.eq.s32.totalorder %s34, 0
      %p133 = por %p131, %p132
      %p134 = scmp.ne.s32.totalorder %s120, %s121
      %p135 = scmp.eq.s32.totalorder %s35, 1
      %p136 = por %p134, %p135
      %p138 = scmp.ne.s32.totalorder %s121, %s137
      %p139 = scmp.eq.s32.totalorder %s35, 0
      %p140 = por %p138, %p139
      %s142 = sadd.s32 %s141, 1
      %p145 = scmp.eq.s32.totalorder %s29, 1
      %p146 = scmp.ne.s32.totalorder %s141, %s143
      %p147 = scmp.eq.s32.totalorder %s29, 0
      %p148 = por %p146, %p147
      %p149 = scmp.ne.s32.totalorder %s141, %s143
      %p150 = scmp.eq.s32.totalorder %s34, 1
      %p151 = por %p149, %p150
      %p152 = scmp.ne.s32.totalorder %s143, %s144
      %p153 = scmp.eq.s32.totalorder %s34, 0
      %p154 = por %p152, %p153
      %p155 = scmp.ne.s32.totalorder %s143, %s144
      %p156 = scmp.eq.s32.totalorder %s35, 1
      %p157 = por %p155, %p156
      %p159 = scmp.ne.s32.totalorder %s144, %s158
      %p160 = scmp.eq.s32.totalorder %s35, 0
      %p161 = por %p159, %p160
      %s163 = sadd.s32 %s162, 1
      %p166 = scmp.eq.s32.totalorder %s29, 1
      %p167 = scmp.ne.s32.totalorder %s162, %s164
      %p168 = scmp.eq.s32.totalorder %s29, 0
      %p169 = por %p167, %p168
      %p170 = scmp.ne.s32.totalorder %s162, %s164
      %p171 = scmp.eq.s32.totalorder %s34, 1
      %p172 = por %p170, %p171
      %p173 = scmp.ne.s32.totalorder %s164, %s165
      %p174 = scmp.eq.s32.totalorder %s34, 0
      %p175 = por %p173, %p174
      %p176 = scmp.ne.s32.totalorder %s164, %s165
      %p177 = scmp.eq.s32.totalorder %s35, 1
      %p178 = por %p176, %p177
      %p180 = scmp.ne.s32.totalorder %s165, %s179
      %p181 = scmp.eq.s32.totalorder %s35, 0
      %p182 = por %p180, %p181
      %s184 = sadd.s32 %s183, 1
      %p187 = scmp.eq.s32.totalorder %s29, 1
      %p188 = scmp.ne.s32.totalorder %s183, %s185
      %p189 = scmp.eq.s32.totalorder %s29, 0
      %p190 = por %p188, %p189
      %p191 = scmp.ne.s32.totalorder %s183, %s185
      %p192 = scmp.eq.s32.totalorder %s34, 1
      %p193 = por %p191, %p192
      %p194 = scmp.ne.s32.totalorder %s185, %s186
      %p195 = scmp.eq.s32.totalorder %s34, 0
      %p196 = por %p194, %p195
      %p197 = scmp.ne.s32.totalorder %s185, %s186
      %p198 = scmp.eq.s32.totalorder %s35, 1
      %p199 = por %p197, %p198
      %p201 = scmp.ne.s32.totalorder %s186, %s200
      %p202 = scmp.eq.s32.totalorder %s35, 0
      %p203 = por %p201, %p202
      %s205 = sadd.s32 %s204, 1
      %p208 = scmp.eq.s32.totalorder %s29, 1
      %p209 = scmp.ne.s32.totalorder %s204, %s206
      %p210 = scmp.eq.s32.totalorder %s29, 0
      %p211 = por %p209, %p210
      %p212 = scmp.ne.s32.totalorder %s204, %s206
      %p213 = scmp.eq.s32.totalorder %s34, 1
      %p214 = por %p212, %p213
      %p215 = scmp.ne.s32.totalorder %s206, %s207
      %p216 = scmp.eq.s32.totalorder %s34, 0
      %p217 = por %p215, %p216
      %p218 = scmp.ne.s32.totalorder %s206, %s207
      %p219 = scmp.eq.s32.totalorder %s35, 1
      %p220 = por %p218, %p219
      %p222 = scmp.ne.s32.totalorder %s207, %s221
      %p223 = scmp.eq.s32.totalorder %s35, 0
      %p224 = por %p222, %p223
      %s226 = sadd.s32 %s225, 1
      %p229 = scmp.eq.s32.totalorder %s29, 1
      %p230 = scmp.ne.s32.totalorder %s225, %s227
      %p231 = scmp.eq.s32.totalorder %s29, 0
      %p232 = por %p230, %p231
      %p233 = scmp.ne.s32.totalorder %s225, %s227
      %p234 = scmp.eq.s32.totalorder %s34, 1
      %p235 = por %p233, %p234
      %p236 = scmp.ne.s32.totalorder %s227, %s228
      %p237 = scmp.eq.s32.totalorder %s34, 0
      %p238 = por %p236, %p237
      %p239 = scmp.ne.s32.totalorder %s227, %s228
      %p240 = scmp.eq.s32.totalorder %s35, 1
      %p241 = por %p239, %p240
      %p243 = scmp.ne.s32.totalorder %s228, %s242
      %p244 = scmp.eq.s32.totalorder %s35, 0
      %p245 = por %p243, %p244
      %s247 = sadd.s32 %s246, 1
      %p250 = scmp.eq.s32.totalorder %s29, 1
      %p251 = scmp.ne.s32.totalorder %s246, %s248
      %p252 = scmp.eq.s32.totalorder %s29, 0
      %p253 = por %p251, %p252
      %p254 = scmp.ne.s32.totalorder %s246, %s248
      %p255 = scmp.eq.s32.totalorder %s34, 1
      %p256 = por %p254, %p255
      %p257 = scmp.ne.s32.totalorder %s248, %s249
      %p258 = scmp.eq.s32.totalorder %s34, 0
      %p259 = por %p257, %p258
      %p260 = scmp.ne.s32.totalorder %s248, %s249
      %p261 = scmp.eq.s32.totalorder %s35, 1
      %p262 = por %p260, %p261
      %p264 = scmp.ne.s32.totalorder %s249, %s263
      %p265 = scmp.eq.s32.totalorder %s35, 0
      %p266 = por %p264, %p265
      %s268 = sadd.s32 %s267, 1
      %p271 = scmp.eq.s32.totalorder %s29, 1
      %p272 = scmp.ne.s32.totalorder %s267, %s269
      %p273 = scmp.eq.s32.totalorder %s29, 0
      %p274 = por %p272, %p273
      %p275 = scmp.ne.s32.totalorder %s267, %s269
      %p276 = scmp.eq.s32.totalorder %s34, 1
      %p277 = por %p275, %p276
      %p278 = scmp.ne.s32.totalorder %s269, %s270
      %p279 = scmp.eq.s32.totalorder %s34, 0
      %p280 = por %p278, %p279
      %p281 = scmp.ne.s32.totalorder %s269, %s270
      %p282 = scmp.eq.s32.totalorder %s35, 1
      %p283 = por %p281, %p282
      %p285 = scmp.ne.s32.totalorder %s270, %s284
      %p286 = scmp.eq.s32.totalorder %s35, 0
      %p287 = por %p285, %p286
      %s289 = sadd.s32 %s288, 1
      %p292 = scmp.eq.s32.totalorder %s29, 1
      %p293 = scmp.ne.s32.totalorder %s288, %s290
      %p294 = scmp.eq.s32.totalorder %s29, 0
      %p295 = por %p293, %p294
      %p296 = scmp.ne.s32.totalorder %s288, %s290
      %p297 = scmp.eq.s32.totalorder %s34, 1
      %p298 = por %p296, %p297
      %p299 = scmp.ne.s32.totalorder %s290, %s291
      %p300 = scmp.eq.s32.totalorder %s34, 0
      %p301 = por %p299, %p300
      %p302 = scmp.ne.s32.totalorder %s290, %s291
      %p303 = scmp.eq.s32.totalorder %s35, 1
      %p304 = por %p302, %p303
      %p306 = scmp.ne.s32.totalorder %s291, %s305
      %p307 = scmp.eq.s32.totalorder %s35, 0
      %p308 = por %p306, %p307
      %s310 = sadd.s32 %s309, 1
      %p313 = scmp.eq.s32.totalorder %s29, 1
      %p314 = scmp.ne.s32.totalorder %s309, %s311
      %p315 = scmp.eq.s32.totalorder %s29, 0
      %p316 = por %p314, %p315
      %p317 = scmp.ne.s32.totalorder %s309, %s311
      %p318 = scmp.eq.s32.totalorder %s34, 1
      %p319 = por %p317, %p318
      %p320 = scmp.ne.s32.totalorder %s311, %s312
      %p321 = scmp.eq.s32.totalorder %s34, 0
      %p322 = por %p320, %p321
      %p323 = scmp.ne.s32.totalorder %s311, %s312
      %p324 = scmp.eq.s32.totalorder %s35, 1
      %p325 = por %p323, %p324
      %p327 = scmp.ne.s32.totalorder %s312, %s326
      %p328 = scmp.eq.s32.totalorder %s35, 0
      %p329 = por %p327, %p328
      %s331 = sadd.s32 %s330, 1
      %p334 = scmp.eq.s32.totalorder %s29, 1
      %p335 = scmp.ne.s32.totalorder %s330, %s332
      %p336 = scmp.eq.s32.totalorder %s29, 0
      %p337 = por %p335, %p336
      %p338 = scmp.ne.s32.totalorder %s330, %s332
      %p339 = scmp.eq.s32.totalorder %s34, 1
      %p340 = por %p338, %p339
      %p341 = scmp.ne.s32.totalorder %s332, %s333
      %p342 = scmp.eq.s32.totalorder %s34, 0
      %p343 = por %p341, %p342
      %p344 = scmp.ne.s32.totalorder %s332, %s333
      %p345 = scmp.eq.s32.totalorder %s35, 1
      %p346 = por %p344, %p345
      %p348 = scmp.ne.s32.totalorder %s333, %s347
      %p349 = scmp.eq.s32.totalorder %s35, 0
      %p350 = por %p348, %p349
      %s352 = sadd.s32 %s351, 1
      %p355 = scmp.eq.s32.totalorder %s29, 1
      %p356 = scmp.ne.s32.totalorder %s351, %s353
      %p357 = scmp.eq.s32.totalorder %s29, 0
      %p358 = por %p356, %p357
      %p359 = scmp.ne.s32.totalorder %s351, %s353
      %p360 = scmp.eq.s32.totalorder %s34, 1
      %p361 = por %p359, %p360
      %p362 = scmp.ne.s32.totalorder %s353, %s354
      %p363 = scmp.eq.s32.totalorder %s34, 0
      %p364 = por %p362, %p363
      %p365 = scmp.ne.s32.totalorder %s353, %s354
      %p366 = scmp.eq.s32.totalorder %s35, 1
      %p367 = por %p365, %p366
      %p369 = scmp.ne.s32.totalorder %s354, %s368
      %p370 = scmp.eq.s32.totalorder %s35, 0
      %p371 = por %p369, %p370
      %s373 = sadd.s32 %s372, 1
      %p376 = scmp.eq.s32.totalorder %s29, 1
      %p377 = scmp.ne.s32.totalorder %s372, %s374
      %p378 = scmp.eq.s32.totalorder %s29, 0
      %p379 = por %p377, %p378
      %p380 = scmp.ne.s32.totalorder %s372, %s374
      %p381 = scmp.eq.s32.totalorder %s34, 1
      %p382 = por %p380, %p381
      %p383 = scmp.ne.s32.totalorder %s374, %s375
      %p384 = scmp.eq.s32.totalorder %s34, 0
      %p385 = por %p383, %p384
      %p386 = scmp.ne.s32.totalorder %s374, %s375
      %p387 = scmp.eq.s32.totalorder %s35, 1
      %p388 = por %p386, %p387
      %p390 = scmp.ne.s32.totalorder %s375, %s389
      %p391 = scmp.eq.s32.totalorder %s35, 0
      %p392 = por %p390, %p391
      %s394 = sadd.s32 %s393, 1
      %p397 = scmp.eq.s32.totalorder %s29, 1
      %p398 = scmp.ne.s32.totalorder %s393, %s395
      %p399 = scmp.eq.s32.totalorder %s29, 0
      %p400 = por %p398, %p399
      %p401 = scmp.ne.s32.totalorder %s393, %s395
      %p402 = scmp.eq.s32.totalorder %s34, 1
      %p403 = por %p401, %p402
      %p404 = scmp.ne.s32.totalorder %s395, %s396
      %p405 = scmp.eq.s32.totalorder %s34, 0
      %p406 = por %p404, %p405
      %p407 = scmp.ne.s32.totalorder %s395, %s396
      %p408 = scmp.eq.s32.totalorder %s35, 1
      %p409 = por %p407, %p408
      %p411 = scmp.ne.s32.totalorder %s396, %s410
      %p412 = scmp.eq.s32.totalorder %s35, 0
      %p413 = por %p411, %p412
      %s415 = sadd.s32 %s414, 1
      %p418 = scmp.eq.s32.totalorder %s29, 1
      %p419 = scmp.ne.s32.totalorder %s414, %s416
      %p420 = scmp.eq.s32.totalorder %s29, 0
      %p421 = por %p419, %p420
      %p422 = scmp.ne.s32.totalorder %s414, %s416
      %p423 = scmp.eq.s32.totalorder %s34, 1
      %p424 = por %p422, %p423
      %p425 = scmp.ne.s32.totalorder %s416, %s417
      %p426 = scmp.eq.s32.totalorder %s34, 0
      %p427 = por %p425, %p426
      %p428 = scmp.ne.s32.totalorder %s416, %s417
      %p429 = scmp.eq.s32.totalorder %s35, 1
      %p430 = por %p428, %p429
      %p432 = scmp.ne.s32.totalorder %s417, %s431
      %p433 = scmp.eq.s32.totalorder %s35, 0
      %p434 = por %p432, %p433
      %s436 = sadd.s32 %s435, 1
      %p439 = scmp.eq.s32.totalorder %s29, 1
      %p440 = scmp.ne.s32.totalorder %s435, %s437
      %p441 = scmp.eq.s32.totalorder %s29, 0
      %p442 = por %p440, %p441
      %p443 = scmp.ne.s32.totalorder %s435, %s437
      %p444 = scmp.eq.s32.totalorder %s34, 1
      %p445 = por %p443, %p444
      %p446 = scmp.ne.s32.totalorder %s437, %s438
      %p447 = scmp.eq.s32.totalorder %s34, 0
      %p448 = por %p446, %p447
      %p449 = scmp.ne.s32.totalorder %s437, %s438
      %p450 = scmp.eq.s32.totalorder %s35, 1
      %p451 = por %p449, %p450
      %p453 = scmp.ne.s32.totalorder %s438, %s452
      %p454 = scmp.eq.s32.totalorder %s35, 0
      %p455 = por %p453, %p454
      %s457 = sadd.s32 %s456, 1
      %p460 = scmp.eq.s32.totalorder %s29, 1
      %p461 = scmp.ne.s32.totalorder %s456, %s458
      %p462 = scmp.eq.s32.totalorder %s29, 0
      %p463 = por %p461, %p462
      %p464 = scmp.ne.s32.totalorder %s456, %s458
      %p465 = scmp.eq.s32.totalorder %s34, 1
      %p466 = por %p464, %p465
      %p467 = scmp.ne.s32.totalorder %s458, %s459
      %p468 = scmp.eq.s32.totalorder %s34, 0
      %p469 = por %p467, %p468
      %p470 = scmp.ne.s32.totalorder %s458, %s459
      %p471 = scmp.eq.s32.totalorder %s35, 1
      %p472 = por %p470, %p471
      %p474 = scmp.ne.s32.totalorder %s459, %s473
      %p475 = scmp.eq.s32.totalorder %s35, 0
      %p476 = por %p474, %p475
      %s477 = ssub.s32 %s29, %s36
      %p478 = scmp.eq.s32.totalorder %s477, 0
      %s480 = sadd.s32 %s479, 1
      %s481 = scalar_select %p478, %s479, %s480
      %p484 = pneg %p478
      %p485 = scmp.eq.s32.totalorder %s29, 1
      %p486 = por %p484, %p485
      %p487 = scmp.ne.s32.totalorder %s479, %s482
      %p488 = scmp.eq.s32.totalorder %s29, 0
      %p489 = por %p487, %p488
      %p490 = scmp.ne.s32.totalorder %s479, %s482
      %p491 = scmp.eq.s32.totalorder %s34, 1
      %p492 = por %p490, %p491
      %p493 = scmp.ne.s32.totalorder %s482, %s483
      %p494 = scmp.eq.s32.totalorder %s34, 0
      %p495 = por %p493, %p494
      %p496 = scmp.ne.s32.totalorder %s482, %s483
      %p497 = scmp.eq.s32.totalorder %s35, 1
      %p498 = por %p496, %p497
      %p500 = scmp.ne.s32.totalorder %s483, %s499
      %p501 = scmp.eq.s32.totalorder %s35, 0
      %p502 = por %p500, %p501
      %p503 = scmp.le.s32.totalorder 1, %s29
      %p504 = scmp.lt.s32.totalorder %s29, 3
      %p505 = pnand %p503, %p504
      %p506 = pneg %p505
      // Predicated region
      $region9: #{message_block_forward.1} parent=5 // pred_check
        _
      $region10: #{message_block_forward.1} parent=5 // pred_check_branch
        %508 = sbr.rel (%p505) target = $region12
      $region11: #{message_block_forward.1} parent=5 // pred_region
        %s509 = ssub.s32 %s29, 1
        // Predicated region
        $region13: #{message_block_forward.1} parent=11 // pred_check
          %p510 = pneg %p154
        $region14: #{message_block_forward.1} parent=11 // pred_check_branch
          %512 = sbr.rel (%p510) target = $region16
        $region15: #{message_block_forward.1} parent=11 // pred_region
          _
        $region16: #{message_block_forward.1} parent=11 // pred_fallthru
          _
        // Predicated region
        $region17: #{message_block_forward.1} parent=11 // pred_check
          %p513 = pneg %p175
        $region18: #{message_block_forward.1} parent=11 // pred_check_branch
          %515 = sbr.rel (%p513) target = $region20
        $region19: #{message_block_forward.1} parent=11 // pred_region
          _
        $region20: #{message_block_forward.1} parent=11 // pred_fallthru
          _
        // Predicated region
        $region21: #{message_block_forward.1} parent=11 // pred_check
          %p516 = pneg %p196
        $region22: #{message_block_forward.1} parent=11 // pred_check_branch
          %518 = sbr.rel (%p516) target = $region24
        $region23: #{message_block_forward.1} parent=11 // pred_region
          _
        $region24: #{message_block_forward.1} parent=11 // pred_fallthru
          _
        // Predicated region
        $region25: #{message_block_forward.1} parent=11 // pred_check
          %p519 = pneg %p217
        $region26: #{message_block_forward.1} parent=11 // pred_check_branch
          %521 = sbr.rel (%p519) target = $region28
        $region27: #{message_block_forward.1} parent=11 // pred_region
          _
        $region28: #{message_block_forward.1} parent=11 // pred_fallthru
          _
        // Predicated region
        $region29: #{message_block_forward.1} parent=11 // pred_check
          %p522 = pneg %p238
        $region30: #{message_block_forward.1} parent=11 // pred_check_branch
          %524 = sbr.rel (%p522) target = $region32
        $region31: #{message_block_forward.1} parent=11 // pred_region
          _
        $region32: #{message_block_forward.1} parent=11 // pred_fallthru
          _
        // Predicated region
        $region33: #{message_block_forward.1} parent=11 // pred_check
          %p525 = pneg %p259
        $region34: #{message_block_forward.1} parent=11 // pred_check_branch
          %527 = sbr.rel (%p525) target = $region36
        $region35: #{message_block_forward.1} parent=11 // pred_region
          _
        $region36: #{message_block_forward.1} parent=11 // pred_fallthru
          _
        // Predicated region
        $region37: #{message_block_forward.1} parent=11 // pred_check
          %p528 = pneg %p280
        $region38: #{message_block_forward.1} parent=11 // pred_check_branch
          %530 = sbr.rel (%p528) target = $region40
        $region39: #{message_block_forward.1} parent=11 // pred_region
          _
        $region40: #{message_block_forward.1} parent=11 // pred_fallthru
          _
        // Predicated region
        $region41: #{message_block_forward.1} parent=11 // pred_check
          %p531 = pneg %p301
        $region42: #{message_block_forward.1} parent=11 // pred_check_branch
          %533 = sbr.rel (%p531) target = $region44
        $region43: #{message_block_forward.1} parent=11 // pred_region
          _
        $region44: #{message_block_forward.1} parent=11 // pred_fallthru
          _
        // Predicated region
        $region45: #{message_block_forward.1} parent=11 // pred_check
          %p534 = pneg %p322
        $region46: #{message_block_forward.1} parent=11 // pred_check_branch
          %536 = sbr.rel (%p534) target = $region48
        $region47: #{message_block_forward.1} parent=11 // pred_region
          _
        $region48: #{message_block_forward.1} parent=11 // pred_fallthru
          _
        // Predicated region
        $region49: #{message_block_forward.1} parent=11 // pred_check
          %p537 = pneg %p343
        $region50: #{message_block_forward.1} parent=11 // pred_check_branch
          %539 = sbr.rel (%p537) target = $region52
        $region51: #{message_block_forward.1} parent=11 // pred_region
          _
        $region52: #{message_block_forward.1} parent=11 // pred_fallthru
          _
        // Predicated region
        $region53: #{message_block_forward.1} parent=11 // pred_check
          %p540 = pneg %p364
        $region54: #{message_block_forward.1} parent=11 // pred_check_branch
          %542 = sbr.rel (%p540) target = $region56
        $region55: #{message_block_forward.1} parent=11 // pred_region
          _
        $region56: #{message_block_forward.1} parent=11 // pred_fallthru
          _
        // Predicated region
        $region57: #{message_block_forward.1} parent=11 // pred_check
          %p543 = pneg %p385
        $region58: #{message_block_forward.1} parent=11 // pred_check_branch
          %545 = sbr.rel (%p543) target = $region60
        $region59: #{message_block_forward.1} parent=11 // pred_region
          _
        $region60: #{message_block_forward.1} parent=11 // pred_fallthru
          _
        // Predicated region
        $region61: #{message_block_forward.1} parent=11 // pred_check
          %p546 = pneg %p406
        $region62: #{message_block_forward.1} parent=11 // pred_check_branch
          %548 = sbr.rel (%p546) target = $region64
        $region63: #{message_block_forward.1} parent=11 // pred_region
          _
        $region64: #{message_block_forward.1} parent=11 // pred_fallthru
          _
        // Predicated region
        $region65: #{message_block_forward.1} parent=11 // pred_check
          %p549 = pneg %p427
        $region66: #{message_block_forward.1} parent=11 // pred_check_branch
          %551 = sbr.rel (%p549) target = $region68
        $region67: #{message_block_forward.1} parent=11 // pred_region
          _
        $region68: #{message_block_forward.1} parent=11 // pred_fallthru
          _
        // Predicated region
        $region69: #{message_block_forward.1} parent=11 // pred_check
          %p552 = pneg %p448
        $region70: #{message_block_forward.1} parent=11 // pred_check_branch
          %554 = sbr.rel (%p552) target = $region72
        $region71: #{message_block_forward.1} parent=11 // pred_region
          _
        $region72: #{message_block_forward.1} parent=11 // pred_fallthru
          _
        // Predicated region
        $region73: #{message_block_forward.1} parent=11 // pred_check
          %p555 = pneg %p469
        $region74: #{message_block_forward.1} parent=11 // pred_check_branch
          %557 = sbr.rel (%p555) target = $region76
        $region75: #{message_block_forward.1} parent=11 // pred_region
          _
        $region76: #{message_block_forward.1} parent=11 // pred_fallthru
          _
      $region12: #{message_block_forward.1} parent=5 // pred_fallthru
        _
      %p558 = scmp.lt.s32.totalorder %s29, 2
      // Predicated region
      $region77: #{message_block_forward.1} parent=5 // pred_check
        %p559 = pneg %p558
      $region78: #{message_block_forward.1} parent=5 // pred_check_branch
        %561 = sbr.rel (%p559) target = $region80
      $region79: #{message_block_forward.1} parent=5 // pred_region
        // Predicated region
        $region81: #{message_block_forward.1} parent=79 // pred_check
          %p562 = pneg %p49
        $region82: #{message_block_forward.1} parent=79 // pred_check_branch
          %564 = sbr.rel (%p562) target = $region84
        $region83: #{message_block_forward.1} parent=79 // pred_region
          %s565 = smul.u32 2, %s29
          %p566 = scmp.lt.s32.totalorder %s565, 3
          %s567 = scalar_select %p566, %s565, 3
          %s568 = smul.addr %s567, 4
          %s569 = smul.addr %s568, 8
          %s570 = scalar_lea.vmem %s0, %s569
          %s571 = smul.u32 2, %s29
        $region84: #{message_block_forward.1} parent=79 // pred_fallthru
          _
        // Predicated region
        $region85: #{message_block_forward.1} parent=79 // pred_check
          %p572 = pneg %p75
        $region86: #{message_block_forward.1} parent=79 // pred_check_branch
          %574 = sbr.rel (%p572) target = $region88
        $region87: #{message_block_forward.1} parent=79 // pred_region
          %s575 = smul.u32 2, %s29
          %p576 = scmp.lt.s32.totalorder %s575, 3
          %s577 = scalar_select %p576, %s575, 3
          %s578 = smul.addr %s577, 8
          %s579 = scalar_lea.vmem %s1, %s578
          %s580 = smul.u32 2, %s29
        $region88: #{message_block_forward.1} parent=79 // pred_fallthru
          _
        // Predicated region
        $region89: #{message_block_forward.1} parent=79 // pred_check
          %p581 = pneg %p101
        $region90: #{message_block_forward.1} parent=79 // pred_check_branch
          %583 = sbr.rel (%p581) target = $region92
        $region91: #{message_block_forward.1} parent=79 // pred_region
          %s584 = smul.u32 2, %s29
          %p585 = scmp.lt.s32.totalorder %s584, 3
          %s586 = scalar_select %p585, %s584, 3
          %s587 = smul.addr %s586, 8
          %s588 = scalar_lea.vmem %s2, %s587
          %s589 = smul.u32 2, %s29
        $region92: #{message_block_forward.1} parent=79 // pred_fallthru
          _
        // Predicated region
        $region93: #{message_block_forward.1} parent=79 // pred_check
          %p590 = pneg %p127
        $region94: #{message_block_forward.1} parent=79 // pred_check_branch
          %592 = sbr.rel (%p590) target = $region96
        $region95: #{message_block_forward.1} parent=79 // pred_region
          %s593 = smul.u32 2, %s29
          %p594 = scmp.lt.s32.totalorder %s593, 3
          %s595 = scalar_select %p594, %s593, 3
          %s596 = smul.addr %s595, 8
          %s597 = scalar_lea.vmem %s3, %s596
          %s598 = smul.u32 2, %s29
        $region96: #{message_block_forward.1} parent=79 // pred_fallthru
          _
      $region80: #{message_block_forward.1} parent=5 // pred_fallthru
        _
      %p599 = scmp.le.s32.totalorder 1, %s29
      %p600 = scmp.lt.s32.totalorder %s29, 3
      %p601 = pnand %p599, %p600
      %p602 = pneg %p601
      // Predicated region
      $region97: #{message_block_forward.1} parent=5 // pred_check
        _
      $region98: #{message_block_forward.1} parent=5 // pred_check_branch
        %604 = sbr.rel (%p601) target = $region100
      $region99: #{message_block_forward.1} parent=5 // pred_region
        %s605 = ssub.s32 %s29, 1
        %s606 = smul.u32 2, %s34
        %p607 = scmp.lt.s32.totalorder %s606, 3
        %s608 = scalar_select %p607, %s606, 3
        %s609 = smul.addr %s608, 4
        %s610 = smul.addr %s609, 8
        %s611 = scalar_lea.vmem %s0, %s610
        %p612 = pneg %p55
        %p613 = pneg %p52
        %s614 = smul.u32 2, %s34
        %p615 = scmp.lt.s32.totalorder %s614, 3
        %s616 = scalar_select %p615, %s614, 3
        %s617 = smul.addr %s616, 8
        %s618 = scalar_lea.vmem %s1, %s617
        %p619 = pneg %p81
        %p620 = pneg %p78
        %s621 = smul.u32 2, %s34
        %p622 = scmp.lt.s32.totalorder %s621, 3
        %s623 = scalar_select %p622, %s621, 3
        %s624 = smul.addr %s623, 8
        %s625 = scalar_lea.vmem %s2, %s624
        %p626 = pneg %p107
        %p627 = pneg %p104
        %s628 = smul.u32 2, %s34
        %p629 = scmp.lt.s32.totalorder %s628, 3
        %s630 = scalar_select %p629, %s628, 3
        %s631 = smul.addr %s630, 8
        %s632 = scalar_lea.vmem %s3, %s631
        %p633 = pneg %p133
        %p634 = pneg %p130
        %p635 = pneg %p154
        %p636 = pneg %p151
        %p637 = pneg %p175
        %p638 = pneg %p172
        %p639 = pneg %p196
        %p640 = pneg %p193
        %p641 = pneg %p217
        %p642 = pneg %p214
        %p643 = pneg %p238
        %p644 = pneg %p235
        %p645 = pneg %p259
        %p646 = pneg %p256
        %p647 = pneg %p280
        %p648 = pneg %p277
        %p649 = pneg %p301
        %p650 = pneg %p298
        %p651 = pneg %p322
        %p652 = pneg %p319
        %p653 = pneg %p343
        %p654 = pneg %p340
        %p655 = pneg %p364
        %p656 = pneg %p361
        %p657 = pneg %p385
        %p658 = pneg %p382
        %p659 = pneg %p406
        %p660 = pneg %p403
        %p661 = pneg %p427
        %p662 = pneg %p424
        %p663 = pneg %p448
        %p664 = pneg %p445
        %p665 = pneg %p469
        %p666 = pneg %p466
        %p667 = pneg %p495
        %p668 = pneg %p492
        %s669 = sand.u32 %s482, 1
        %s670 = scalar_lea.sflag [#allocation3], %s669
        %s671 = sand.u32 %s482, 1
        %s672 = smul.addr %s671, 16
        %s673 = scalar_lea.vmem [#allocation2], %s672
        %s674 = smul.u32 2, %s34
        %p675 = scmp.lt.s32.totalorder %s674, 3
        %s676 = scalar_select %p675, %s674, 3
        %s677 = smul.addr %s676, 4
        %s678 = smul.addr %s677, 8
        %s679 = scalar_lea.vmem %s0, %s678
        %s680 = smul.u32 2, %s34
        %s681 = smul.u32 2, %s34
        %p682 = scmp.lt.s32.totalorder %s681, 3
        %s683 = scalar_select %p682, %s681, 3
        %s684 = smul.addr %s683, 8
        %s685 = scalar_lea.vmem %s1, %s684
        %s686 = smul.u32 2, %s34
        %s687 = smul.u32 2, %s34
        %p688 = scmp.lt.s32.totalorder %s687, 3
        %s689 = scalar_select %p688, %s687, 3
        %s690 = smul.addr %s689, 8
        %s691 = scalar_lea.vmem %s2, %s690
        %s692 = smul.u32 2, %s34
        %s693 = smul.u32 2, %s34
        %p694 = scmp.lt.s32.totalorder %s693, 3
        %s695 = scalar_select %p694, %s693, 3
        %s696 = smul.addr %s695, 8
        %s697 = scalar_lea.vmem %s3, %s696
        %s698 = smul.u32 2, %s34
        %s699 = smul.u32 2, %s34
        %v700 = vld [vmem:[%s679] sm:$0xff]
        %v701 = vld [vmem:[%s679 + $0x8] sm:$0xff]
        %v702 = vld [vmem:[%s679 + $0x10] sm:$0xff]
        %v703 = vld [vmem:[%s679 + $0x18] sm:$0xff]
        %v704 = vld [vmem:[%s679 + $0x20] sm:$0xff]
        %v705 = vld [vmem:[%s679 + $0x28] sm:$0xff]
        %v706 = vld [vmem:[%s679 + $0x30] sm:$0xff]
        %v707 = vld [vmem:[%s679 + $0x38] sm:$0xff]
        %v708 = vld [vmem:[%s4] sm:$0xff]
        %v709 = vld [vmem:[%s4 + $0x8] sm:$0xff]
        %v710 = vld [vmem:[%s4 + $0x10] sm:$0xff]
        %v711 = vld [vmem:[%s4 + $0x18] sm:$0xff]
        %v712 = vld [vmem:[%s4 + $0x20] sm:$0xff]
        %v713 = vld [vmem:[%s4 + $0x28] sm:$0xff]
        %v714 = vld [vmem:[%s4 + $0x30] sm:$0xff]
        %v715 = vld [vmem:[%s4 + $0x38] sm:$0xff]
        %v716 = vld [vmem:[%s4 + $0x40] sm:$0xff]
        %v717 = vld [vmem:[%s4 + $0x48] sm:$0xff]
        %v718 = vld [vmem:[%s4 + $0x50] sm:$0xff]
        %v719 = vld [vmem:[%s4 + $0x58] sm:$0xff]
        %v720 = vld [vmem:[%s4 + $0x60] sm:$0xff]
        %v721 = vld [vmem:[%s4 + $0x68] sm:$0xff]
        %v722 = vld [vmem:[%s4 + $0x70] sm:$0xff]
        %v723 = vld [vmem:[%s4 + $0x78] sm:$0xff]
        %v724 = vld [vmem:[%s4 + $0x80] sm:$0xff]
        %v725 = vld [vmem:[%s4 + $0x88] sm:$0xff]
        %v726 = vld [vmem:[%s4 + $0x90] sm:$0xff]
        %v727 = vld [vmem:[%s4 + $0x98] sm:$0xff]
        %v728 = vld [vmem:[%s4 + $0xa0] sm:$0xff]
        %v729 = vld [vmem:[%s4 + $0xa8] sm:$0xff]
        %v730 = vld [vmem:[%s4 + $0xb0] sm:$0xff]
        %v731 = vld [vmem:[%s4 + $0xb8] sm:$0xff]
        %v732 = vld [vmem:[%s4 + $0xc0] sm:$0xff]
        %v733 = vld [vmem:[%s4 + $0xc8] sm:$0xff]
        %v734 = vld [vmem:[%s4 + $0xd0] sm:$0xff]
        %v735 = vld [vmem:[%s4 + $0xd8] sm:$0xff]
        %v736 = vld [vmem:[%s4 + $0xe0] sm:$0xff]
        %v737 = vld [vmem:[%s4 + $0xe8] sm:$0xff]
        %v738 = vld [vmem:[%s4 + $0xf0] sm:$0xff]
        %v739 = vld [vmem:[%s4 + $0xf8] sm:$0xff]
        %v740 = vld [vmem:[%s4 + $0x100] sm:$0xff]
        %v741 = vld [vmem:[%s4 + $0x108] sm:$0xff]
        %v742 = vld [vmem:[%s4 + $0x110] sm:$0xff]
        %v743 = vld [vmem:[%s4 + $0x118] sm:$0xff]
        %v744 = vld [vmem:[%s4 + $0x120] sm:$0xff]
        %v745 = vld [vmem:[%s4 + $0x128] sm:$0xff]
        %v746 = vld [vmem:[%s4 + $0x130] sm:$0xff]
        %v747 = vld [vmem:[%s4 + $0x138] sm:$0xff]
        %v748 = vld [vmem:[%s4 + $0x140] sm:$0xff]
        %v749 = vld [vmem:[%s4 + $0x148] sm:$0xff]
        %v750 = vld [vmem:[%s4 + $0x150] sm:$0xff]
        %v751 = vld [vmem:[%s4 + $0x158] sm:$0xff]
        %v752 = vld [vmem:[%s4 + $0x160] sm:$0xff]
        %v753 = vld [vmem:[%s4 + $0x168] sm:$0xff]
        %v754 = vld [vmem:[%s4 + $0x170] sm:$0xff]
        %v755 = vld [vmem:[%s4 + $0x178] sm:$0xff]
        %v756 = vld [vmem:[%s4 + $0x180] sm:$0xff]
        %v757 = vld [vmem:[%s4 + $0x188] sm:$0xff]
        %v758 = vld [vmem:[%s4 + $0x190] sm:$0xff]
        %v759 = vld [vmem:[%s4 + $0x198] sm:$0xff]
        %v760 = vld [vmem:[%s4 + $0x1a0] sm:$0xff]
        %v761 = vld [vmem:[%s4 + $0x1a8] sm:$0xff]
        %v762 = vld [vmem:[%s4 + $0x1b0] sm:$0xff]
        %v763 = vld [vmem:[%s4 + $0x1b8] sm:$0xff]
        %v764 = vld [vmem:[%s4 + $0x1c0] sm:$0xff]
        %v765 = vld [vmem:[%s4 + $0x1c8] sm:$0xff]
        %v766 = vld [vmem:[%s4 + $0x1d0] sm:$0xff]
        %v767 = vld [vmem:[%s4 + $0x1d8] sm:$0xff]
        %v768 = vld [vmem:[%s4 + $0x1e0] sm:$0xff]
        %v769 = vld [vmem:[%s4 + $0x1e8] sm:$0xff]
        %v770 = vld [vmem:[%s4 + $0x1f0] sm:$0xff]
        %v771 = vld [vmem:[%s4 + $0x1f8] sm:$0xff]
        %v772 = vld [vmem:[%s4 + $0x200] sm:$0xff]
        %v773 = vld [vmem:[%s4 + $0x208] sm:$0xff]
        %v774 = vld [vmem:[%s4 + $0x210] sm:$0xff]
        %v775 = vld [vmem:[%s4 + $0x218] sm:$0xff]
        %v776 = vld [vmem:[%s4 + $0x220] sm:$0xff]
        %v777 = vld [vmem:[%s4 + $0x228] sm:$0xff]
        %v778 = vld [vmem:[%s4 + $0x230] sm:$0xff]
        %v779 = vld [vmem:[%s4 + $0x238] sm:$0xff]
        %v780 = vld [vmem:[%s4 + $0x240] sm:$0xff]
        %v781 = vld [vmem:[%s4 + $0x248] sm:$0xff]
        %v782 = vld [vmem:[%s4 + $0x250] sm:$0xff]
        %v783 = vld [vmem:[%s4 + $0x258] sm:$0xff]
        %v784 = vld [vmem:[%s4 + $0x260] sm:$0xff]
        %v785 = vld [vmem:[%s4 + $0x268] sm:$0xff]
        %v786 = vld [vmem:[%s4 + $0x270] sm:$0xff]
        %v787 = vld [vmem:[%s4 + $0x278] sm:$0xff]
        %v788 = vld [vmem:[%s4 + $0x280] sm:$0xff]
        %v789 = vld [vmem:[%s4 + $0x288] sm:$0xff]
        %v790 = vld [vmem:[%s4 + $0x290] sm:$0xff]
        %v791 = vld [vmem:[%s4 + $0x298] sm:$0xff]
        %v792 = vld [vmem:[%s4 + $0x2a0] sm:$0xff]
        %v793 = vld [vmem:[%s4 + $0x2a8] sm:$0xff]
        %v794 = vld [vmem:[%s4 + $0x2b0] sm:$0xff]
        %v795 = vld [vmem:[%s4 + $0x2b8] sm:$0xff]
        %v796 = vld [vmem:[%s4 + $0x2c0] sm:$0xff]
        %v797 = vld [vmem:[%s4 + $0x2c8] sm:$0xff]
        %v798 = vld [vmem:[%s4 + $0x2d0] sm:$0xff]
        %v799 = vld [vmem:[%s4 + $0x2d8] sm:$0xff]
        %v800 = vld [vmem:[%s4 + $0x2e0] sm:$0xff]
        %v801 = vld [vmem:[%s4 + $0x2e8] sm:$0xff]
        %v802 = vld [vmem:[%s4 + $0x2f0] sm:$0xff]
        %v803 = vld [vmem:[%s4 + $0x2f8] sm:$0xff]
        %v804 = vld [vmem:[%s4 + $0x300] sm:$0xff]
        %v805 = vld [vmem:[%s4 + $0x308] sm:$0xff]
        %v806 = vld [vmem:[%s4 + $0x310] sm:$0xff]
        %v807 = vld [vmem:[%s4 + $0x318] sm:$0xff]
        %v808 = vld [vmem:[%s4 + $0x320] sm:$0xff]
        %v809 = vld [vmem:[%s4 + $0x328] sm:$0xff]
        %v810 = vld [vmem:[%s4 + $0x330] sm:$0xff]
        %v811 = vld [vmem:[%s4 + $0x338] sm:$0xff]
        %v812 = vld [vmem:[%s4 + $0x340] sm:$0xff]
        %v813 = vld [vmem:[%s4 + $0x348] sm:$0xff]
        %v814 = vld [vmem:[%s4 + $0x350] sm:$0xff]
        %v815 = vld [vmem:[%s4 + $0x358] sm:$0xff]
        %v816 = vld [vmem:[%s4 + $0x360] sm:$0xff]
        %v817 = vld [vmem:[%s4 + $0x368] sm:$0xff]
        %v818 = vld [vmem:[%s4 + $0x370] sm:$0xff]
        %v819 = vld [vmem:[%s4 + $0x378] sm:$0xff]
        %v820 = vld [vmem:[%s4 + $0x380] sm:$0xff]
        %v821 = vld [vmem:[%s4 + $0x388] sm:$0xff]
        %v822 = vld [vmem:[%s4 + $0x390] sm:$0xff]
        %v823 = vld [vmem:[%s4 + $0x398] sm:$0xff]
        %v824 = vld [vmem:[%s4 + $0x3a0] sm:$0xff]
        %v825 = vld [vmem:[%s4 + $0x3a8] sm:$0xff]
        %v826 = vld [vmem:[%s4 + $0x3b0] sm:$0xff]
        %v827 = vld [vmem:[%s4 + $0x3b8] sm:$0xff]
        %v828 = vld [vmem:[%s4 + $0x3c0] sm:$0xff]
        %v829 = vld [vmem:[%s4 + $0x3c8] sm:$0xff]
        %v830 = vld [vmem:[%s4 + $0x3d0] sm:$0xff]
        %v831 = vld [vmem:[%s4 + $0x3d8] sm:$0xff]
        %v832 = vld [vmem:[%s4 + $0x3e0] sm:$0xff]
        %v833 = vld [vmem:[%s4 + $0x3e8] sm:$0xff]
        %v834 = vld [vmem:[%s4 + $0x3f0] sm:$0xff]
        %v835 = vld [vmem:[%s4 + $0x3f8] sm:$0xff]
        %v836 = vld [vmem:[%s19] sm:$0x3]
        %v838 = vlaneseq
        %v839 = vshrl.u32 %v838, 7
        %v840 = vsub.s32 0, %v839
        %v841 = vrot.slane %v836, %v840
        %v842 = vlaneseq
        %v843 = vshrl.u32 %v842, 7
        %v844 = vsub.s32 1, %v843
        %v845 = vrot.slane %v836, %v844
        %848 = vmatprep.subr.mxu0 %v709
        %849 = vmatpush1.msra.mxu0 %v708
        %850 = vmatprep.subr.mxu0 %v711
        %851 = vmatpush1.msra.mxu0 %v710
        %852 = vmatprep.subr.mxu0 %v713
        %853 = vmatpush1.msra.mxu0 %v712
        %854 = vmatprep.subr.mxu0 %v715
        %855 = vmatpush1.msra.mxu0 %v714
        %856 = vmatprep.subr.mxu0 %v717
        %857 = vmatpush1.msra.mxu0 %v716
        %858 = vmatprep.subr.mxu0 %v719
        %859 = vmatpush1.msra.mxu0 %v718
        %860 = vmatprep.subr.mxu0 %v721
        %861 = vmatpush1.msra.mxu0 %v720
        %862 = vmatprep.subr.mxu0 %v723
        %863 = vmatpush1.msra.mxu0 %v722
        %864 = vmatprep.subr.mxu0 %v725
        %865 = vmatpush1.msra.mxu0 %v724
        %866 = vmatprep.subr.mxu0 %v727
        %867 = vmatpush1.msra.mxu0 %v726
        %868 = vmatprep.subr.mxu0 %v729
        %869 = vmatpush1.msra.mxu0 %v728
        %870 = vmatprep.subr.mxu0 %v731
        %871 = vmatpush1.msra.mxu0 %v730
        %872 = vmatprep.subr.mxu0 %v733
        %873 = vmatpush1.msra.mxu0 %v732
        %874 = vmatprep.subr.mxu0 %v735
        %875 = vmatpush1.msra.mxu0 %v734
        %876 = vmatprep.subr.mxu0 %v737
        %877 = vmatpush1.msra.mxu0 %v736
        %878 = vmatprep.subr.mxu0 %v739
        %879 = vmatpush1.msra.mxu0 %v738
        %880 = vmatprep.subr.mxu0 %v741
        %881 = vmatpush1.msra.mxu0 %v740
        %882 = vmatprep.subr.mxu0 %v743
        %883 = vmatpush1.msra.mxu0 %v742
        %884 = vmatprep.subr.mxu0 %v745
        %885 = vmatpush1.msra.mxu0 %v744
        %886 = vmatprep.subr.mxu0 %v747
        %887 = vmatpush1.msra.mxu0 %v746
        %888 = vmatprep.subr.mxu0 %v749
        %889 = vmatpush1.msra.mxu0 %v748
        %890 = vmatprep.subr.mxu0 %v751
        %891 = vmatpush1.msra.mxu0 %v750
        %892 = vmatprep.subr.mxu0 %v753
        %893 = vmatpush1.msra.mxu0 %v752
        %894 = vmatprep.subr.mxu0 %v755
        %895 = vmatpush1.msra.mxu0 %v754
        %896 = vmatprep.subr.mxu0 %v757
        %897 = vmatpush1.msra.mxu0 %v756
        %898 = vmatprep.subr.mxu0 %v759
        %899 = vmatpush1.msra.mxu0 %v758
        %900 = vmatprep.subr.mxu0 %v761
        %901 = vmatpush1.msra.mxu0 %v760
        %902 = vmatprep.subr.mxu0 %v763
        %903 = vmatpush1.msra.mxu0 %v762
        %904 = vmatprep.subr.mxu0 %v765
        %905 = vmatpush1.msra.mxu0 %v764
        %906 = vmatprep.subr.mxu0 %v767
        %907 = vmatpush1.msra.mxu0 %v766
        %908 = vmatprep.subr.mxu0 %v769
        %909 = vmatpush1.msra.mxu0 %v768
        %910 = vmatprep.subr.mxu0 %v771
        %911 = vmatpush1.msra.mxu0 %v770
        %912 = vmatprep.mubr.f32.mxu0 %v701
        %913 = vmatmul.mubr.f32.gmra.mrb[0].mxu0 %v700
        %v914 = vpop.f32.mrb[0].mxu0
        %v915 = vadd.f32 %v841, %v914
        %v916 = vpop.f32.mrb[0].mxu0
        %v917 = vadd.f32 %v845, %v916
        %918 = vmatprep.mubr.f32.mxu0 %v705
        %919 = vmatmul.mubr.f32.gmra.mrb[0].mxu0 %v704
        %v920 = vpop.f32.mrb[0].mxu0
        %v921 = vadd.f32 %v841, %v920
        %v922 = vpop.f32.mrb[0].mxu0
        %v923 = vadd.f32 %v845, %v922
        %924 = vdwg.mxu0
        %925 = vmatprep.subr.mxu0 %v773
        %926 = vmatpush1.msra.mxu0 %v772
        %927 = vmatprep.subr.mxu0 %v775
        %928 = vmatpush1.msra.mxu0 %v774
        %929 = vmatprep.subr.mxu0 %v777
        %930 = vmatpush1.msra.mxu0 %v776
        %931 = vmatprep.subr.mxu0 %v779
        %932 = vmatpush1.msra.mxu0 %v778
        %933 = vmatprep.subr.mxu0 %v781
        %934 = vmatpush1.msra.mxu0 %v780
        %935 = vmatprep.subr.mxu0 %v783
        %936 = vmatpush1.msra.mxu0 %v782
        %937 = vmatprep.subr.mxu0 %v785
        %938 = vmatpush1.msra.mxu0 %v784
        %939 = vmatprep.subr.mxu0 %v787
        %940 = vmatpush1.msra.mxu0 %v786
        %941 = vmatprep.subr.mxu0 %v789
        %942 = vmatpush1.msra.mxu0 %v788
        %943 = vmatprep.subr.mxu0 %v791
        %944 = vmatpush1.msra.mxu0 %v790
        %945 = vmatprep.subr.mxu0 %v793
        %946 = vmatpush1.msra.mxu0 %v792
        %947 = vmatprep.subr.mxu0 %v795
        %948 = vmatpush1.msra.mxu0 %v794
        %949 = vmatprep.subr.mxu0 %v797
        %950 = vmatpush1.msra.mxu0 %v796
        %951 = vmatprep.subr.mxu0 %v799
        %952 = vmatpush1.msra.mxu0 %v798
        %953 = vmatprep.subr.mxu0 %v801
        %954 = vmatpush1.msra.mxu0 %v800
        %955 = vmatprep.subr.mxu0 %v803
        %956 = vmatpush1.msra.mxu0 %v802
        %957 = vmatprep.subr.mxu0 %v805
        %958 = vmatpush1.msra.mxu0 %v804
        %959 = vmatprep.subr.mxu0 %v807
        %960 = vmatpush1.msra.mxu0 %v806
        %961 = vmatprep.subr.mxu0 %v809
        %962 = vmatpush1.msra.mxu0 %v808
        %963 = vmatprep.subr.mxu0 %v811
        %964 = vmatpush1.msra.mxu0 %v810
        %965 = vmatprep.subr.mxu0 %v813
        %966 = vmatpush1.msra.mxu0 %v812
        %967 = vmatprep.subr.mxu0 %v815
        %968 = vmatpush1.msra.mxu0 %v814
        %969 = vmatprep.subr.mxu0 %v817
        %970 = vmatpush1.msra.mxu0 %v816
        %971 = vmatprep.subr.mxu0 %v819
        %972 = vmatpush1.msra.mxu0 %v818
        %973 = vmatprep.subr.mxu0 %v821
        %974 = vmatpush1.msra.mxu0 %v820
        %975 = vmatprep.subr.mxu0 %v823
        %976 = vmatpush1.msra.mxu0 %v822
        %977 = vmatprep.subr.mxu0 %v825
        %978 = vmatpush1.msra.mxu0 %v824
        %979 = vmatprep.subr.mxu0 %v827
        %980 = vmatpush1.msra.mxu0 %v826
        %981 = vmatprep.subr.mxu0 %v829
        %982 = vmatpush1.msra.mxu0 %v828
        %983 = vmatprep.subr.mxu0 %v831
        %984 = vmatpush1.msra.mxu0 %v830
        %985 = vmatprep.subr.mxu0 %v833
        %986 = vmatpush1.msra.mxu0 %v832
        %987 = vmatprep.subr.mxu0 %v835
        %988 = vmatpush1.msra.mxu0 %v834
        %989 = vmatprep.mubr.f32.mxu0 %v703
        %990 = vmatmul.mubr.f32.gmra.mrb[0].mxu0 %v702
        %v991 = vpop.f32.mrb[0].mxu0
        %v992 = vadd.f32 %v915, %v991
        %v993 = vpop.f32.mrb[0].mxu0
        %v994 = vadd.f32 %v917, %v993
        %995 = vmatprep.mubr.f32.mxu0 %v707
        %996 = vmatmul.mubr.f32.gmra.mrb[0].mxu0 %v706
        %v997 = vpop.f32.mrb[0].mxu0
        %v998 = vadd.f32 %v921, %v997
        %v999 = vpop.f32.mrb[0].mxu0
        %v1000 = vadd.f32 %v923, %v999
        %1001 = vdwg.mxu0
        %v1002 = vxor.u32 %v992, 2147483648
        %v1003 = vxor.u32 %v994, 2147483648
        %v1004 = vxor.u32 %v998, 2147483648
        %v1005 = vxor.u32 %v1000, 2147483648
        %v1006 = vmul.f32 %v1002, 1.442695
        %v1007 = vpow.pop %v1006
        %v1008 = vmul.f32 %v1003, 1.442695
        %v1009 = vpow.pop %v1008
        %v1010 = vmul.f32 %v1004, 1.442695
        %v1011 = vpow.pop %v1010
        %v1012 = vmul.f32 %v1005, 1.442695
        %v1013 = vpow.pop %v1012
        %v1014 = vadd.f32 %v1007, 1.0
        %v1015 = vadd.f32 %v1009, 1.0
        %v1016 = vadd.f32 %v1011, 1.0
        %v1017 = vadd.f32 %v1013, 1.0
        %v1018 = vrcp.pop %v1014
        %v1019 = vmul.f32 1.0, %v1018
        %v1020 = vrcp.pop %v1015
        %v1021 = vmul.f32 1.0, %v1020
        %v1022 = vrcp.pop %v1016
        %v1023 = vmul.f32 1.0, %v1022
        %v1024 = vrcp.pop %v1017
        %v1025 = vmul.f32 1.0, %v1024
        %v1026 = vmul.f32 %v992, %v1019
        %v1027 = vmul.f32 %v994, %v1021
        %v1028 = vmul.f32 %v998, %v1023
        %v1029 = vmul.f32 %v1000, %v1025
        %v1030 = vld [vmem:[%s5] sm:$0xff]
        %v1031 = vld [vmem:[%s5 + $0x8] sm:$0xff]
        %v1032 = vld [vmem:[%s5 + $0x10] sm:$0xff]
        %v1033 = vld [vmem:[%s5 + $0x18] sm:$0xff]
        %v1034 = vld [vmem:[%s5 + $0x20] sm:$0xff]
        %v1035 = vld [vmem:[%s5 + $0x28] sm:$0xff]
        %v1036 = vld [vmem:[%s5 + $0x30] sm:$0xff]
        %v1037 = vld [vmem:[%s5 + $0x38] sm:$0xff]
        %v1038 = vld [vmem:[%s5 + $0x40] sm:$0xff]
        %v1039 = vld [vmem:[%s5 + $0x48] sm:$0xff]
        %v1040 = vld [vmem:[%s5 + $0x50] sm:$0xff]
        %v1041 = vld [vmem:[%s5 + $0x58] sm:$0xff]
        %v1042 = vld [vmem:[%s5 + $0x60] sm:$0xff]
        %v1043 = vld [vmem:[%s5 + $0x68] sm:$0xff]
        %v1044 = vld [vmem:[%s5 + $0x70] sm:$0xff]
        %v1045 = vld [vmem:[%s5 + $0x78] sm:$0xff]
        %v1046 = vld [vmem:[%s5 + $0x80] sm:$0xff]
        %v1047 = vld [vmem:[%s5 + $0x88] sm:$0xff]
        %v1048 = vld [vmem:[%s5 + $0x90] sm:$0xff]
        %v1049 = vld [vmem:[%s5 + $0x98] sm:$0xff]
        %v1050 = vld [vmem:[%s5 + $0xa0] sm:$0xff]
        %v1051 = vld [vmem:[%s5 + $0xa8] sm:$0xff]
        %v1052 = vld [vmem:[%s5 + $0xb0] sm:$0xff]
        %v1053 = vld [vmem:[%s5 + $0xb8] sm:$0xff]
        %v1054 = vld [vmem:[%s5 + $0xc0] sm:$0xff]
        %v1055 = vld [vmem:[%s5 + $0xc8] sm:$0xff]
        %v1056 = vld [vmem:[%s5 + $0xd0] sm:$0xff]
        %v1057 = vld [vmem:[%s5 + $0xd8] sm:$0xff]
        %v1058 = vld [vmem:[%s5 + $0xe0] sm:$0xff]
        %v1059 = vld [vmem:[%s5 + $0xe8] sm:$0xff]
        %v1060 = vld [vmem:[%s5 + $0xf0] sm:$0xff]
        %v1061 = vld [vmem:[%s5 + $0xf8] sm:$0xff]
        %1062 = vmatprep.subr.mxu0 0.0
        %1063 = vmatpush1.msra.mxu0 %v1030
        %1064 = vmatprep.subr.mxu0 0.0
        %1065 = vmatpush1.msra.mxu0 %v1031
        %1066 = vmatprep.subr.mxu0 0.0
        %1067 = vmatpush1.msra.mxu0 %v1032
        %1068 = vmatprep.subr.mxu0 0.0
        %1069 = vmatpush1.msra.mxu0 %v1033
        %1070 = vmatprep.subr.mxu0 0.0
        %1071 = vmatpush1.msra.mxu0 %v1034
        %1072 = vmatprep.subr.mxu0 0.0
        %1073 = vmatpush1.msra.mxu0 %v1035
        %1074 = vmatprep.subr.mxu0 0.0
        %1075 = vmatpush1.msra.mxu0 %v1036
        %1076 = vmatprep.subr.mxu0 0.0
        %1077 = vmatpush1.msra.mxu0 %v1037
        %1078 = vmatprep.subr.mxu0 0.0
        %1079 = vmatpush1.msra.mxu0 %v1038
        %1080 = vmatprep.subr.mxu0 0.0
        %1081 = vmatpush1.msra.mxu0 %v1039
        %1082 = vmatprep.subr.mxu0 0.0
        %1083 = vmatpush1.msra.mxu0 %v1040
        %1084 = vmatprep.subr.mxu0 0.0
        %1085 = vmatpush1.msra.mxu0 %v1041
        %1086 = vmatprep.subr.mxu0 0.0
        %1087 = vmatpush1.msra.mxu0 %v1042
        %1088 = vmatprep.subr.mxu0 0.0
        %1089 = vmatpush1.msra.mxu0 %v1043
        %1090 = vmatprep.subr.mxu0 0.0
        %1091 = vmatpush1.msra.mxu0 %v1044
        %1092 = vmatprep.subr.mxu0 0.0
        %1093 = vmatpush1.msra.mxu0 %v1045
        %1094 = vmatprep.subr.mxu0 0.0
        %1095 = vmatpush1.msra.mxu0 %v1046
        %1096 = vmatprep.subr.mxu0 0.0
        %1097 = vmatpush1.msra.mxu0 %v1047
        %1098 = vmatprep.subr.mxu0 0.0
        %1099 = vmatpush1.msra.mxu0 %v1048
        %1100 = vmatprep.subr.mxu0 0.0
        %1101 = vmatpush1.msra.mxu0 %v1049
        %1102 = vmatprep.subr.mxu0 0.0
        %1103 = vmatpush1.msra.mxu0 %v1050
        %1104 = vmatprep.subr.mxu0 0.0
        %1105 = vmatpush1.msra.mxu0 %v1051
        %1106 = vmatprep.subr.mxu0 0.0
        %1107 = vmatpush1.msra.mxu0 %v1052
        %1108 = vmatprep.subr.mxu0 0.0
        %1109 = vmatpush1.msra.mxu0 %v1053
        %1110 = vmatprep.subr.mxu0 0.0
        %1111 = vmatpush1.msra.mxu0 %v1054
        %1112 = vmatprep.subr.mxu0 0.0
        %1113 = vmatpush1.msra.mxu0 %v1055
        %1114 = vmatprep.subr.mxu0 0.0
        %1115 = vmatpush1.msra.mxu0 %v1056
        %1116 = vmatprep.subr.mxu0 0.0
        %1117 = vmatpush1.msra.mxu0 %v1057
        %1118 = vmatprep.subr.mxu0 0.0
        %1119 = vmatpush1.msra.mxu0 %v1058
        %1120 = vmatprep.subr.mxu0 0.0
        %1121 = vmatpush1.msra.mxu0 %v1059
        %1122 = vmatprep.subr.mxu0 0.0
        %1123 = vmatpush1.msra.mxu0 %v1060
        %1124 = vmatprep.subr.mxu0 0.0
        %1125 = vmatpush1.msra.mxu0 %v1061
        %1126 = vmatprep.mubr.f32.mxu0 %v1027
        %1127 = vmatmul.mubr.f32.gmra.mrb[0].mxu0 %v1026
        %v1128 = vpop.f32.mrb[0].mxu0
        %v1129 = vadd.f32 0.0, %v1128
        %v1130 = vpop.f32.mrb[0].mxu0
        %1131 = vmatprep.mubr.f32.mxu0 %v1029
        %1132 = vmatmul.mubr.f32.gmra.mrb[0].mxu0 %v1028
        %v1133 = vpop.f32.mrb[0].mxu0
        %v1134 = vadd.f32 0.0, %v1133
        %v1135 = vpop.f32.mrb[0].mxu0
        %1136 = vdwg.mxu0
        %v1137 = vld [vmem:[%s6] sm:$0xff]
        %v1138 = vld [vmem:[%s6 + $0x8] sm:$0xff]
        %v1139 = vld [vmem:[%s6 + $0x10] sm:$0xff]
        %v1140 = vld [vmem:[%s6 + $0x18] sm:$0xff]
        %vm1141 = vcmask 261120
        %v1143 = vsel %vm1141, %v1129, 0
        %v1146 = vsel %vm1141, %v1134, 0
        %1148 = vmatprep.subr.mxu0 0.0
        %1149 = vmatpush1.msra.mxu0 %v1137
        %1150 = vmatprep.subr.mxu0 0.0
        %1151 = vmatpush1.msra.mxu0 %v1138
        %1152 = vmatprep.subr.mxu0 0.0
        %1153 = vmatpush1.msra.mxu0 %v1139
        %1154 = vmatprep.subr.mxu0 0.0
        %1155 = vmatpush1.msra.mxu0 %v1140
        %1156 = vmatprep.subr.mxu0 0.0
        %1157 = vmatpush1.msra.mxu0 0.0
        %1158 = vmatprep.subr.mxu0 0.0
        %1159 = vmatpush1.msra.mxu0 0.0
        %1160 = vmatprep.subr.mxu0 0.0
        %1161 = vmatpush1.msra.mxu0 0.0
        %1162 = vmatprep.subr.mxu0 0.0
        %1163 = vmatpush1.msra.mxu0 0.0
        %1164 = vmatprep.subr.mxu0 0.0
        %1165 = vmatpush1.msra.mxu0 0.0
        %1166 = vmatprep.subr.mxu0 0.0
        %1167 = vmatpush1.msra.mxu0 0.0
        %1168 = vmatprep.subr.mxu0 0.0
        %1169 = vmatpush1.msra.mxu0 0.0
        %1170 = vmatprep.subr.mxu0 0.0
        %1171 = vmatpush1.msra.mxu0 0.0
        %1172 = vmatprep.subr.mxu0 0.0
        %1173 = vmatpush1.msra.mxu0 0.0
        %1174 = vmatprep.subr.mxu0 0.0
        %1175 = vmatpush1.msra.mxu0 0.0
        %1176 = vmatprep.subr.mxu0 0.0
        %1177 = vmatpush1.msra.mxu0 0.0
        %1178 = vmatprep.subr.mxu0 0.0
        %1179 = vmatpush1.msra.mxu0 0.0
        %1180 = vmatprep.subr.mxu0 0.0
        %1181 = vmatpush1.msra.mxu0 0.0
        %1182 = vmatprep.subr.mxu0 0.0
        %1183 = vmatpush1.msra.mxu0 0.0
        %1184 = vmatprep.subr.mxu0 0.0
        %1185 = vmatpush1.msra.mxu0 0.0
        %1186 = vmatprep.subr.mxu0 0.0
        %1187 = vmatpush1.msra.mxu0 0.0
        %1188 = vmatprep.subr.mxu0 0.0
        %1189 = vmatpush1.msra.mxu0 0.0
        %1190 = vmatprep.subr.mxu0 0.0
        %1191 = vmatpush1.msra.mxu0 0.0
        %1192 = vmatprep.subr.mxu0 0.0
        %1193 = vmatpush1.msra.mxu0 0.0
        %1194 = vmatprep.subr.mxu0 0.0
        %1195 = vmatpush1.msra.mxu0 0.0
        %1196 = vmatprep.subr.mxu0 0.0
        %1197 = vmatpush1.msra.mxu0 0.0
        %1198 = vmatprep.subr.mxu0 0.0
        %1199 = vmatpush1.msra.mxu0 0.0
        %1200 = vmatprep.subr.mxu0 0.0
        %1201 = vmatpush1.msra.mxu0 0.0
        %1202 = vmatprep.subr.mxu0 0.0
        %1203 = vmatpush1.msra.mxu0 0.0
        %1204 = vmatprep.subr.mxu0 0.0
        %1205 = vmatpush1.msra.mxu0 0.0
        %1206 = vmatprep.subr.mxu0 0.0
        %1207 = vmatpush1.msra.mxu0 0.0
        %1208 = vmatprep.subr.mxu0 0.0
        %1209 = vmatpush1.msra.mxu0 0.0
        %1210 = vmatprep.subr.mxu0 0.0
        %1211 = vmatpush1.msra.mxu0 0.0
        %1212 = vmatprep.mubr.f32.mxu0 0.0
        %1213 = vmatmul.mubr.f32.gmra.mrb[0].mxu0 %v1143
        %v1214 = vpop.f32.mrb[0].mxu0
        %v1215 = vadd.f32 0.0, %v1214
        %v1216 = vpop.f32.mrb[0].mxu0
        %1217 = vmatprep.mubr.f32.mxu0 0.0
        %1218 = vmatmul.mubr.f32.gmra.mrb[0].mxu0 %v1146
        %v1219 = vpop.f32.mrb[0].mxu0
        %v1220 = vadd.f32 0.0, %v1219
        %v1221 = vpop.f32.mrb[0].mxu0
        %1222 = vdwg.mxu0
        %v1223 = vsub.f32 %v1129, %v1215
        %v1224 = vsub.f32 %v1134, %v1220
        %v1225 = vmul.f32 %v1223, %v1223
        %v1226 = vmul.f32 %v1224, %v1224
        %v1228 = vsel %vm1141, %v1225, 0
        %v1231 = vsel %vm1141, %v1226, 0
        %1233 = vmatprep.subr.mxu0 0.0
        %1234 = vmatpush1.msra.mxu0 %v1137
        %1235 = vmatprep.subr.mxu0 0.0
        %1236 = vmatpush1.msra.mxu0 %v1138
        %1237 = vmatprep.subr.mxu0 0.0
        %1238 = vmatpush1.msra.mxu0 %v1139
        %1239 = vmatprep.subr.mxu0 0.0
        %1240 = vmatpush1.msra.mxu0 %v1140
        %1241 = vmatprep.subr.mxu0 0.0
        %1242 = vmatpush1.msra.mxu0 0.0
        %1243 = vmatprep.subr.mxu0 0.0
        %1244 = vmatpush1.msra.mxu0 0.0
        %1245 = vmatprep.subr.mxu0 0.0
        %1246 = vmatpush1.msra.mxu0 0.0
        %1247 = vmatprep.subr.mxu0 0.0
        %1248 = vmatpush1.msra.mxu0 0.0
        %1249 = vmatprep.subr.mxu0 0.0
        %1250 = vmatpush1.msra.mxu0 0.0
        %1251 = vmatprep.subr.mxu0 0.0
        %1252 = vmatpush1.msra.mxu0 0.0
        %1253 = vmatprep.subr.mxu0 0.0
        %1254 = vmatpush1.msra.mxu0 0.0
        %1255 = vmatprep.subr.mxu0 0.0
        %1256 = vmatpush1.msra.mxu0 0.0
        %1257 = vmatprep.subr.mxu0 0.0
        %1258 = vmatpush1.msra.mxu0 0.0
        %1259 = vmatprep.subr.mxu0 0.0
        %1260 = vmatpush1.msra.mxu0 0.0
        %1261 = vmatprep.subr.mxu0 0.0
        %1262 = vmatpush1.msra.mxu0 0.0
        %1263 = vmatprep.subr.mxu0 0.0
        %1264 = vmatpush1.msra.mxu0 0.0
        %1265 = vmatprep.subr.mxu0 0.0
        %1266 = vmatpush1.msra.mxu0 0.0
        %1267 = vmatprep.subr.mxu0 0.0
        %1268 = vmatpush1.msra.mxu0 0.0
        %1269 = vmatprep.subr.mxu0 0.0
        %1270 = vmatpush1.msra.mxu0 0.0
        %1271 = vmatprep.subr.mxu0 0.0
        %1272 = vmatpush1.msra.mxu0 0.0
        %1273 = vmatprep.subr.mxu0 0.0
        %1274 = vmatpush1.msra.mxu0 0.0
        %1275 = vmatprep.subr.mxu0 0.0
        %1276 = vmatpush1.msra.mxu0 0.0
        %1277 = vmatprep.subr.mxu0 0.0
        %1278 = vmatpush1.msra.mxu0 0.0
        %1279 = vmatprep.subr.mxu0 0.0
        %1280 = vmatpush1.msra.mxu0 0.0
        %1281 = vmatprep.subr.mxu0 0.0
        %1282 = vmatpush1.msra.mxu0 0.0
        %1283 = vmatprep.subr.mxu0 0.0
        %1284 = vmatpush1.msra.mxu0 0.0
        %1285 = vmatprep.subr.mxu0 0.0
        %1286 = vmatpush1.msra.mxu0 0.0
        %1287 = vmatprep.subr.mxu0 0.0
        %1288 = vmatpush1.msra.mxu0 0.0
        %1289 = vmatprep.subr.mxu0 0.0
        %1290 = vmatpush1.msra.mxu0 0.0
        %1291 = vmatprep.subr.mxu0 0.0
        %1292 = vmatpush1.msra.mxu0 0.0
        %1293 = vmatprep.subr.mxu0 0.0
        %1294 = vmatpush1.msra.mxu0 0.0
        %1295 = vmatprep.subr.mxu0 0.0
        %1296 = vmatpush1.msra.mxu0 0.0
        %1297 = vmatprep.mubr.f32.mxu0 0.0
        %1298 = vmatmul.mubr.f32.gmra.mrb[0].mxu0 %v1228
        %v1299 = vpop.f32.mrb[0].mxu0
        %v1300 = vadd.f32 1e-05, %v1299
        %v1301 = vpop.f32.mrb[0].mxu0
        %1302 = vmatprep.mubr.f32.mxu0 0.0
        %1303 = vmatmul.mubr.f32.gmra.mrb[0].mxu0 %v1231
        %v1304 = vpop.f32.mrb[0].mxu0
        %v1305 = vadd.f32 1e-05, %v1304
        %v1306 = vpop.f32.mrb[0].mxu0
        %1307 = vdwg.mxu0
        %v1308 = vrsqrt.pop %v1300
        %v1309 = vrsqrt.pop %v1305
        %v1310 = vmul.f32 %v1223, %v1308
        %v1311 = vmul.f32 %v1224, %v1309
        %v1312 = vld [vmem:[%s19 + $0x2] sm:$0x1]
        %v1314 = vlaneseq
        %v1315 = vshrl.u32 %v1314, 7
        %v1316 = vsub.s32 0, %v1315
        %v1317 = vrot.slane %v1312, %v1316
        %v1319 = vmul.f32 %v1310, %v1317
        %v1320 = vmul.f32 %v1311, %v1317
        %v1321 = vld [vmem:[%s19 + $0x3] sm:$0x1]
        %v1323 = vlaneseq
        %v1324 = vshrl.u32 %v1323, 7
        %v1325 = vsub.s32 0, %v1324
        %v1326 = vrot.slane %v1321, %v1325
        %v1328 = vadd.f32 %v1319, %v1326
        %v1329 = vadd.f32 %v1320, %v1326
        %v1330 = vld [vmem:[%s685] sm:$0xff]
        %v1331 = vld [vmem:[%s685 + $0x8] sm:$0xff]
        %v1332 = vld [vmem:[%s19 + $0x4] sm:$0x1]
        %v1333 = vld [vmem:[%s19 + $0x5] sm:$0x1]
        %v1334 = vld [vmem:[%s19 + $0x6] sm:$0x3]
        %v1335 = vld [vmem:[%s19 + $0x8] sm:$0x1]
        %v1336 = vld [vmem:[%s9] sm:$0xff]
        %v1337 = vld [vmem:[%s9 + $0x8] sm:$0xff]
        %v1339 = vlaneseq
        %v1340 = vshrl.u32 %v1339, 7
        %v1341 = vsub.s32 0, %v1340
        %v1342 = vrot.slane %v1332, %v1341
        %vm1344 = vcmask 130048
        %v1346 = vsel %vm1344, %v1330, 0
        %v1349 = vsel %vm1344, %v1331, 0
        %1351 = vmatprep.subr.mxu0 0.0
        %1352 = vmatpush1.msra.mxu0 %v1336
        %1353 = vmatprep.subr.mxu0 0.0
        %1354 = vmatpush1.msra.mxu0 %v1337
        %1355 = vmatprep.subr.mxu0 0.0
        %1356 = vmatpush1.msra.mxu0 0.0
        %1357 = vmatprep.subr.mxu0 0.0
        %1358 = vmatpush1.msra.mxu0 0.0
        %1359 = vmatprep.subr.mxu0 0.0
        %1360 = vmatpush1.msra.mxu0 0.0
        %1361 = vmatprep.subr.mxu0 0.0
        %1362 = vmatpush1.msra.mxu0 0.0
        %1363 = vmatprep.subr.mxu0 0.0
        %1364 = vmatpush1.msra.mxu0 0.0
        %1365 = vmatprep.subr.mxu0 0.0
        %1366 = vmatpush1.msra.mxu0 0.0
        %1367 = vmatprep.subr.mxu0 0.0
        %1368 = vmatpush1.msra.mxu0 0.0
        %1369 = vmatprep.subr.mxu0 0.0
        %1370 = vmatpush1.msra.mxu0 0.0
        %1371 = vmatprep.subr.mxu0 0.0
        %1372 = vmatpush1.msra.mxu0 0.0
        %1373 = vmatprep.subr.mxu0 0.0
        %1374 = vmatpush1.msra.mxu0 0.0
        %1375 = vmatprep.subr.mxu0 0.0
        %1376 = vmatpush1.msra.mxu0 0.0
        %1377 = vmatprep.subr.mxu0 0.0
        %1378 = vmatpush1.msra.mxu0 0.0
        %1379 = vmatprep.subr.mxu0 0.0
        %1380 = vmatpush1.msra.mxu0 0.0
        %1381 = vmatprep.subr.mxu0 0.0
        %1382 = vmatpush1.msra.mxu0 0.0
        %1383 = vmatprep.subr.mxu0 0.0
        %1384 = vmatpush1.msra.mxu0 0.0
        %1385 = vmatprep.subr.mxu0 0.0
        %1386 = vmatpush1.msra.mxu0 0.0
        %1387 = vmatprep.subr.mxu0 0.0
        %1388 = vmatpush1.msra.mxu0 0.0
        %1389 = vmatprep.subr.mxu0 0.0
        %1390 = vmatpush1.msra.mxu0 0.0
        %1391 = vmatprep.subr.mxu0 0.0
        %1392 = vmatpush1.msra.mxu0 0.0
        %1393 = vmatprep.subr.mxu0 0.0
        %1394 = vmatpush1.msra.mxu0 0.0
        %1395 = vmatprep.subr.mxu0 0.0
        %1396 = vmatpush1.msra.mxu0 0.0
        %1397 = vmatprep.subr.mxu0 0.0
        %1398 = vmatpush1.msra.mxu0 0.0
        %1399 = vmatprep.subr.mxu0 0.0
        %1400 = vmatpush1.msra.mxu0 0.0
        %1401 = vmatprep.subr.mxu0 0.0
        %1402 = vmatpush1.msra.mxu0 0.0
        %1403 = vmatprep.subr.mxu0 0.0
        %1404 = vmatpush1.msra.mxu0 0.0
        %1405 = vmatprep.subr.mxu0 0.0
        %1406 = vmatpush1.msra.mxu0 0.0
        %1407 = vmatprep.subr.mxu0 0.0
        %1408 = vmatpush1.msra.mxu0 0.0
        %1409 = vmatprep.subr.mxu0 0.0
        %1410 = vmatpush1.msra.mxu0 0.0
        %1411 = vmatprep.subr.mxu0 0.0
        %1412 = vmatpush1.msra.mxu0 0.0
        %1413 = vmatprep.subr.mxu0 0.0
        %1414 = vmatpush1.msra.mxu0 0.0
        %1415 = vmatprep.mubr.f32.mxu0 0.0
        %1416 = vmatmul.mubr.f32.gmra.mrb[0].mxu0 %v1346
        %v1417 = vpop.f32.mrb[0].mxu0
        %v1418 = vadd.f32 %v1342, %v1417
        %v1419 = vpop.f32.mrb[0].mxu0
        %1420 = vmatprep.mubr.f32.mxu0 0.0
        %1421 = vmatmul.mubr.f32.gmra.mrb[0].mxu0 %v1349
        %v1422 = vpop.f32.mrb[0].mxu0
        %v1423 = vadd.f32 %v1342, %v1422
        %v1424 = vpop.f32.mrb[0].mxu0
        %1425 = vdwg.mxu0
        %vm1426 = vcmask 64512
        %v1427 = vsel %vm1426, %v1418, -inf
        %1428 = vmax.xlane.f32.xlu0 %v1427
        %v1429 = vpop.xlane.xlu0 %1428
        %v1430 = vsel %vm1426, %v1423, -inf
        %1431 = vmax.xlane.f32.xlu0 %v1430
        %v1432 = vpop.xlane.xlu0 %1431
        %v1433 = vsub.f32 %v1418, %v1429
        %v1434 = vsub.f32 %v1423, %v1432
        %v1435 = vmul.f32 %v1433, 1.442695
        %v1436 = vpow.pop %v1435
        %v1437 = vmul.f32 %v1434, 1.442695
        %v1438 = vpow.pop %v1437
        %v1439 = vsel %vm1426, %v1436, 0.0
        %1440 = vadd.xlane.f32.xlu0 %v1439
        %v1441 = vpop.xlane.xlu0 %1440
        %v1442 = vsel %vm1426, %v1438, 0.0
        %1443 = vadd.xlane.f32.xlu0 %v1442
        %v1444 = vpop.xlane.xlu0 %1443
        %v1445 = vrcp.pop %v1441
        %v1446 = vmul.f32 %v1436, %v1445
        %v1447 = vrcp.pop %v1444
        %v1448 = vmul.f32 %v1438, %v1447
        %v1449 = vld [vmem:[%s10] sm:$0xff]
        %v1450 = vld [vmem:[%s10 + $0x8] sm:$0xff]
        %v1451 = vld [vmem:[%s10 + $0x10] sm:$0xff]
        %v1452 = vld [vmem:[%s10 + $0x18] sm:$0xff]
        %v1454 = vlaneseq
        %v1455 = vshrl.u32 %v1454, 7
        %v1456 = vsub.s32 0, %v1455
        %v1457 = vrot.slane %v1333, %v1456
        %v1460 = vsel %vm1141, %v1328, 0
        %v1463 = vsel %vm1141, %v1329, 0
        %1465 = vmatprep.subr.mxu0 0.0
        %1466 = vmatpush1.msra.mxu0 %v1449
        %1467 = vmatprep.subr.mxu0 0.0
        %1468 = vmatpush1.msra.mxu0 %v1450
        %1469 = vmatprep.subr.mxu0 0.0
        %1470 = vmatpush1.msra.mxu0 %v1451
        %1471 = vmatprep.subr.mxu0 0.0
        %1472 = vmatpush1.msra.mxu0 %v1452
        %1473 = vmatprep.subr.mxu0 0.0
        %1474 = vmatpush1.msra.mxu0 0.0
        %1475 = vmatprep.subr.mxu0 0.0
        %1476 = vmatpush1.msra.mxu0 0.0
        %1477 = vmatprep.subr.mxu0 0.0
        %1478 = vmatpush1.msra.mxu0 0.0
        %1479 = vmatprep.subr.mxu0 0.0
        %1480 = vmatpush1.msra.mxu0 0.0
        %1481 = vmatprep.subr.mxu0 0.0
        %1482 = vmatpush1.msra.mxu0 0.0
        %1483 = vmatprep.subr.mxu0 0.0
        %1484 = vmatpush1.msra.mxu0 0.0
        %1485 = vmatprep.subr.mxu0 0.0
        %1486 = vmatpush1.msra.mxu0 0.0
        %1487 = vmatprep.subr.mxu0 0.0
        %1488 = vmatpush1.msra.mxu0 0.0
        %1489 = vmatprep.subr.mxu0 0.0
        %1490 = vmatpush1.msra.mxu0 0.0
        %1491 = vmatprep.subr.mxu0 0.0
        %1492 = vmatpush1.msra.mxu0 0.0
        %1493 = vmatprep.subr.mxu0 0.0
        %1494 = vmatpush1.msra.mxu0 0.0
        %1495 = vmatprep.subr.mxu0 0.0
        %1496 = vmatpush1.msra.mxu0 0.0
        %1497 = vmatprep.subr.mxu0 0.0
        %1498 = vmatpush1.msra.mxu0 0.0
        %1499 = vmatprep.subr.mxu0 0.0
        %1500 = vmatpush1.msra.mxu0 0.0
        %1501 = vmatprep.subr.mxu0 0.0
        %1502 = vmatpush1.msra.mxu0 0.0
        %1503 = vmatprep.subr.mxu0 0.0
        %1504 = vmatpush1.msra.mxu0 0.0
        %1505 = vmatprep.subr.mxu0 0.0
        %1506 = vmatpush1.msra.mxu0 0.0
        %1507 = vmatprep.subr.mxu0 0.0
        %1508 = vmatpush1.msra.mxu0 0.0
        %1509 = vmatprep.subr.mxu0 0.0
        %1510 = vmatpush1.msra.mxu0 0.0
        %1511 = vmatprep.subr.mxu0 0.0
        %1512 = vmatpush1.msra.mxu0 0.0
        %1513 = vmatprep.subr.mxu0 0.0
        %1514 = vmatpush1.msra.mxu0 0.0
        %1515 = vmatprep.subr.mxu0 0.0
        %1516 = vmatpush1.msra.mxu0 0.0
        %1517 = vmatprep.subr.mxu0 0.0
        %1518 = vmatpush1.msra.mxu0 0.0
        %1519 = vmatprep.subr.mxu0 0.0
        %1520 = vmatpush1.msra.mxu0 0.0
        %1521 = vmatprep.subr.mxu0 0.0
        %1522 = vmatpush1.msra.mxu0 0.0
        %1523 = vmatprep.subr.mxu0 0.0
        %1524 = vmatpush1.msra.mxu0 0.0
        %1525 = vmatprep.subr.mxu0 0.0
        %1526 = vmatpush1.msra.mxu0 0.0
        %1527 = vmatprep.subr.mxu0 0.0
        %1528 = vmatpush1.msra.mxu0 0.0
        %1529 = vmatprep.mubr.f32.mxu0 0.0
        %1530 = vmatmul.mubr.f32.gmra.mrb[0].mxu0 %v1460
        %v1531 = vpop.f32.mrb[0].mxu0
        %v1532 = vadd.f32 %v1457, %v1531
        %v1533 = vpop.f32.mrb[0].mxu0
        %1534 = vmatprep.mubr.f32.mxu0 0.0
        %1535 = vmatmul.mubr.f32.gmra.mrb[0].mxu0 %v1463
        %v1536 = vpop.f32.mrb[0].mxu0
        %v1537 = vadd.f32 %v1457, %v1536
        %v1538 = vpop.f32.mrb[0].mxu0
        %1539 = vdwg.mxu0
        %v1540 = vxor.u32 %v1532, 2147483648
        %v1541 = vxor.u32 %v1537, 2147483648
        %v1542 = vmul.f32 %v1540, 1.442695
        %v1543 = vpow.pop %v1542
        %v1544 = vmul.f32 %v1541, 1.442695
        %v1545 = vpow.pop %v1544
        %v1546 = vadd.f32 %v1543, 1.0
        %v1547 = vadd.f32 %v1545, 1.0
        %v1548 = vrcp.pop %v1546
        %v1549 = vmul.f32 1.0, %v1548
        %v1550 = vrcp.pop %v1547
        %v1551 = vmul.f32 1.0, %v1550
        %v1552 = vmul.f32 %v1532, %v1549
        %v1553 = vmul.f32 %v1537, %v1551
        %v1554 = vld [vmem:[%s11] sm:$0xff]
        %v1555 = vld [vmem:[%s11 + $0x8] sm:$0xff]
        %v1556 = vld [vmem:[%s11 + $0x10] sm:$0xff]
        %v1557 = vld [vmem:[%s11 + $0x18] sm:$0xff]
        %v1558 = vld [vmem:[%s11 + $0x20] sm:$0xff]
        %v1559 = vld [vmem:[%s11 + $0x28] sm:$0xff]
        %v1560 = vld [vmem:[%s11 + $0x30] sm:$0xff]
        %v1561 = vld [vmem:[%s11 + $0x38] sm:$0xff]
        %v1563 = vlaneseq
        %v1564 = vshrl.u32 %v1563, 7
        %v1565 = vsub.s32 0, %v1564
        %v1566 = vrot.slane %v1334, %v1565
        %v1567 = vlaneseq
        %v1568 = vshrl.u32 %v1567, 7
        %v1569 = vsub.s32 1, %v1568
        %v1570 = vrot.slane %v1334, %v1569
        %v1574 = vsel %vm1141, %v1552, 0
        %v1577 = vsel %vm1141, %v1553, 0
        %1579 = vmatprep.subr.mxu0 %v1555
        %1580 = vmatpush1.msra.mxu0 %v1554
        %1581 = vmatprep.subr.mxu0 %v1557
        %1582 = vmatpush1.msra.mxu0 %v1556
        %1583 = vmatprep.subr.mxu0 %v1559
        %1584 = vmatpush1.msra.mxu0 %v1558
        %1585 = vmatprep.subr.mxu0 %v1561
        %1586 = vmatpush1.msra.mxu0 %v1560
        %1587 = vmatprep.subr.mxu0 0.0
        %1588 = vmatpush1.msra.mxu0 0.0
        %1589 = vmatprep.subr.mxu0 0.0
        %1590 = vmatpush1.msra.mxu0 0.0
        %1591 = vmatprep.subr.mxu0 0.0
        %1592 = vmatpush1.msra.mxu0 0.0
        %1593 = vmatprep.subr.mxu0 0.0
        %1594 = vmatpush1.msra.mxu0 0.0
        %1595 = vmatprep.subr.mxu0 0.0
        %1596 = vmatpush1.msra.mxu0 0.0
        %1597 = vmatprep.subr.mxu0 0.0
        %1598 = vmatpush1.msra.mxu0 0.0
        %1599 = vmatprep.subr.mxu0 0.0
        %1600 = vmatpush1.msra.mxu0 0.0
        %1601 = vmatprep.subr.mxu0 0.0
        %1602 = vmatpush1.msra.mxu0 0.0
        %1603 = vmatprep.subr.mxu0 0.0
        %1604 = vmatpush1.msra.mxu0 0.0
        %1605 = vmatprep.subr.mxu0 0.0
        %1606 = vmatpush1.msra.mxu0 0.0
        %1607 = vmatprep.subr.mxu0 0.0
        %1608 = vmatpush1.msra.mxu0 0.0
        %1609 = vmatprep.subr.mxu0 0.0
        %1610 = vmatpush1.msra.mxu0 0.0
        %1611 = vmatprep.subr.mxu0 0.0
        %1612 = vmatpush1.msra.mxu0 0.0
        %1613 = vmatprep.subr.mxu0 0.0
        %1614 = vmatpush1.msra.mxu0 0.0
        %1615 = vmatprep.subr.mxu0 0.0
        %1616 = vmatpush1.msra.mxu0 0.0
        %1617 = vmatprep.subr.mxu0 0.0
        %1618 = vmatpush1.msra.mxu0 0.0
        %1619 = vmatprep.subr.mxu0 0.0
        %1620 = vmatpush1.msra.mxu0 0.0
        %1621 = vmatprep.subr.mxu0 0.0
        %1622 = vmatpush1.msra.mxu0 0.0
        %1623 = vmatprep.subr.mxu0 0.0
        %1624 = vmatpush1.msra.mxu0 0.0
        %1625 = vmatprep.subr.mxu0 0.0
        %1626 = vmatpush1.msra.mxu0 0.0
        %1627 = vmatprep.subr.mxu0 0.0
        %1628 = vmatpush1.msra.mxu0 0.0
        %1629 = vmatprep.subr.mxu0 0.0
        %1630 = vmatpush1.msra.mxu0 0.0
        %1631 = vmatprep.subr.mxu0 0.0
        %1632 = vmatpush1.msra.mxu0 0.0
        %1633 = vmatprep.subr.mxu0 0.0
        %1634 = vmatpush1.msra.mxu0 0.0
        %1635 = vmatprep.subr.mxu0 0.0
        %1636 = vmatpush1.msra.mxu0 0.0
        %1637 = vmatprep.subr.mxu0 0.0
        %1638 = vmatpush1.msra.mxu0 0.0
        %1639 = vmatprep.subr.mxu0 0.0
        %1640 = vmatpush1.msra.mxu0 0.0
        %1641 = vmatprep.subr.mxu0 0.0
        %1642 = vmatpush1.msra.mxu0 0.0
        %1643 = vmatprep.mubr.f32.mxu0 0.0
        %1644 = vmatmul.mubr.f32.gmra.mrb[0].mxu0 %v1574
        %v1645 = vpop.f32.mrb[0].mxu0
        %v1646 = vadd.f32 %v1566, %v1645
        %v1647 = vpop.f32.mrb[0].mxu0
        %v1648 = vadd.f32 %v1570, %v1647
        %1649 = vmatprep.mubr.f32.mxu0 0.0
        %1650 = vmatmul.mubr.f32.gmra.mrb[0].mxu0 %v1577
        %v1651 = vpop.f32.mrb[0].mxu0
        %v1652 = vadd.f32 %v1566, %v1651
        %v1653 = vpop.f32.mrb[0].mxu0
        %v1654 = vadd.f32 %v1570, %v1653
        %1655 = vdwg.mxu0
        %v1656 = vxor.u32 %v1646, 2147483648
        %v1657 = vxor.u32 %v1648, 2147483648
        %v1658 = vxor.u32 %v1652, 2147483648
        %v1659 = vxor.u32 %v1654, 2147483648
        %v1660 = vmul.f32 %v1656, 1.442695
        %v1661 = vpow.pop %v1660
        %v1662 = vmul.f32 %v1657, 1.442695
        %v1663 = vpow.pop %v1662
        %v1664 = vmul.f32 %v1658, 1.442695
        %v1665 = vpow.pop %v1664
        %v1666 = vmul.f32 %v1659, 1.442695
        %v1667 = vpow.pop %v1666
        %v1668 = vadd.f32 %v1661, 1.0
        %v1669 = vadd.f32 %v1663, 1.0
        %v1670 = vadd.f32 %v1665, 1.0
        %v1671 = vadd.f32 %v1667, 1.0
        %v1672 = vrcp.pop %v1668
        %v1673 = vmul.f32 1.0, %v1672
        %v1674 = vrcp.pop %v1669
        %v1675 = vmul.f32 1.0, %v1674
        %v1676 = vrcp.pop %v1670
        %v1677 = vmul.f32 1.0, %v1676
        %v1678 = vrcp.pop %v1671
        %v1679 = vmul.f32 1.0, %v1678
        %v1680 = vmul.f32 %v1646, %v1673
        %v1681 = vmul.f32 %v1648, %v1675
        %v1682 = vmul.f32 %v1652, %v1677
        %v1683 = vmul.f32 %v1654, %v1679
        %v1684 = vld [vmem:[%s7] sm:$0xff]
        %v1685 = vld [vmem:[%s7 + $0x8] sm:$0xff]
        %v1687 = vsel %vm1426, %v1446, 0
        %v1690 = vsel %vm1426, %v1448, 0
        %1692 = vmatprep.subr.mxu0 %v1685
        %1693 = vmatpush1.msra.mxu0 %v1684
        %1694 = vmatprep.subr.mxu0 0.0
        %1695 = vmatpush1.msra.mxu0 0.0
        %1696 = vmatprep.subr.mxu0 0.0
        %1697 = vmatpush1.msra.mxu0 0.0
        %1698 = vmatprep.subr.mxu0 0.0
        %1699 = vmatpush1.msra.mxu0 0.0
        %1700 = vmatprep.subr.mxu0 0.0
        %1701 = vmatpush1.msra.mxu0 0.0
        %1702 = vmatprep.subr.mxu0 0.0
        %1703 = vmatpush1.msra.mxu0 0.0
        %1704 = vmatprep.subr.mxu0 0.0
        %1705 = vmatpush1.msra.mxu0 0.0
        %1706 = vmatprep.subr.mxu0 0.0
        %1707 = vmatpush1.msra.mxu0 0.0
        %1708 = vmatprep.subr.mxu0 0.0
        %1709 = vmatpush1.msra.mxu0 0.0
        %1710 = vmatprep.subr.mxu0 0.0
        %1711 = vmatpush1.msra.mxu0 0.0
        %1712 = vmatprep.subr.mxu0 0.0
        %1713 = vmatpush1.msra.mxu0 0.0
        %1714 = vmatprep.subr.mxu0 0.0
        %1715 = vmatpush1.msra.mxu0 0.0
        %1716 = vmatprep.subr.mxu0 0.0
        %1717 = vmatpush1.msra.mxu0 0.0
        %1718 = vmatprep.subr.mxu0 0.0
        %1719 = vmatpush1.msra.mxu0 0.0
        %1720 = vmatprep.subr.mxu0 0.0
        %1721 = vmatpush1.msra.mxu0 0.0
        %1722 = vmatprep.subr.mxu0 0.0
        %1723 = vmatpush1.msra.mxu0 0.0
        %1724 = vmatprep.subr.mxu0 0.0
        %1725 = vmatpush1.msra.mxu0 0.0
        %1726 = vmatprep.subr.mxu0 0.0
        %1727 = vmatpush1.msra.mxu0 0.0
        %1728 = vmatprep.subr.mxu0 0.0
        %1729 = vmatpush1.msra.mxu0 0.0
        %1730 = vmatprep.subr.mxu0 0.0
        %1731 = vmatpush1.msra.mxu0 0.0
        %1732 = vmatprep.subr.mxu0 0.0
        %1733 = vmatpush1.msra.mxu0 0.0
        %1734 = vmatprep.subr.mxu0 0.0
        %1735 = vmatpush1.msra.mxu0 0.0
        %1736 = vmatprep.subr.mxu0 0.0
        %1737 = vmatpush1.msra.mxu0 0.0
        %1738 = vmatprep.subr.mxu0 0.0
        %1739 = vmatpush1.msra.mxu0 0.0
        %1740 = vmatprep.subr.mxu0 0.0
        %1741 = vmatpush1.msra.mxu0 0.0
        %1742 = vmatprep.subr.mxu0 0.0
        %1743 = vmatpush1.msra.mxu0 0.0
        %1744 = vmatprep.subr.mxu0 0.0
        %1745 = vmatpush1.msra.mxu0 0.0
        %1746 = vmatprep.subr.mxu0 0.0
        %1747 = vmatpush1.msra.mxu0 0.0
        %1748 = vmatprep.subr.mxu0 0.0
        %1749 = vmatpush1.msra.mxu0 0.0
        %1750 = vmatprep.subr.mxu0 0.0
        %1751 = vmatpush1.msra.mxu0 0.0
        %1752 = vmatprep.subr.mxu0 0.0
        %1753 = vmatpush1.msra.mxu0 0.0
        %1754 = vmatprep.subr.mxu0 0.0
        %1755 = vmatpush1.msra.mxu0 0.0
        %1756 = vmatprep.mubr.f32.mxu0 0.0
        %1757 = vmatmul.mubr.f32.gmra.mrb[0].mxu0 %v1687
        %v1758 = vpop.f32.mrb[0].mxu0
        %v1759 = vadd.f32 0.0, %v1758
        %v1760 = vpop.f32.mrb[0].mxu0
        %v1761 = vadd.f32 0.0, %v1760
        %1762 = vmatprep.mubr.f32.mxu0 0.0
        %1763 = vmatmul.mubr.f32.gmra.mrb[0].mxu0 %v1690
        %v1764 = vpop.f32.mrb[0].mxu0
        %v1765 = vadd.f32 0.0, %v1764
        %v1766 = vpop.f32.mrb[0].mxu0
        %v1767 = vadd.f32 0.0, %v1766
        %1768 = vdwg.mxu0
        %v1769 = vmul.f32 %v1680, %v1759
        %v1770 = vmul.f32 %v1681, %v1761
        %v1771 = vmul.f32 %v1682, %v1765
        %v1772 = vmul.f32 %v1683, %v1767
        %v1773 = vld [vmem:[%s8] sm:$0xff]
        %v1774 = vld [vmem:[%s8 + $0x8] sm:$0xff]
        %v1775 = vld [vmem:[%s8 + $0x10] sm:$0xff]
        %v1776 = vld [vmem:[%s8 + $0x18] sm:$0xff]
        %v1777 = vld [vmem:[%s8 + $0x20] sm:$0xff]
        %v1778 = vld [vmem:[%s8 + $0x28] sm:$0xff]
        %v1779 = vld [vmem:[%s8 + $0x30] sm:$0xff]
        %v1780 = vld [vmem:[%s8 + $0x38] sm:$0xff]
        %v1781 = vld [vmem:[%s8 + $0x40] sm:$0xff]
        %v1782 = vld [vmem:[%s8 + $0x48] sm:$0xff]
        %v1783 = vld [vmem:[%s8 + $0x50] sm:$0xff]
        %v1784 = vld [vmem:[%s8 + $0x58] sm:$0xff]
        %v1785 = vld [vmem:[%s8 + $0x60] sm:$0xff]
        %v1786 = vld [vmem:[%s8 + $0x68] sm:$0xff]
        %v1787 = vld [vmem:[%s8 + $0x70] sm:$0xff]
        %v1788 = vld [vmem:[%s8 + $0x78] sm:$0xff]
        %v1789 = vld [vmem:[%s8 + $0x80] sm:$0xff]
        %v1790 = vld [vmem:[%s8 + $0x88] sm:$0xff]
        %v1791 = vld [vmem:[%s8 + $0x90] sm:$0xff]
        %v1792 = vld [vmem:[%s8 + $0x98] sm:$0xff]
        %v1793 = vld [vmem:[%s8 + $0xa0] sm:$0xff]
        %v1794 = vld [vmem:[%s8 + $0xa8] sm:$0xff]
        %v1795 = vld [vmem:[%s8 + $0xb0] sm:$0xff]
        %v1796 = vld [vmem:[%s8 + $0xb8] sm:$0xff]
        %v1797 = vld [vmem:[%s8 + $0xc0] sm:$0xff]
        %v1798 = vld [vmem:[%s8 + $0xc8] sm:$0xff]
        %v1799 = vld [vmem:[%s8 + $0xd0] sm:$0xff]
        %v1800 = vld [vmem:[%s8 + $0xd8] sm:$0xff]
        %v1801 = vld [vmem:[%s8 + $0xe0] sm:$0xff]
        %v1802 = vld [vmem:[%s8 + $0xe8] sm:$0xff]
        %v1803 = vld [vmem:[%s8 + $0xf0] sm:$0xff]
        %v1804 = vld [vmem:[%s8 + $0xf8] sm:$0xff]
        %1805 = vmatprep.subr.mxu0 0.0
        %1806 = vmatpush1.msra.mxu0 %v1773
        %1807 = vmatprep.subr.mxu0 0.0
        %1808 = vmatpush1.msra.mxu0 %v1774
        %1809 = vmatprep.subr.mxu0 0.0
        %1810 = vmatpush1.msra.mxu0 %v1775
        %1811 = vmatprep.subr.mxu0 0.0
        %1812 = vmatpush1.msra.mxu0 %v1776
        %1813 = vmatprep.subr.mxu0 0.0
        %1814 = vmatpush1.msra.mxu0 %v1777
        %1815 = vmatprep.subr.mxu0 0.0
        %1816 = vmatpush1.msra.mxu0 %v1778
        %1817 = vmatprep.subr.mxu0 0.0
        %1818 = vmatpush1.msra.mxu0 %v1779
        %1819 = vmatprep.subr.mxu0 0.0
        %1820 = vmatpush1.msra.mxu0 %v1780
        %1821 = vmatprep.subr.mxu0 0.0
        %1822 = vmatpush1.msra.mxu0 %v1781
        %1823 = vmatprep.subr.mxu0 0.0
        %1824 = vmatpush1.msra.mxu0 %v1782
        %1825 = vmatprep.subr.mxu0 0.0
        %1826 = vmatpush1.msra.mxu0 %v1783
        %1827 = vmatprep.subr.mxu0 0.0
        %1828 = vmatpush1.msra.mxu0 %v1784
        %1829 = vmatprep.subr.mxu0 0.0
        %1830 = vmatpush1.msra.mxu0 %v1785
        %1831 = vmatprep.subr.mxu0 0.0
        %1832 = vmatpush1.msra.mxu0 %v1786
        %1833 = vmatprep.subr.mxu0 0.0
        %1834 = vmatpush1.msra.mxu0 %v1787
        %1835 = vmatprep.subr.mxu0 0.0
        %1836 = vmatpush1.msra.mxu0 %v1788
        %1837 = vmatprep.subr.mxu0 0.0
        %1838 = vmatpush1.msra.mxu0 %v1789
        %1839 = vmatprep.subr.mxu0 0.0
        %1840 = vmatpush1.msra.mxu0 %v1790
        %1841 = vmatprep.subr.mxu0 0.0
        %1842 = vmatpush1.msra.mxu0 %v1791
        %1843 = vmatprep.subr.mxu0 0.0
        %1844 = vmatpush1.msra.mxu0 %v1792
        %1845 = vmatprep.subr.mxu0 0.0
        %1846 = vmatpush1.msra.mxu0 %v1793
        %1847 = vmatprep.subr.mxu0 0.0
        %1848 = vmatpush1.msra.mxu0 %v1794
        %1849 = vmatprep.subr.mxu0 0.0
        %1850 = vmatpush1.msra.mxu0 %v1795
        %1851 = vmatprep.subr.mxu0 0.0
        %1852 = vmatpush1.msra.mxu0 %v1796
        %1853 = vmatprep.subr.mxu0 0.0
        %1854 = vmatpush1.msra.mxu0 %v1797
        %1855 = vmatprep.subr.mxu0 0.0
        %1856 = vmatpush1.msra.mxu0 %v1798
        %1857 = vmatprep.subr.mxu0 0.0
        %1858 = vmatpush1.msra.mxu0 %v1799
        %1859 = vmatprep.subr.mxu0 0.0
        %1860 = vmatpush1.msra.mxu0 %v1800
        %1861 = vmatprep.subr.mxu0 0.0
        %1862 = vmatpush1.msra.mxu0 %v1801
        %1863 = vmatprep.subr.mxu0 0.0
        %1864 = vmatpush1.msra.mxu0 %v1802
        %1865 = vmatprep.subr.mxu0 0.0
        %1866 = vmatpush1.msra.mxu0 %v1803
        %1867 = vmatprep.subr.mxu0 0.0
        %1868 = vmatpush1.msra.mxu0 %v1804
        %1869 = vmatprep.mubr.f32.mxu0 %v1770
        %1870 = vmatmul.mubr.f32.gmra.mrb[0].mxu0 %v1769
        %v1871 = vpop.f32.mrb[0].mxu0
        %v1872 = vadd.f32 0.0, %v1871
        %v1873 = vpop.f32.mrb[0].mxu0
        %1874 = vmatprep.mubr.f32.mxu0 %v1772
        %1875 = vmatmul.mubr.f32.gmra.mrb[0].mxu0 %v1771
        %v1876 = vpop.f32.mrb[0].mxu0
        %v1877 = vadd.f32 0.0, %v1876
        %v1878 = vpop.f32.mrb[0].mxu0
        %1879 = vdwg.mxu0
        %v1880 = vld [vmem:[%s12] sm:$0xff]
        %v1881 = vld [vmem:[%s12 + $0x8] sm:$0xff]
        %v1882 = vld [vmem:[%s12 + $0x10] sm:$0xff]
        %v1883 = vld [vmem:[%s12 + $0x18] sm:$0xff]
        %v1885 = vlaneseq
        %v1886 = vshrl.u32 %v1885, 7
        %v1887 = vsub.s32 0, %v1886
        %v1888 = vrot.slane %v1335, %v1887
        %v1891 = vsel %vm1141, %v1872, 0
        %v1894 = vsel %vm1141, %v1877, 0
        %1896 = vmatprep.subr.mxu0 0.0
        %1897 = vmatpush1.msra.mxu0 %v1880
        %1898 = vmatprep.subr.mxu0 0.0
        %1899 = vmatpush1.msra.mxu0 %v1881
        %1900 = vmatprep.subr.mxu0 0.0
        %1901 = vmatpush1.msra.mxu0 %v1882
        %1902 = vmatprep.subr.mxu0 0.0
        %1903 = vmatpush1.msra.mxu0 %v1883
        %1904 = vmatprep.subr.mxu0 0.0
        %1905 = vmatpush1.msra.mxu0 0.0
        %1906 = vmatprep.subr.mxu0 0.0
        %1907 = vmatpush1.msra.mxu0 0.0
        %1908 = vmatprep.subr.mxu0 0.0
        %1909 = vmatpush1.msra.mxu0 0.0
        %1910 = vmatprep.subr.mxu0 0.0
        %1911 = vmatpush1.msra.mxu0 0.0
        %1912 = vmatprep.subr.mxu0 0.0
        %1913 = vmatpush1.msra.mxu0 0.0
        %1914 = vmatprep.subr.mxu0 0.0
        %1915 = vmatpush1.msra.mxu0 0.0
        %1916 = vmatprep.subr.mxu0 0.0
        %1917 = vmatpush1.msra.mxu0 0.0
        %1918 = vmatprep.subr.mxu0 0.0
        %1919 = vmatpush1.msra.mxu0 0.0
        %1920 = vmatprep.subr.mxu0 0.0
        %1921 = vmatpush1.msra.mxu0 0.0
        %1922 = vmatprep.subr.mxu0 0.0
        %1923 = vmatpush1.msra.mxu0 0.0
        %1924 = vmatprep.subr.mxu0 0.0
        %1925 = vmatpush1.msra.mxu0 0.0
        %1926 = vmatprep.subr.mxu0 0.0
        %1927 = vmatpush1.msra.mxu0 0.0
        %1928 = vmatprep.subr.mxu0 0.0
        %1929 = vmatpush1.msra.mxu0 0.0
        %1930 = vmatprep.subr.mxu0 0.0
        %1931 = vmatpush1.msra.mxu0 0.0
        %1932 = vmatprep.subr.mxu0 0.0
        %1933 = vmatpush1.msra.mxu0 0.0
        %1934 = vmatprep.subr.mxu0 0.0
        %1935 = vmatpush1.msra.mxu0 0.0
        %1936 = vmatprep.subr.mxu0 0.0
        %1937 = vmatpush1.msra.mxu0 0.0
        %1938 = vmatprep.subr.mxu0 0.0
        %1939 = vmatpush1.msra.mxu0 0.0
        %1940 = vmatprep.subr.mxu0 0.0
        %1941 = vmatpush1.msra.mxu0 0.0
        %1942 = vmatprep.subr.mxu0 0.0
        %1943 = vmatpush1.msra.mxu0 0.0
        %1944 = vmatprep.subr.mxu0 0.0
        %1945 = vmatpush1.msra.mxu0 0.0
        %1946 = vmatprep.subr.mxu0 0.0
        %1947 = vmatpush1.msra.mxu0 0.0
        %1948 = vmatprep.subr.mxu0 0.0
        %1949 = vmatpush1.msra.mxu0 0.0
        %1950 = vmatprep.subr.mxu0 0.0
        %1951 = vmatpush1.msra.mxu0 0.0
        %1952 = vmatprep.subr.mxu0 0.0
        %1953 = vmatpush1.msra.mxu0 0.0
        %1954 = vmatprep.subr.mxu0 0.0
        %1955 = vmatpush1.msra.mxu0 0.0
        %1956 = vmatprep.subr.mxu0 0.0
        %1957 = vmatpush1.msra.mxu0 0.0
        %1958 = vmatprep.subr.mxu0 0.0
        %1959 = vmatpush1.msra.mxu0 0.0
        %1960 = vmatprep.mubr.f32.mxu0 0.0
        %1961 = vmatmul.mubr.f32.gmra.mrb[0].mxu0 %v1891
        %v1962 = vpop.f32.mrb[0].mxu0
        %v1963 = vadd.f32 %v1888, %v1962
        %v1964 = vpop.f32.mrb[0].mxu0
        %1965 = vmatprep.mubr.f32.mxu0 0.0
        %1966 = vmatmul.mubr.f32.gmra.mrb[0].mxu0 %v1894
        %v1967 = vpop.f32.mrb[0].mxu0
        %v1968 = vadd.f32 %v1888, %v1967
        %v1969 = vpop.f32.mrb[0].mxu0
        %1970 = vdwg.mxu0
        %v1971 = vld [vmem:[%s697] sm:$0xff]
        %v1972 = vld [vmem:[%s697 + $0x8] sm:$0xff]
        %v1973 = vld [vmem:[%s13] sm:$0xff]
        %v1974 = vld [vmem:[%s13 + $0x8] sm:$0xff]
        %v1975 = vld [vmem:[%s13 + $0x10] sm:$0xff]
        %v1976 = vld [vmem:[%s13 + $0x18] sm:$0xff]
        %v1977 = vld [vmem:[%s19 + $0x9] sm:$0x1]
        %v1979 = vlaneseq
        %v1980 = vshrl.u32 %v1979, 7
        %v1981 = vsub.s32 0, %v1980
        %v1982 = vrot.slane %v1977, %v1981
        %v1985 = vsel %vm1141, %v1971, 0
        %v1988 = vsel %vm1141, %v1972, 0
        %1990 = vmatprep.subr.mxu0 0.0
        %1991 = vmatpush1.msra.mxu0 %v1973
        %1992 = vmatprep.subr.mxu0 0.0
        %1993 = vmatpush1.msra.mxu0 %v1974
        %1994 = vmatprep.subr.mxu0 0.0
        %1995 = vmatpush1.msra.mxu0 %v1975
        %1996 = vmatprep.subr.mxu0 0.0
        %1997 = vmatpush1.msra.mxu0 %v1976
        %1998 = vmatprep.subr.mxu0 0.0
        %1999 = vmatpush1.msra.mxu0 0.0
        %2000 = vmatprep.subr.mxu0 0.0
        %2001 = vmatpush1.msra.mxu0 0.0
        %2002 = vmatprep.subr.mxu0 0.0
        %2003 = vmatpush1.msra.mxu0 0.0
        %2004 = vmatprep.subr.mxu0 0.0
        %2005 = vmatpush1.msra.mxu0 0.0
        %2006 = vmatprep.subr.mxu0 0.0
        %2007 = vmatpush1.msra.mxu0 0.0
        %2008 = vmatprep.subr.mxu0 0.0
        %2009 = vmatpush1.msra.mxu0 0.0
        %2010 = vmatprep.subr.mxu0 0.0
        %2011 = vmatpush1.msra.mxu0 0.0
        %2012 = vmatprep.subr.mxu0 0.0
        %2013 = vmatpush1.msra.mxu0 0.0
        %2014 = vmatprep.subr.mxu0 0.0
        %2015 = vmatpush1.msra.mxu0 0.0
        %2016 = vmatprep.subr.mxu0 0.0
        %2017 = vmatpush1.msra.mxu0 0.0
        %2018 = vmatprep.subr.mxu0 0.0
        %2019 = vmatpush1.msra.mxu0 0.0
        %2020 = vmatprep.subr.mxu0 0.0
        %2021 = vmatpush1.msra.mxu0 0.0
        %2022 = vmatprep.subr.mxu0 0.0
        %2023 = vmatpush1.msra.mxu0 0.0
        %2024 = vmatprep.subr.mxu0 0.0
        %2025 = vmatpush1.msra.mxu0 0.0
        %2026 = vmatprep.subr.mxu0 0.0
        %2027 = vmatpush1.msra.mxu0 0.0
        %2028 = vmatprep.subr.mxu0 0.0
        %2029 = vmatpush1.msra.mxu0 0.0
        %2030 = vmatprep.subr.mxu0 0.0
        %2031 = vmatpush1.msra.mxu0 0.0
        %2032 = vmatprep.subr.mxu0 0.0
        %2033 = vmatpush1.msra.mxu0 0.0
        %2034 = vmatprep.subr.mxu0 0.0
        %2035 = vmatpush1.msra.mxu0 0.0
        %2036 = vmatprep.subr.mxu0 0.0
        %2037 = vmatpush1.msra.mxu0 0.0
        %2038 = vmatprep.subr.mxu0 0.0
        %2039 = vmatpush1.msra.mxu0 0.0
        %2040 = vmatprep.subr.mxu0 0.0
        %2041 = vmatpush1.msra.mxu0 0.0
        %2042 = vmatprep.subr.mxu0 0.0
        %2043 = vmatpush1.msra.mxu0 0.0
        %2044 = vmatprep.subr.mxu0 0.0
        %2045 = vmatpush1.msra.mxu0 0.0
        %2046 = vmatprep.subr.mxu0 0.0
        %2047 = vmatpush1.msra.mxu0 0.0
        %2048 = vmatprep.subr.mxu0 0.0
        %2049 = vmatpush1.msra.mxu0 0.0
        %2050 = vmatprep.subr.mxu0 0.0
        %2051 = vmatpush1.msra.mxu0 0.0
        %2052 = vmatprep.subr.mxu0 0.0
        %2053 = vmatpush1.msra.mxu0 0.0
        %2054 = vmatprep.mubr.f32.mxu0 0.0
        %2055 = vmatmul.mubr.f32.gmra.mrb[0].mxu0 %v1985
        %v2056 = vpop.f32.mrb[0].mxu0
        %v2057 = vadd.f32 %v1982, %v2056
        %v2058 = vpop.f32.mrb[0].mxu0
        %2059 = vmatprep.mubr.f32.mxu0 0.0
        %2060 = vmatmul.mubr.f32.gmra.mrb[0].mxu0 %v1988
        %v2061 = vpop.f32.mrb[0].mxu0
        %v2062 = vadd.f32 %v1982, %v2061
        %v2063 = vpop.f32.mrb[0].mxu0
        %2064 = vdwg.mxu0
        %v2065 = vxor.u32 %v2057, 2147483648
        %v2066 = vxor.u32 %v2062, 2147483648
        %v2067 = vmul.f32 %v2065, 1.442695
        %v2068 = vpow.pop %v2067
        %v2069 = vmul.f32 %v2066, 1.442695
        %v2070 = vpow.pop %v2069
        %v2071 = vadd.f32 %v2068, 1.0
        %v2072 = vadd.f32 %v2070, 1.0
        %v2073 = vrcp.pop %v2071
        %v2074 = vmul.f32 1.0, %v2073
        %v2075 = vrcp.pop %v2072
        %v2076 = vmul.f32 1.0, %v2075
        %v2077 = vmul.f32 %v2057, %v2074
        %v2078 = vmul.f32 %v2062, %v2076
        %v2079 = vld [vmem:[%s14] sm:$0xff]
        %v2080 = vld [vmem:[%s14 + $0x8] sm:$0xff]
        %v2081 = vld [vmem:[%s14 + $0x10] sm:$0xff]
        %v2082 = vld [vmem:[%s14 + $0x18] sm:$0xff]
        %v2083 = vld [vmem:[%s19 + $0xa] sm:$0x1]
        %v2085 = vlaneseq
        %v2086 = vshrl.u32 %v2085, 7
        %v2087 = vsub.s32 0, %v2086
        %v2088 = vrot.slane %v2083, %v2087
        %v2091 = vsel %vm1141, %v2077, 0
        %v2094 = vsel %vm1141, %v2078, 0
        %2096 = vmatprep.subr.mxu0 0.0
        %2097 = vmatpush1.msra.mxu0 %v2079
        %2098 = vmatprep.subr.mxu0 0.0
        %2099 = vmatpush1.msra.mxu0 %v2080
        %2100 = vmatprep.subr.mxu0 0.0
        %2101 = vmatpush1.msra.mxu0 %v2081
        %2102 = vmatprep.subr.mxu0 0.0
        %2103 = vmatpush1.msra.mxu0 %v2082
        %2104 = vmatprep.subr.mxu0 0.0
        %2105 = vmatpush1.msra.mxu0 0.0
        %2106 = vmatprep.subr.mxu0 0.0
        %2107 = vmatpush1.msra.mxu0 0.0
        %2108 = vmatprep.subr.mxu0 0.0
        %2109 = vmatpush1.msra.mxu0 0.0
        %2110 = vmatprep.subr.mxu0 0.0
        %2111 = vmatpush1.msra.mxu0 0.0
        %2112 = vmatprep.subr.mxu0 0.0
        %2113 = vmatpush1.msra.mxu0 0.0
        %2114 = vmatprep.subr.mxu0 0.0
        %2115 = vmatpush1.msra.mxu0 0.0
        %2116 = vmatprep.subr.mxu0 0.0
        %2117 = vmatpush1.msra.mxu0 0.0
        %2118 = vmatprep.subr.mxu0 0.0
        %2119 = vmatpush1.msra.mxu0 0.0
        %2120 = vmatprep.subr.mxu0 0.0
        %2121 = vmatpush1.msra.mxu0 0.0
        %2122 = vmatprep.subr.mxu0 0.0
        %2123 = vmatpush1.msra.mxu0 0.0
        %2124 = vmatprep.subr.mxu0 0.0
        %2125 = vmatpush1.msra.mxu0 0.0
        %2126 = vmatprep.subr.mxu0 0.0
        %2127 = vmatpush1.msra.mxu0 0.0
        %2128 = vmatprep.subr.mxu0 0.0
        %2129 = vmatpush1.msra.mxu0 0.0
        %2130 = vmatprep.subr.mxu0 0.0
        %2131 = vmatpush1.msra.mxu0 0.0
        %2132 = vmatprep.subr.mxu0 0.0
        %2133 = vmatpush1.msra.mxu0 0.0
        %2134 = vmatprep.subr.mxu0 0.0
        %2135 = vmatpush1.msra.mxu0 0.0
        %2136 = vmatprep.subr.mxu0 0.0
        %2137 = vmatpush1.msra.mxu0 0.0
        %2138 = vmatprep.subr.mxu0 0.0
        %2139 = vmatpush1.msra.mxu0 0.0
        %2140 = vmatprep.subr.mxu0 0.0
        %2141 = vmatpush1.msra.mxu0 0.0
        %2142 = vmatprep.subr.mxu0 0.0
        %2143 = vmatpush1.msra.mxu0 0.0
        %2144 = vmatprep.subr.mxu0 0.0
        %2145 = vmatpush1.msra.mxu0 0.0
        %2146 = vmatprep.subr.mxu0 0.0
        %2147 = vmatpush1.msra.mxu0 0.0
        %2148 = vmatprep.subr.mxu0 0.0
        %2149 = vmatpush1.msra.mxu0 0.0
        %2150 = vmatprep.subr.mxu0 0.0
        %2151 = vmatpush1.msra.mxu0 0.0
        %2152 = vmatprep.subr.mxu0 0.0
        %2153 = vmatpush1.msra.mxu0 0.0
        %2154 = vmatprep.subr.mxu0 0.0
        %2155 = vmatpush1.msra.mxu0 0.0
        %2156 = vmatprep.subr.mxu0 0.0
        %2157 = vmatpush1.msra.mxu0 0.0
        %2158 = vmatprep.subr.mxu0 0.0
        %2159 = vmatpush1.msra.mxu0 0.0
        %2160 = vmatprep.mubr.f32.mxu0 0.0
        %2161 = vmatmul.mubr.f32.gmra.mrb[0].mxu0 %v2091
        %v2162 = vpop.f32.mrb[0].mxu0
        %v2163 = vadd.f32 %v2088, %v2162
        %v2164 = vpop.f32.mrb[0].mxu0
        %2165 = vmatprep.mubr.f32.mxu0 0.0
        %2166 = vmatmul.mubr.f32.gmra.mrb[0].mxu0 %v2094
        %v2167 = vpop.f32.mrb[0].mxu0
        %v2168 = vadd.f32 %v2088, %v2167
        %v2169 = vpop.f32.mrb[0].mxu0
        %2170 = vdwg.mxu0
        %v2171 = vadd.f32 %v1963, %v2163
        %v2172 = vadd.f32 %v1968, %v2168
        %v2173 = vxor.u32 %v2171, 2147483648
        %v2174 = vxor.u32 %v2172, 2147483648
        %v2175 = vmul.f32 %v2173, 1.442695
        %v2176 = vpow.pop %v2175
        %v2177 = vmul.f32 %v2174, 1.442695
        %v2178 = vpow.pop %v2177
        %v2179 = vadd.f32 %v2176, 1.0
        %v2180 = vadd.f32 %v2178, 1.0
        %v2181 = vrcp.pop %v2179
        %v2182 = vmul.f32 1.0, %v2181
        %v2183 = vrcp.pop %v2180
        %v2184 = vmul.f32 1.0, %v2183
        %v2185 = vmul.f32 %v2171, %v2182
        %v2186 = vmul.f32 %v2172, %v2184
        %v2187 = vld [vmem:[%s691] sm:$0xff]
        %v2188 = vld [vmem:[%s691 + $0x8] sm:$0xff]
        %v2189 = vld [vmem:[%s19 + $0xb] sm:$0x1]
        %v2190 = vld [vmem:[%s19 + $0xc] sm:$0x1]
        %v2191 = vld [vmem:[%s19 + $0xd] sm:$0x3]
        %v2192 = vld [vmem:[%s19 + $0xf] sm:$0x1]
        %v2193 = vld [vmem:[%s15] sm:$0xff]
        %v2194 = vld [vmem:[%s15 + $0x8] sm:$0xff]
        %v2196 = vlaneseq
        %v2197 = vshrl.u32 %v2196, 7
        %v2198 = vsub.s32 0, %v2197
        %v2199 = vrot.slane %v2189, %v2198
        %v2202 = vsel %vm1344, %v2187, 0
        %v2205 = vsel %vm1344, %v2188, 0
        %2207 = vmatprep.subr.mxu0 0.0
        %2208 = vmatpush1.msra.mxu0 %v2193
        %2209 = vmatprep.subr.mxu0 0.0
        %2210 = vmatpush1.msra.mxu0 %v2194
        %2211 = vmatprep.subr.mxu0 0.0
        %2212 = vmatpush1.msra.mxu0 0.0
        %2213 = vmatprep.subr.mxu0 0.0
        %2214 = vmatpush1.msra.mxu0 0.0
        %2215 = vmatprep.subr.mxu0 0.0
        %2216 = vmatpush1.msra.mxu0 0.0
        %2217 = vmatprep.subr.mxu0 0.0
        %2218 = vmatpush1.msra.mxu0 0.0
        %2219 = vmatprep.subr.mxu0 0.0
        %2220 = vmatpush1.msra.mxu0 0.0
        %2221 = vmatprep.subr.mxu0 0.0
        %2222 = vmatpush1.msra.mxu0 0.0
        %2223 = vmatprep.subr.mxu0 0.0
        %2224 = vmatpush1.msra.mxu0 0.0
        %2225 = vmatprep.subr.mxu0 0.0
        %2226 = vmatpush1.msra.mxu0 0.0
        %2227 = vmatprep.subr.mxu0 0.0
        %2228 = vmatpush1.msra.mxu0 0.0
        %2229 = vmatprep.subr.mxu0 0.0
        %2230 = vmatpush1.msra.mxu0 0.0
        %2231 = vmatprep.subr.mxu0 0.0
        %2232 = vmatpush1.msra.mxu0 0.0
        %2233 = vmatprep.subr.mxu0 0.0
        %2234 = vmatpush1.msra.mxu0 0.0
        %2235 = vmatprep.subr.mxu0 0.0
        %2236 = vmatpush1.msra.mxu0 0.0
        %2237 = vmatprep.subr.mxu0 0.0
        %2238 = vmatpush1.msra.mxu0 0.0
        %2239 = vmatprep.subr.mxu0 0.0
        %2240 = vmatpush1.msra.mxu0 0.0
        %2241 = vmatprep.subr.mxu0 0.0
        %2242 = vmatpush1.msra.mxu0 0.0
        %2243 = vmatprep.subr.mxu0 0.0
        %2244 = vmatpush1.msra.mxu0 0.0
        %2245 = vmatprep.subr.mxu0 0.0
        %2246 = vmatpush1.msra.mxu0 0.0
        %2247 = vmatprep.subr.mxu0 0.0
        %2248 = vmatpush1.msra.mxu0 0.0
        %2249 = vmatprep.subr.mxu0 0.0
        %2250 = vmatpush1.msra.mxu0 0.0
        %2251 = vmatprep.subr.mxu0 0.0
        %2252 = vmatpush1.msra.mxu0 0.0
        %2253 = vmatprep.subr.mxu0 0.0
        %2254 = vmatpush1.msra.mxu0 0.0
        %2255 = vmatprep.subr.mxu0 0.0
        %2256 = vmatpush1.msra.mxu0 0.0
        %2257 = vmatprep.subr.mxu0 0.0
        %2258 = vmatpush1.msra.mxu0 0.0
        %2259 = vmatprep.subr.mxu0 0.0
        %2260 = vmatpush1.msra.mxu0 0.0
        %2261 = vmatprep.subr.mxu0 0.0
        %2262 = vmatpush1.msra.mxu0 0.0
        %2263 = vmatprep.subr.mxu0 0.0
        %2264 = vmatpush1.msra.mxu0 0.0
        %2265 = vmatprep.subr.mxu0 0.0
        %2266 = vmatpush1.msra.mxu0 0.0
        %2267 = vmatprep.subr.mxu0 0.0
        %2268 = vmatpush1.msra.mxu0 0.0
        %2269 = vmatprep.subr.mxu0 0.0
        %2270 = vmatpush1.msra.mxu0 0.0
        %2271 = vmatprep.mubr.f32.mxu0 0.0
        %2272 = vmatmul.mubr.f32.gmra.mrb[0].mxu0 %v2202
        %v2273 = vpop.f32.mrb[0].mxu0
        %v2274 = vadd.f32 %v2199, %v2273
        %v2275 = vpop.f32.mrb[0].mxu0
        %2276 = vmatprep.mubr.f32.mxu0 0.0
        %2277 = vmatmul.mubr.f32.gmra.mrb[0].mxu0 %v2205
        %v2278 = vpop.f32.mrb[0].mxu0
        %v2279 = vadd.f32 %v2199, %v2278
        %v2280 = vpop.f32.mrb[0].mxu0
        %2281 = vdwg.mxu0
        %v2282 = vsel %vm1426, %v2274, -inf
        %2283 = vmax.xlane.f32.xlu0 %v2282
        %v2284 = vpop.xlane.xlu0 %2283
        %v2285 = vsel %vm1426, %v2279, -inf
        %2286 = vmax.xlane.f32.xlu0 %v2285
        %v2287 = vpop.xlane.xlu0 %2286
        %v2288 = vsub.f32 %v2274, %v2284
        %v2289 = vsub.f32 %v2279, %v2287
        %v2290 = vmul.f32 %v2288, 1.442695
        %v2291 = vpow.pop %v2290
        %v2292 = vmul.f32 %v2289, 1.442695
        %v2293 = vpow.pop %v2292
        %v2294 = vsel %vm1426, %v2291, 0.0
        %2295 = vadd.xlane.f32.xlu0 %v2294
        %v2296 = vpop.xlane.xlu0 %2295
        %v2297 = vsel %vm1426, %v2293, 0.0
        %2298 = vadd.xlane.f32.xlu0 %v2297
        %v2299 = vpop.xlane.xlu0 %2298
        %v2300 = vrcp.pop %v2296
        %v2301 = vmul.f32 %v2291, %v2300
        %v2302 = vrcp.pop %v2299
        %v2303 = vmul.f32 %v2293, %v2302
        %v2304 = vld [vmem:[%s16] sm:$0xff]
        %v2305 = vld [vmem:[%s16 + $0x8] sm:$0xff]
        %v2306 = vld [vmem:[%s16 + $0x10] sm:$0xff]
        %v2307 = vld [vmem:[%s16 + $0x18] sm:$0xff]
        %v2309 = vlaneseq
        %v2310 = vshrl.u32 %v2309, 7
        %v2311 = vsub.s32 0, %v2310
        %v2312 = vrot.slane %v2190, %v2311
        %v2315 = vsel %vm1141, %v2185, 0
        %v2318 = vsel %vm1141, %v2186, 0
        %2320 = vmatprep.subr.mxu0 0.0
        %2321 = vmatpush1.msra.mxu0 %v2304
        %2322 = vmatprep.subr.mxu0 0.0
        %2323 = vmatpush1.msra.mxu0 %v2305
        %2324 = vmatprep.subr.mxu0 0.0
        %2325 = vmatpush1.msra.mxu0 %v2306
        %2326 = vmatprep.subr.mxu0 0.0
        %2327 = vmatpush1.msra.mxu0 %v2307
        %2328 = vmatprep.subr.mxu0 0.0
        %2329 = vmatpush1.msra.mxu0 0.0
        %2330 = vmatprep.subr.mxu0 0.0
        %2331 = vmatpush1.msra.mxu0 0.0
        %2332 = vmatprep.subr.mxu0 0.0
        %2333 = vmatpush1.msra.mxu0 0.0
        %2334 = vmatprep.subr.mxu0 0.0
        %2335 = vmatpush1.msra.mxu0 0.0
        %2336 = vmatprep.subr.mxu0 0.0
        %2337 = vmatpush1.msra.mxu0 0.0
        %2338 = vmatprep.subr.mxu0 0.0
        %2339 = vmatpush1.msra.mxu0 0.0
        %2340 = vmatprep.subr.mxu0 0.0
        %2341 = vmatpush1.msra.mxu0 0.0
        %2342 = vmatprep.subr.mxu0 0.0
        %2343 = vmatpush1.msra.mxu0 0.0
        %2344 = vmatprep.subr.mxu0 0.0
        %2345 = vmatpush1.msra.mxu0 0.0
        %2346 = vmatprep.subr.mxu0 0.0
        %2347 = vmatpush1.msra.mxu0 0.0
        %2348 = vmatprep.subr.mxu0 0.0
        %2349 = vmatpush1.msra.mxu0 0.0
        %2350 = vmatprep.subr.mxu0 0.0
        %2351 = vmatpush1.msra.mxu0 0.0
        %2352 = vmatprep.subr.mxu0 0.0
        %2353 = vmatpush1.msra.mxu0 0.0
        %2354 = vmatprep.subr.mxu0 0.0
        %2355 = vmatpush1.msra.mxu0 0.0
        %2356 = vmatprep.subr.mxu0 0.0
        %2357 = vmatpush1.msra.mxu0 0.0
        %2358 = vmatprep.subr.mxu0 0.0
        %2359 = vmatpush1.msra.mxu0 0.0
        %2360 = vmatprep.subr.mxu0 0.0
        %2361 = vmatpush1.msra.mxu0 0.0
        %2362 = vmatprep.subr.mxu0 0.0
        %2363 = vmatpush1.msra.mxu0 0.0
        %2364 = vmatprep.subr.mxu0 0.0
        %2365 = vmatpush1.msra.mxu0 0.0
        %2366 = vmatprep.subr.mxu0 0.0
        %2367 = vmatpush1.msra.mxu0 0.0
        %2368 = vmatprep.subr.mxu0 0.0
        %2369 = vmatpush1.msra.mxu0 0.0
        %2370 = vmatprep.subr.mxu0 0.0
        %2371 = vmatpush1.msra.mxu0 0.0
        %2372 = vmatprep.subr.mxu0 0.0
        %2373 = vmatpush1.msra.mxu0 0.0
        %2374 = vmatprep.subr.mxu0 0.0
        %2375 = vmatpush1.msra.mxu0 0.0
        %2376 = vmatprep.subr.mxu0 0.0
        %2377 = vmatpush1.msra.mxu0 0.0
        %2378 = vmatprep.subr.mxu0 0.0
        %2379 = vmatpush1.msra.mxu0 0.0
        %2380 = vmatprep.subr.mxu0 0.0
        %2381 = vmatpush1.msra.mxu0 0.0
        %2382 = vmatprep.subr.mxu0 0.0
        %2383 = vmatpush1.msra.mxu0 0.0
        %2384 = vmatprep.mubr.f32.mxu0 0.0
        %2385 = vmatmul.mubr.f32.gmra.mrb[0].mxu0 %v2315
        %v2386 = vpop.f32.mrb[0].mxu0
        %v2387 = vadd.f32 %v2312, %v2386
        %v2388 = vpop.f32.mrb[0].mxu0
        %2389 = vmatprep.mubr.f32.mxu0 0.0
        %2390 = vmatmul.mubr.f32.gmra.mrb[0].mxu0 %v2318
        %v2391 = vpop.f32.mrb[0].mxu0
        %v2392 = vadd.f32 %v2312, %v2391
        %v2393 = vpop.f32.mrb[0].mxu0
        %2394 = vdwg.mxu0
        %v2395 = vxor.u32 %v2387, 2147483648
        %v2396 = vxor.u32 %v2392, 2147483648
        %v2397 = vmul.f32 %v2395, 1.442695
        %v2398 = vpow.pop %v2397
        %v2399 = vmul.f32 %v2396, 1.442695
        %v2400 = vpow.pop %v2399
        %v2401 = vadd.f32 %v2398, 1.0
        %v2402 = vadd.f32 %v2400, 1.0
        %v2403 = vrcp.pop %v2401
        %v2404 = vmul.f32 1.0, %v2403
        %v2405 = vrcp.pop %v2402
        %v2406 = vmul.f32 1.0, %v2405
        %v2407 = vmul.f32 %v2387, %v2404
        %v2408 = vmul.f32 %v2392, %v2406
        %v2409 = vld [vmem:[%s17] sm:$0xff]
        %v2410 = vld [vmem:[%s17 + $0x8] sm:$0xff]
        %v2411 = vld [vmem:[%s17 + $0x10] sm:$0xff]
        %v2412 = vld [vmem:[%s17 + $0x18] sm:$0xff]
        %v2413 = vld [vmem:[%s17 + $0x20] sm:$0xff]
        %v2414 = vld [vmem:[%s17 + $0x28] sm:$0xff]
        %v2415 = vld [vmem:[%s17 + $0x30] sm:$0xff]
        %v2416 = vld [vmem:[%s17 + $0x38] sm:$0xff]
        %v2418 = vlaneseq
        %v2419 = vshrl.u32 %v2418, 7
        %v2420 = vsub.s32 0, %v2419
        %v2421 = vrot.slane %v2191, %v2420
        %v2422 = vlaneseq
        %v2423 = vshrl.u32 %v2422, 7
        %v2424 = vsub.s32 1, %v2423
        %v2425 = vrot.slane %v2191, %v2424
        %v2429 = vsel %vm1141, %v2407, 0
        %v2432 = vsel %vm1141, %v2408, 0
        %2434 = vmatprep.subr.mxu0 %v2410
        %2435 = vmatpush1.msra.mxu0 %v2409
        %2436 = vmatprep.subr.mxu0 %v2412
        %2437 = vmatpush1.msra.mxu0 %v2411
        %2438 = vmatprep.subr.mxu0 %v2414
        %2439 = vmatpush1.msra.mxu0 %v2413
        %2440 = vmatprep.subr.mxu0 %v2416
        %2441 = vmatpush1.msra.mxu0 %v2415
        %2442 = vmatprep.subr.mxu0 0.0
        %2443 = vmatpush1.msra.mxu0 0.0
        %2444 = vmatprep.subr.mxu0 0.0
        %2445 = vmatpush1.msra.mxu0 0.0
        %2446 = vmatprep.subr.mxu0 0.0
        %2447 = vmatpush1.msra.mxu0 0.0
        %2448 = vmatprep.subr.mxu0 0.0
        %2449 = vmatpush1.msra.mxu0 0.0
        %2450 = vmatprep.subr.mxu0 0.0
        %2451 = vmatpush1.msra.mxu0 0.0
        %2452 = vmatprep.subr.mxu0 0.0
        %2453 = vmatpush1.msra.mxu0 0.0
        %2454 = vmatprep.subr.mxu0 0.0
        %2455 = vmatpush1.msra.mxu0 0.0
        %2456 = vmatprep.subr.mxu0 0.0
        %2457 = vmatpush1.msra.mxu0 0.0
        %2458 = vmatprep.subr.mxu0 0.0
        %2459 = vmatpush1.msra.mxu0 0.0
        %2460 = vmatprep.subr.mxu0 0.0
        %2461 = vmatpush1.msra.mxu0 0.0
        %2462 = vmatprep.subr.mxu0 0.0
        %2463 = vmatpush1.msra.mxu0 0.0
        %2464 = vmatprep.subr.mxu0 0.0
        %2465 = vmatpush1.msra.mxu0 0.0
        %2466 = vmatprep.subr.mxu0 0.0
        %2467 = vmatpush1.msra.mxu0 0.0
        %2468 = vmatprep.subr.mxu0 0.0
        %2469 = vmatpush1.msra.mxu0 0.0
        %2470 = vmatprep.subr.mxu0 0.0
        %2471 = vmatpush1.msra.mxu0 0.0
        %2472 = vmatprep.subr.mxu0 0.0
        %2473 = vmatpush1.msra.mxu0 0.0
        %2474 = vmatprep.subr.mxu0 0.0
        %2475 = vmatpush1.msra.mxu0 0.0
        %2476 = vmatprep.subr.mxu0 0.0
        %2477 = vmatpush1.msra.mxu0 0.0
        %2478 = vmatprep.subr.mxu0 0.0
        %2479 = vmatpush1.msra.mxu0 0.0
        %2480 = vmatprep.subr.mxu0 0.0
        %2481 = vmatpush1.msra.mxu0 0.0
        %2482 = vmatprep.subr.mxu0 0.0
        %2483 = vmatpush1.msra.mxu0 0.0
        %2484 = vmatprep.subr.mxu0 0.0
        %2485 = vmatpush1.msra.mxu0 0.0
        %2486 = vmatprep.subr.mxu0 0.0
        %2487 = vmatpush1.msra.mxu0 0.0
        %2488 = vmatprep.subr.mxu0 0.0
        %2489 = vmatpush1.msra.mxu0 0.0
        %2490 = vmatprep.subr.mxu0 0.0
        %2491 = vmatpush1.msra.mxu0 0.0
        %2492 = vmatprep.subr.mxu0 0.0
        %2493 = vmatpush1.msra.mxu0 0.0
        %2494 = vmatprep.subr.mxu0 0.0
        %2495 = vmatpush1.msra.mxu0 0.0
        %2496 = vmatprep.subr.mxu0 0.0
        %2497 = vmatpush1.msra.mxu0 0.0
        %2498 = vmatprep.mubr.f32.mxu0 0.0
        %2499 = vmatmul.mubr.f32.gmra.mrb[0].mxu0 %v2429
        %v2500 = vpop.f32.mrb[0].mxu0
        %v2501 = vadd.f32 %v2421, %v2500
        %v2502 = vpop.f32.mrb[0].mxu0
        %v2503 = vadd.f32 %v2425, %v2502
        %2504 = vmatprep.mubr.f32.mxu0 0.0
        %2505 = vmatmul.mubr.f32.gmra.mrb[0].mxu0 %v2432
        %v2506 = vpop.f32.mrb[0].mxu0
        %v2507 = vadd.f32 %v2421, %v2506
        %v2508 = vpop.f32.mrb[0].mxu0
        %v2509 = vadd.f32 %v2425, %v2508
        %2510 = vdwg.mxu0
        %v2511 = vxor.u32 %v2501, 2147483648
        %v2512 = vxor.u32 %v2503, 2147483648
        %v2513 = vxor.u32 %v2507, 2147483648
        %v2514 = vxor.u32 %v2509, 2147483648
        %v2515 = vmul.f32 %v2511, 1.442695
        %v2516 = vpow.pop %v2515
        %v2517 = vmul.f32 %v2512, 1.442695
        %v2518 = vpow.pop %v2517
        %v2519 = vmul.f32 %v2513, 1.442695
        %v2520 = vpow.pop %v2519
        %v2521 = vmul.f32 %v2514, 1.442695
        %v2522 = vpow.pop %v2521
        %v2523 = vadd.f32 %v2516, 1.0
        %v2524 = vadd.f32 %v2518, 1.0
        %v2525 = vadd.f32 %v2520, 1.0
        %v2526 = vadd.f32 %v2522, 1.0
        %v2527 = vrcp.pop %v2523
        %v2528 = vmul.f32 1.0, %v2527
        %v2529 = vrcp.pop %v2524
        %v2530 = vmul.f32 1.0, %v2529
        %v2531 = vrcp.pop %v2525
        %v2532 = vmul.f32 1.0, %v2531
        %v2533 = vrcp.pop %v2526
        %v2534 = vmul.f32 1.0, %v2533
        %v2535 = vmul.f32 %v2501, %v2528
        %v2536 = vmul.f32 %v2503, %v2530
        %v2537 = vmul.f32 %v2507, %v2532
        %v2538 = vmul.f32 %v2509, %v2534
        %v2540 = vsel %vm1426, %v2301, 0
        %v2543 = vsel %vm1426, %v2303, 0
        %2545 = vmatprep.subr.mxu0 %v1685
        %2546 = vmatpush1.msra.mxu0 %v1684
        %2547 = vmatprep.subr.mxu0 0.0
        %2548 = vmatpush1.msra.mxu0 0.0
        %2549 = vmatprep.subr.mxu0 0.0
        %2550 = vmatpush1.msra.mxu0 0.0
        %2551 = vmatprep.subr.mxu0 0.0
        %2552 = vmatpush1.msra.mxu0 0.0
        %2553 = vmatprep.subr.mxu0 0.0
        %2554 = vmatpush1.msra.mxu0 0.0
        %2555 = vmatprep.subr.mxu0 0.0
        %2556 = vmatpush1.msra.mxu0 0.0
        %2557 = vmatprep.subr.mxu0 0.0
        %2558 = vmatpush1.msra.mxu0 0.0
        %2559 = vmatprep.subr.mxu0 0.0
        %2560 = vmatpush1.msra.mxu0 0.0
        %2561 = vmatprep.subr.mxu0 0.0
        %2562 = vmatpush1.msra.mxu0 0.0
        %2563 = vmatprep.subr.mxu0 0.0
        %2564 = vmatpush1.msra.mxu0 0.0
        %2565 = vmatprep.subr.mxu0 0.0
        %2566 = vmatpush1.msra.mxu0 0.0
        %2567 = vmatprep.subr.mxu0 0.0
        %2568 = vmatpush1.msra.mxu0 0.0
        %2569 = vmatprep.subr.mxu0 0.0
        %2570 = vmatpush1.msra.mxu0 0.0
        %2571 = vmatprep.subr.mxu0 0.0
        %2572 = vmatpush1.msra.mxu0 0.0
        %2573 = vmatprep.subr.mxu0 0.0
        %2574 = vmatpush1.msra.mxu0 0.0
        %2575 = vmatprep.subr.mxu0 0.0
        %2576 = vmatpush1.msra.mxu0 0.0
        %2577 = vmatprep.subr.mxu0 0.0
        %2578 = vmatpush1.msra.mxu0 0.0
        %2579 = vmatprep.subr.mxu0 0.0
        %2580 = vmatpush1.msra.mxu0 0.0
        %2581 = vmatprep.subr.mxu0 0.0
        %2582 = vmatpush1.msra.mxu0 0.0
        %2583 = vmatprep.subr.mxu0 0.0
        %2584 = vmatpush1.msra.mxu0 0.0
        %2585 = vmatprep.subr.mxu0 0.0
        %2586 = vmatpush1.msra.mxu0 0.0
        %2587 = vmatprep.subr.mxu0 0.0
        %2588 = vmatpush1.msra.mxu0 0.0
        %2589 = vmatprep.subr.mxu0 0.0
        %2590 = vmatpush1.msra.mxu0 0.0
        %2591 = vmatprep.subr.mxu0 0.0
        %2592 = vmatpush1.msra.mxu0 0.0
        %2593 = vmatprep.subr.mxu0 0.0
        %2594 = vmatpush1.msra.mxu0 0.0
        %2595 = vmatprep.subr.mxu0 0.0
        %2596 = vmatpush1.msra.mxu0 0.0
        %2597 = vmatprep.subr.mxu0 0.0
        %2598 = vmatpush1.msra.mxu0 0.0
        %2599 = vmatprep.subr.mxu0 0.0
        %2600 = vmatpush1.msra.mxu0 0.0
        %2601 = vmatprep.subr.mxu0 0.0
        %2602 = vmatpush1.msra.mxu0 0.0
        %2603 = vmatprep.subr.mxu0 0.0
        %2604 = vmatpush1.msra.mxu0 0.0
        %2605 = vmatprep.subr.mxu0 0.0
        %2606 = vmatpush1.msra.mxu0 0.0
        %2607 = vmatprep.subr.mxu0 0.0
        %2608 = vmatpush1.msra.mxu0 0.0
        %2609 = vmatprep.mubr.f32.mxu0 0.0
        %2610 = vmatmul.mubr.f32.gmra.mrb[0].mxu0 %v2540
        %v2611 = vpop.f32.mrb[0].mxu0
        %v2612 = vadd.f32 0.0, %v2611
        %v2613 = vpop.f32.mrb[0].mxu0
        %v2614 = vadd.f32 0.0, %v2613
        %2615 = vmatprep.mubr.f32.mxu0 0.0
        %2616 = vmatmul.mubr.f32.gmra.mrb[0].mxu0 %v2543
        %v2617 = vpop.f32.mrb[0].mxu0
        %v2618 = vadd.f32 0.0, %v2617
        %v2619 = vpop.f32.mrb[0].mxu0
        %v2620 = vadd.f32 0.0, %v2619
        %2621 = vdwg.mxu0
        %v2622 = vmul.f32 %v2535, %v2612
        %v2623 = vmul.f32 %v2536, %v2614
        %v2624 = vmul.f32 %v2537, %v2618
        %v2625 = vmul.f32 %v2538, %v2620
        %2626 = vmatprep.subr.mxu0 0.0
        %2627 = vmatpush1.msra.mxu0 %v1773
        %2628 = vmatprep.subr.mxu0 0.0
        %2629 = vmatpush1.msra.mxu0 %v1774
        %2630 = vmatprep.subr.mxu0 0.0
        %2631 = vmatpush1.msra.mxu0 %v1775
        %2632 = vmatprep.subr.mxu0 0.0
        %2633 = vmatpush1.msra.mxu0 %v1776
        %2634 = vmatprep.subr.mxu0 0.0
        %2635 = vmatpush1.msra.mxu0 %v1777
        %2636 = vmatprep.subr.mxu0 0.0
        %2637 = vmatpush1.msra.mxu0 %v1778
        %2638 = vmatprep.subr.mxu0 0.0
        %2639 = vmatpush1.msra.mxu0 %v1779
        %2640 = vmatprep.subr.mxu0 0.0
        %2641 = vmatpush1.msra.mxu0 %v1780
        %2642 = vmatprep.subr.mxu0 0.0
        %2643 = vmatpush1.msra.mxu0 %v1781
        %2644 = vmatprep.subr.mxu0 0.0
        %2645 = vmatpush1.msra.mxu0 %v1782
        %2646 = vmatprep.subr.mxu0 0.0
        %2647 = vmatpush1.msra.mxu0 %v1783
        %2648 = vmatprep.subr.mxu0 0.0
        %2649 = vmatpush1.msra.mxu0 %v1784
        %2650 = vmatprep.subr.mxu0 0.0
        %2651 = vmatpush1.msra.mxu0 %v1785
        %2652 = vmatprep.subr.mxu0 0.0
        %2653 = vmatpush1.msra.mxu0 %v1786
        %2654 = vmatprep.subr.mxu0 0.0
        %2655 = vmatpush1.msra.mxu0 %v1787
        %2656 = vmatprep.subr.mxu0 0.0
        %2657 = vmatpush1.msra.mxu0 %v1788
        %2658 = vmatprep.subr.mxu0 0.0
        %2659 = vmatpush1.msra.mxu0 %v1789
        %2660 = vmatprep.subr.mxu0 0.0
        %2661 = vmatpush1.msra.mxu0 %v1790
        %2662 = vmatprep.subr.mxu0 0.0
        %2663 = vmatpush1.msra.mxu0 %v1791
        %2664 = vmatprep.subr.mxu0 0.0
        %2665 = vmatpush1.msra.mxu0 %v1792
        %2666 = vmatprep.subr.mxu0 0.0
        %2667 = vmatpush1.msra.mxu0 %v1793
        %2668 = vmatprep.subr.mxu0 0.0
        %2669 = vmatpush1.msra.mxu0 %v1794
        %2670 = vmatprep.subr.mxu0 0.0
        %2671 = vmatpush1.msra.mxu0 %v1795
        %2672 = vmatprep.subr.mxu0 0.0
        %2673 = vmatpush1.msra.mxu0 %v1796
        %2674 = vmatprep.subr.mxu0 0.0
        %2675 = vmatpush1.msra.mxu0 %v1797
        %2676 = vmatprep.subr.mxu0 0.0
        %2677 = vmatpush1.msra.mxu0 %v1798
        %2678 = vmatprep.subr.mxu0 0.0
        %2679 = vmatpush1.msra.mxu0 %v1799
        %2680 = vmatprep.subr.mxu0 0.0
        %2681 = vmatpush1.msra.mxu0 %v1800
        %2682 = vmatprep.subr.mxu0 0.0
        %2683 = vmatpush1.msra.mxu0 %v1801
        %2684 = vmatprep.subr.mxu0 0.0
        %2685 = vmatpush1.msra.mxu0 %v1802
        %2686 = vmatprep.subr.mxu0 0.0
        %2687 = vmatpush1.msra.mxu0 %v1803
        %2688 = vmatprep.subr.mxu0 0.0
        %2689 = vmatpush1.msra.mxu0 %v1804
        %2690 = vmatprep.mubr.f32.mxu0 %v2623
        %2691 = vmatmul.mubr.f32.gmra.mrb[0].mxu0 %v2622
        %v2692 = vpop.f32.mrb[0].mxu0
        %v2693 = vadd.f32 0.0, %v2692
        %v2694 = vpop.f32.mrb[0].mxu0
        %2695 = vmatprep.mubr.f32.mxu0 %v2625
        %2696 = vmatmul.mubr.f32.gmra.mrb[0].mxu0 %v2624
        %v2697 = vpop.f32.mrb[0].mxu0
        %v2698 = vadd.f32 0.0, %v2697
        %v2699 = vpop.f32.mrb[0].mxu0
        %2700 = vdwg.mxu0
        %v2701 = vld [vmem:[%s18] sm:$0xff]
        %v2702 = vld [vmem:[%s18 + $0x8] sm:$0xff]
        %v2703 = vld [vmem:[%s18 + $0x10] sm:$0xff]
        %v2704 = vld [vmem:[%s18 + $0x18] sm:$0xff]
        %v2706 = vlaneseq
        %v2707 = vshrl.u32 %v2706, 7
        %v2708 = vsub.s32 0, %v2707
        %v2709 = vrot.slane %v2192, %v2708
        %v2712 = vsel %vm1141, %v2693, 0
        %v2715 = vsel %vm1141, %v2698, 0
        %2717 = vmatprep.subr.mxu0 0.0
        %2718 = vmatpush1.msra.mxu0 %v2701
        %2719 = vmatprep.subr.mxu0 0.0
        %2720 = vmatpush1.msra.mxu0 %v2702
        %2721 = vmatprep.subr.mxu0 0.0
        %2722 = vmatpush1.msra.mxu0 %v2703
        %2723 = vmatprep.subr.mxu0 0.0
        %2724 = vmatpush1.msra.mxu0 %v2704
        %2725 = vmatprep.subr.mxu0 0.0
        %2726 = vmatpush1.msra.mxu0 0.0
        %2727 = vmatprep.subr.mxu0 0.0
        %2728 = vmatpush1.msra.mxu0 0.0
        %2729 = vmatprep.subr.mxu0 0.0
        %2730 = vmatpush1.msra.mxu0 0.0
        %2731 = vmatprep.subr.mxu0 0.0
        %2732 = vmatpush1.msra.mxu0 0.0
        %2733 = vmatprep.subr.mxu0 0.0
        %2734 = vmatpush1.msra.mxu0 0.0
        %2735 = vmatprep.subr.mxu0 0.0
        %2736 = vmatpush1.msra.mxu0 0.0
        %2737 = vmatprep.subr.mxu0 0.0
        %2738 = vmatpush1.msra.mxu0 0.0
        %2739 = vmatprep.subr.mxu0 0.0
        %2740 = vmatpush1.msra.mxu0 0.0
        %2741 = vmatprep.subr.mxu0 0.0
        %2742 = vmatpush1.msra.mxu0 0.0
        %2743 = vmatprep.subr.mxu0 0.0
        %2744 = vmatpush1.msra.mxu0 0.0
        %2745 = vmatprep.subr.mxu0 0.0
        %2746 = vmatpush1.msra.mxu0 0.0
        %2747 = vmatprep.subr.mxu0 0.0
        %2748 = vmatpush1.msra.mxu0 0.0
        %2749 = vmatprep.subr.mxu0 0.0
        %2750 = vmatpush1.msra.mxu0 0.0
        %2751 = vmatprep.subr.mxu0 0.0
        %2752 = vmatpush1.msra.mxu0 0.0
        %2753 = vmatprep.subr.mxu0 0.0
        %2754 = vmatpush1.msra.mxu0 0.0
        %2755 = vmatprep.subr.mxu0 0.0
        %2756 = vmatpush1.msra.mxu0 0.0
        %2757 = vmatprep.subr.mxu0 0.0
        %2758 = vmatpush1.msra.mxu0 0.0
        %2759 = vmatprep.subr.mxu0 0.0
        %2760 = vmatpush1.msra.mxu0 0.0
        %2761 = vmatprep.subr.mxu0 0.0
        %2762 = vmatpush1.msra.mxu0 0.0
        %2763 = vmatprep.subr.mxu0 0.0
        %2764 = vmatpush1.msra.mxu0 0.0
        %2765 = vmatprep.subr.mxu0 0.0
        %2766 = vmatpush1.msra.mxu0 0.0
        %2767 = vmatprep.subr.mxu0 0.0
        %2768 = vmatpush1.msra.mxu0 0.0
        %2769 = vmatprep.subr.mxu0 0.0
        %2770 = vmatpush1.msra.mxu0 0.0
        %2771 = vmatprep.subr.mxu0 0.0
        %2772 = vmatpush1.msra.mxu0 0.0
        %2773 = vmatprep.subr.mxu0 0.0
        %2774 = vmatpush1.msra.mxu0 0.0
        %2775 = vmatprep.subr.mxu0 0.0
        %2776 = vmatpush1.msra.mxu0 0.0
        %2777 = vmatprep.subr.mxu0 0.0
        %2778 = vmatpush1.msra.mxu0 0.0
        %2779 = vmatprep.subr.mxu0 0.0
        %2780 = vmatpush1.msra.mxu0 0.0
        %2781 = vmatprep.mubr.f32.mxu0 0.0
        %2782 = vmatmul.mubr.f32.gmra.mrb[0].mxu0 %v2712
        %v2783 = vpop.f32.mrb[0].mxu0
        %v2784 = vadd.f32 %v2709, %v2783
        %v2785 = vpop.f32.mrb[0].mxu0
        %2786 = vmatprep.mubr.f32.mxu0 0.0
        %2787 = vmatmul.mubr.f32.gmra.mrb[0].mxu0 %v2715
        %v2788 = vpop.f32.mrb[0].mxu0
        %v2789 = vadd.f32 %v2709, %v2788
        %v2790 = vpop.f32.mrb[0].mxu0
        %2791 = vdwg.mxu0
        %2792 = vst [vmem:[%s673] sm:$0xff] %v2784
        %2793 = vst [vmem:[%s673 + $0x8] sm:$0xff] %v2789
        %s2794 = sand.u32 %s482, 1
        %s2795 = scalar_lea.sflag [#allocation3], %s2794
        %s2796 = sand.u32 %s482, 1
        %s2797 = smul.addr %s2796, 16
        %s2798 = scalar_lea.vmem [#allocation2], %s2797
        // Predicated region
        $region101: #{message_block_forward.1} parent=99 // pred_check
          %p2799 = pneg %p492
        $region102: #{message_block_forward.1} parent=99 // pred_check_branch
          %2801 = sbr.rel (%p2799) target = $region104
        $region103: #{message_block_forward.1} parent=99 // pred_region
          %s2802 = smul.u32 2, %s34
          %s2804 = ssub.s32 256, 256
          %2805 = vsyncadd %s2795, %s2804
          %s2806 = smul.addr %s2802, 128
          %s2807 = scalar_lea.hbm %s20, %s2806
          %s2808 = sshll.u32 %s2798, 4
          %s2809 = int_to_ptr.vmem [resolvable:$true] %s2808
          %2814 = dma.vmem_to_hbm [thread:$0]  %s2809, 256, %s2807, %s2795, 128, 128, 8
        $region104: #{message_block_forward.1} parent=99 // pred_fallthru
          _
      $region100: #{message_block_forward.1} parent=5 // pred_fallthru
        _
      %p2815 = scmp.le.s32.totalorder 2, %s29
      // Predicated region
      $region105: #{message_block_forward.1} parent=5 // pred_check
        %p2816 = pneg %p2815
      $region106: #{message_block_forward.1} parent=5 // pred_check_branch
        %2818 = sbr.rel (%p2816) target = $region108
      $region107: #{message_block_forward.1} parent=5 // pred_region
        %s2819 = ssub.s32 %s29, 2
        // Predicated region
        $region109: #{message_block_forward.1} parent=107 // pred_check
          %p2820 = pneg %p498
        $region110: #{message_block_forward.1} parent=107 // pred_check_branch
          %2822 = sbr.rel (%p2820) target = $region112
        $region111: #{message_block_forward.1} parent=107 // pred_region
          %s2823 = sand.u32 %s483, 1
          %s2824 = scalar_lea.sflag [#allocation3], %s2823
          %s2825 = sand.u32 %s483, 1
          %s2826 = smul.addr %s2825, 16
          %s2827 = scalar_lea.vmem [#allocation2], %s2826
          %2828 = dma.done %s2824, 256
        $region112: #{message_block_forward.1} parent=107 // pred_fallthru
          _
      $region108: #{message_block_forward.1} parent=5 // pred_fallthru
        _
    $region6: #{message_block_forward.1} parent=1 // loop_footer
      %s33 = sadd.s32 1, %s29
    $region7: #{message_block_forward.1} parent=1 // loop_footer_branch
      %28 = sbr.rel target = $region3
    $region8: #{message_block_forward.1} parent=1 // loop_exit
      _
    %2829 = vsyncpa [#allocation3], 1
    %s2830 = scalar_lea.sflag [#allocation3], 1
    %2831 = vsyncpa %s2830, 1

</llo_original>
